<compile_context>
chip_gen: v7x
topology: tpu7x:2x2x1
jax: 0.10.0
libtpu: 0.0.40
codegen_flags: <defaults>
</compile_context>

<pallas_src>
import functools

import jax
import jax.numpy as jnp
from jax.experimental import pallas as pl
from jax.experimental.pallas import tpu as pltpu


# -----------------------------------------------------------------------------
# Fused kernel: stem conv+BN+ReLU, maxpool, 3 residual blocks, avgpool+linear.
# One grid step == one batch element; everything stays in VMEM.
# -----------------------------------------------------------------------------
def _freqnet_kernel(pe_ref, po_ref, pe2_ref,                               # stem im2col patches
                    w0_ref, s0_ref, b0_ref,                                # stem conv + BN(eval)
                    w11_ref, s11_ref, b11_ref, w21_ref, s21_ref, b21_ref,  # block 1 (64 -> 64)
                    w12_ref, s12_ref, b12_ref, w22_ref, s22_ref, b22_ref,  # block 2 (64 -> 128)
                    w13_ref, s13_ref, b13_ref, w23_ref, s23_ref, b23_ref,  # block 3 (128 -> 256)
                    wl_ref,                                                # head linear (Npad, 256)
                    o_ref,                                                 # (1, Npad, 1) logits
                    skip_ref):                                             # (256, L) f32 scratch
    f32 = jnp.float32
    bf16 = jnp.bfloat16
    L = pe_ref.shape[2]

    # Hoisted boundary masks (lane 0 / lane L-1), broadcast over channels.
    lane = jax.lax.broadcasted_iota(jnp.int32, (1, L), 1)
    mask_l = (lane > 0).astype(f32)       # zero the position that wrapped from the right
    mask_r = (lane < L - 1).astype(f32)   # zero the position that wrapped from the left

    def bn_relu(y, s_ref, b_ref):
        return jnp.maximum(s_ref[...] * y + b_ref[...], 0.0)

    # ---- stem: Conv1d(1, 64, 5, stride=3) + BN + ReLU ------------------------
    # ye[:, j] = y[:, 2j], yo[:, j] = y[:, 2j+1], ye2[:, j] = y[:, 2j+2]
    w0 = w0_ref[...]
    ye = bn_relu(jnp.dot(w0, pe_ref[0], preferred_element_type=f32), s0_ref, b0_ref)
    yo = bn_relu(jnp.dot(w0, po_ref[0], preferred_element_type=f32), s0_ref, b0_ref)
    ye2 = bn_relu(jnp.dot(w0, pe2_ref[0], preferred_element_type=f32), s0_ref, b0_ref)

    # ---- MaxPool1d(kernel=5, stride=2, padding=1) -----------------------------
    # pooled[:, j] = max(y[2j-1], y[2j], y[2j+1], y[2j+2], y[2j+3]); out-of-range
    # taps masked with 0 (safe: everything is post-ReLU >= 0).
    yo_l = pltpu.roll(yo, shift=1, axis=1) * mask_l        # y[:, 2j-1]
    yo_r = pltpu.roll(yo, shift=L - 1, axis=1) * mask_r    # y[:, 2j+3]
    h = jnp.maximum(jnp.maximum(ye, ye2),
                    jnp.maximum(yo, jnp.maximum(yo_l, yo_r)))              # (64, L)

    # ---- Conv1d(k=3, s=1, p=1, bias=False) as ONE MXU matmul ------------------
    def conv3(x, w_ref):
        x_l = pltpu.roll(x, shift=1, axis=1) * mask_l      # x[:, l-1]
        x_r = pltpu.roll(x, shift=L - 1, axis=1) * mask_r  # x[:, l+1]
        x3 = jnp.concatenate([x_l, x, x_r], axis=0).astype(bf16)           # (3*Cin, L)
        return jnp.dot(w_ref[...], x3, preferred_element_type=f32)         # (Cout, L)

    # ---- residual block: conv->(drop=id)->BN->ReLU->conv->BN->(+skip)->ReLU ---
    def res_block(x, w1_ref, s1_ref, b1_ref, w2_ref, s2_ref, b2_ref):
        cin, cout = x.shape[0], w1_ref.shape[0]
        t = bn_relu(conv3(x, w1_ref), s1_ref, b1_ref)
        t = s2_ref[...] * conv3(t, w2_ref) + b2_ref[...]
        if cin == cout:                                    # identity skip
            return jnp.maximum(t + x, 0.0)
        # zero-padded channel skip == aligned slice-add in VMEM scratch (no concat)
        pad = (cout - cin) // 2                            # 32 or 64: sublane aligned
        skip_ref[0:cout, :] = t
        skip_ref[pad:pad + cin, :] = skip_ref[pad:pad + cin, :] + x
        return jnp.maximum(skip_ref[0:cout, :], 0.0)

    h = res_block(h, w11_ref, s11_ref, b11_ref, w21_ref, s21_ref, b21_ref)  # 64  -> 64
    h = res_block(h, w12_ref, s12_ref, b12_ref, w22_ref, s22_ref, b22_ref)  # 64  -> 128
    h = res_block(h, w13_ref, s13_ref, b13_ref, w23_ref, s23_ref, b23_ref)  # 128 -> 256

    # ---- AdaptiveAvgPool1d(1) + Linear(256, N, bias=False) --------------------
    g = jnp.dot(wl_ref[...], h.astype(bf16), preferred_element_type=f32)    # (Npad, L)
    o_ref[0] = jnp.mean(g, axis=-1, keepdims=True)                          # (Npad, 1)


# -----------------------------------------------------------------------------
# Parameters: deterministic synthetic init + one-time (hoisted) packing.
# -----------------------------------------------------------------------------
def make_params(key, n_classes):
    keys = iter(jax.random.split(key, 64))

    def conv_w(cout, cin, k):
        fan = cin * k
        return jax.random.normal(next(keys), (cout, cin, k), jnp.float32) / jnp.sqrt(
            jnp.float32(fan))

    def bn(c):
        gamma = 0.5 + jax.random.uniform(next(keys), (c,), jnp.float32)
        beta = 0.1 * jax.random.normal(next(keys), (c,), jnp.float32)
        mean = 0.1 * jax.random.normal(next(keys), (c,), jnp.float32)
        var = 0.5 + jax.random.uniform(next(keys), (c,), jnp.float32)
        return gamma, beta, mean, var

    p = {}
    p["w_stem"] = conv_w(64, 1, 5)
    p["b_stem"] = 0.1 * jax.random.normal(next(keys), (64,), jnp.float32)
    p["bn_stem"] = bn(64)
    p["w1_1"] = conv_w(64, 64, 3);    p["bn1_1"] = bn(64)
    p["w2_1"] = conv_w(64, 64, 3);    p["bn2_1"] = bn(64)
    p["w1_2"] = conv_w(128, 64, 3);   p["bn1_2"] = bn(128)
    p["w2_2"] = conv_w(128, 128, 3);  p["bn2_2"] = bn(128)
    p["w1_3"] = conv_w(256, 128, 3);  p["bn1_3"] = bn(256)
    p["w2_3"] = conv_w(256, 256, 3);  p["bn2_3"] = bn(256)
    p["w_lin"] = 0.05 * jax.random.normal(next(keys), (n_classes, 256), jnp.float32)
    # NOTE: conv3_2 / conv3_3 exist in FreqNet.__init__ but are never used in forward().
    return p


def _bn_fold(gamma, beta, mean, var, eps=1e-5):
    scale = gamma * jax.lax.rsqrt(var + eps)
    shift = beta - mean * scale
    return scale, shift


def prepare_params(params, n_classes):
    """One-time prep (hoisted out of forward): fold BN, pack conv taps, cast bf16."""
    def pack3(w):                                  # (Cout, Cin, 3) -> (Cout, 3*Cin) bf16
        cout, cin, _ = w.shape
        return jnp.transpose(w, (0, 2, 1)).reshape(cout, 3 * cin).astype(jnp.bfloat16)

    def col(v):
        return v[:, None].astype(jnp.float32)

    s0, h0 = _bn_fold(*params["bn_stem"])
    prep = {
        "w0": jnp.pad(params["w_stem"].reshape(64, 5), ((0, 0), (0, 3))).astype(jnp.bfloat16),
        "s0": col(s0),
        "b0": col(s0 * params["b_stem"] + h0),     # conv bias folded into BN shift
    }
    for i in (1, 2, 3):
        s1, b1 = _bn_fold(*params[f"bn1_{i}"])
        s2, b2 = _bn_fold(*params[f"bn2_{i}"])
        prep[f"w1_{i}"] = pack3(params[f"w1_{i}"])
        prep[f"s1_{i}"], prep[f"b1_{i}"] = col(s1), col(b1)
        prep[f"w2_{i}"] = pack3(params[f"w2_{i}"])
        prep[f"s2_{i}"], prep[f"b2_{i}"] = col(s2), col(b2)
    npad = -(-n_classes // 8) * 8                  # pad class dim to a sublane multiple
    prep["wl"] = jnp.pad(params["w_lin"],
                         ((0, npad - n_classes), (0, 0))).astype(jnp.bfloat16)
    return prep


# -----------------------------------------------------------------------------
# Forward pass: small im2col glue (3 tiny patch tensors) + one fused pallas_call.
# -----------------------------------------------------------------------------
def freqnet_forward(x, prep, n_classes):
    B, _, L = x.shape
    L1 = (L - 5) // 3 + 1            # Conv1d(1,64,5,stride=3) output length
    L2 = (L1 + 2 - 5) // 2 + 1       # MaxPool1d(5, stride=2, padding=1) output length
    assert L1 == 2 * L2 + 1, "fused kernel assumes stem_len == 2*pool_len + 1"

    sig = x[:, 0, :]

    def patches(off):                # columns of x feeding stem output position (off/3 + 2j)
        taps = [sig[:, off + k::6][:, :L2] for k in range(5)]
        p = jnp.stack(taps, axis=1)                                       # (B, 5, L2)
        return jnp.pad(p, ((0, 0), (0, 3), (0, 0))).astype(jnp.bfloat16)  # K 5 -> 8

    pe, po, pe2 = patches(0), patches(3), patches(6)   # y[2j], y[2j+1], y[2j+2]

    npad = prep["wl"].shape[0]

    def wspec(arr):                  # grid-invariant weight block (whole array)
        n = arr.ndim
        return pl.BlockSpec(arr.shape, lambda b, n=n: (0,) * n)

    args = [pe, po, pe2, prep["w0"], prep["s0"], prep["b0"]]
    for i in (1, 2, 3):
        args += [prep[f"w1_{i}"], prep[f"s1_{i}"], prep[f"b1_{i}"],
                 prep[f"w2_{i}"], prep[f"s2_{i}"], prep[f"b2_{i}"]]
    args.append(prep["wl"])

    patch_spec = pl.BlockSpec((1, 8, L2), lambda b: (b, 0, 0))
    in_specs = [patch_spec, patch_spec, patch_spec] + [wspec(a) for a in args[3:]]

    out = pl.pallas_call(
        _freqnet_kernel,
        out_shape=jax.ShapeDtypeStruct((B, npad, 1), jnp.float32),
        grid=(B,),
        in_specs=in_specs,
        out_specs=pl.BlockSpec((1, npad, 1), lambda b: (b, 0, 0)),
        scratch_shapes=[pltpu.VMEM((256, L2), jnp.float32)],
        compiler_params=pltpu.CompilerParams(dimension_semantics=("parallel",)),
    )(*args)
    return out[:, :n_classes, 0]


if __name__ == "__main__":
    N_CLASSES = 16
    B, L = 2, 773                 # -> stem length 257, pooled length 128 (lane aligned)
    key = jax.random.PRNGKey(0)
    pkey, xkey = jax.random.split(key)
    params = make_params(pkey, N_CLASSES)
    prep = prepare_params(params, N_CLASSES)
    x = jax.random.normal(xkey, (B, 1, L), jnp.float32)

    fwd = jax.jit(functools.partial(freqnet_forward, n_classes=N_CLASSES))
    out = jax.block_until_ready(fwd(x, prep))
    assert out.shape == (B, N_CLASSES), out.shape
    assert bool(jnp.all(jnp.isfinite(out)))
    print("KERNEL_OK")
</pallas_src>

<mosaic_0001>
module attributes {stable_mosaic.version = 11 : i64} {
  func.func @_freqnet_kernel(%arg0: i32, %arg1: memref<1x8x128xbf16, #tpu.memory_space<vmem>>, %arg2: memref<1x8x128xbf16, #tpu.memory_space<vmem>>, %arg3: memref<1x8x128xbf16, #tpu.memory_space<vmem>>, %arg4: memref<64x8xbf16, #tpu.memory_space<vmem>>, %arg5: memref<64x1xf32, #tpu.memory_space<vmem>>, %arg6: memref<64x1xf32, #tpu.memory_space<vmem>>, %arg7: memref<64x192xbf16, #tpu.memory_space<vmem>>, %arg8: memref<64x1xf32, #tpu.memory_space<vmem>>, %arg9: memref<64x1xf32, #tpu.memory_space<vmem>>, %arg10: memref<64x192xbf16, #tpu.memory_space<vmem>>, %arg11: memref<64x1xf32, #tpu.memory_space<vmem>>, %arg12: memref<64x1xf32, #tpu.memory_space<vmem>>, %arg13: memref<128x192xbf16, #tpu.memory_space<vmem>>, %arg14: memref<128x1xf32, #tpu.memory_space<vmem>>, %arg15: memref<128x1xf32, #tpu.memory_space<vmem>>, %arg16: memref<128x384xbf16, #tpu.memory_space<vmem>>, %arg17: memref<128x1xf32, #tpu.memory_space<vmem>>, %arg18: memref<128x1xf32, #tpu.memory_space<vmem>>, %arg19: memref<256x384xbf16, #tpu.memory_space<vmem>>, %arg20: memref<256x1xf32, #tpu.memory_space<vmem>>, %arg21: memref<256x1xf32, #tpu.memory_space<vmem>>, %arg22: memref<256x768xbf16, #tpu.memory_space<vmem>>, %arg23: memref<256x1xf32, #tpu.memory_space<vmem>>, %arg24: memref<256x1xf32, #tpu.memory_space<vmem>>, %arg25: memref<16x256xbf16, #tpu.memory_space<vmem>>, %arg26: memref<1x16x1xf32, #tpu.memory_space<vmem>>, %arg27: memref<256x128xf32, #tpu.memory_space<vmem>>) attributes {dimension_semantics = [#tpu.dimension_semantics<parallel>], iteration_bounds = array<i64: 2>, scalar_prefetch = 0 : i64, scratch_operands = 1 : i64, tpu.core_type = #tpu.core_type<tc>, window_params = [{transform_indices = @transform_0, window_bounds = array<i64: 1, 8, 128>}, {transform_indices = @transform_1, window_bounds = array<i64: 1, 8, 128>}, {transform_indices = @transform_2, window_bounds = array<i64: 1, 8, 128>}, {pipeline_mode = #tpu.pipeline_mode<synchronous>, transform_indices = @transform_3, window_bounds = array<i64: 64, 8>}, {pipeline_mode = #tpu.pipeline_mode<synchronous>, transform_indices = @transform_4, window_bounds = array<i64: 64, 1>}, {pipeline_mode = #tpu.pipeline_mode<synchronous>, transform_indices = @transform_5, window_bounds = array<i64: 64, 1>}, {pipeline_mode = #tpu.pipeline_mode<synchronous>, transform_indices = @transform_6, window_bounds = array<i64: 64, 192>}, {pipeline_mode = #tpu.pipeline_mode<synchronous>, transform_indices = @transform_7, window_bounds = array<i64: 64, 1>}, {pipeline_mode = #tpu.pipeline_mode<synchronous>, transform_indices = @transform_8, window_bounds = array<i64: 64, 1>}, {pipeline_mode = #tpu.pipeline_mode<synchronous>, transform_indices = @transform_9, window_bounds = array<i64: 64, 192>}, {pipeline_mode = #tpu.pipeline_mode<synchronous>, transform_indices = @transform_10, window_bounds = array<i64: 64, 1>}, {pipeline_mode = #tpu.pipeline_mode<synchronous>, transform_indices = @transform_11, window_bounds = array<i64: 64, 1>}, {pipeline_mode = #tpu.pipeline_mode<synchronous>, transform_indices = @transform_12, window_bounds = array<i64: 128, 192>}, {pipeline_mode = #tpu.pipeline_mode<synchronous>, transform_indices = @transform_13, window_bounds = array<i64: 128, 1>}, {pipeline_mode = #tpu.pipeline_mode<synchronous>, transform_indices = @transform_14, window_bounds = array<i64: 128, 1>}, {pipeline_mode = #tpu.pipeline_mode<synchronous>, transform_indices = @transform_15, window_bounds = array<i64: 128, 384>}, {pipeline_mode = #tpu.pipeline_mode<synchronous>, transform_indices = @transform_16, window_bounds = array<i64: 128, 1>}, {pipeline_mode = #tpu.pipeline_mode<synchronous>, transform_indices = @transform_17, window_bounds = array<i64: 128, 1>}, {pipeline_mode = #tpu.pipeline_mode<synchronous>, transform_indices = @transform_18, window_bounds = array<i64: 256, 384>}, {pipeline_mode = #tpu.pipeline_mode<synchronous>, transform_indices = @transform_19, window_bounds = array<i64: 256, 1>}, {pipeline_mode = #tpu.pipeline_mode<synchronous>, transform_indices = @transform_20, window_bounds = array<i64: 256, 1>}, {pipeline_mode = #tpu.pipeline_mode<synchronous>, transform_indices = @transform_21, window_bounds = array<i64: 256, 768>}, {pipeline_mode = #tpu.pipeline_mode<synchronous>, transform_indices = @transform_22, window_bounds = array<i64: 256, 1>}, {pipeline_mode = #tpu.pipeline_mode<synchronous>, transform_indices = @transform_23, window_bounds = array<i64: 256, 1>}, {pipeline_mode = #tpu.pipeline_mode<synchronous>, transform_indices = @transform_24, window_bounds = array<i64: 16, 256>}, {transform_indices = @transform_25, window_bounds = array<i64: 1, 16, 1>}]} {
    %0 = tpu.iota {dimensions = array<i32: 1>} : vector<1x128xi32>
    %c0_i32 = arith.constant 0 : i32
    %1 = vector.broadcast %c0_i32 : i32 to vector<1x128xi32>
    %2 = arith.cmpi sgt, %0, %1 : vector<1x128xi32>
    %3 = arith.extui %2 : vector<1x128xi1> to vector<1x128xi32>
    %4 = arith.sitofp %3 : vector<1x128xi32> to vector<1x128xf32>
    %c127_i32 = arith.constant 127 : i32
    %5 = vector.broadcast %c127_i32 : i32 to vector<1x128xi32>
    %6 = arith.cmpi slt, %0, %5 : vector<1x128xi32>
    %7 = arith.extui %6 : vector<1x128xi1> to vector<1x128xi32>
    %8 = arith.sitofp %7 : vector<1x128xi32> to vector<1x128xf32>
    %c0 = arith.constant 0 : index
    %c0_0 = arith.constant 0 : index
    %9 = vector.load %arg4[%c0, %c0_0] : memref<64x8xbf16, #tpu.memory_space<vmem>>, vector<64x8xbf16>
    %c0_1 = arith.constant 0 : index
    %c0_2 = arith.constant 0 : index
    %c0_3 = arith.constant 0 : index
    %10 = vector.load %arg1[%c0_1, %c0_2, %c0_3] : memref<1x8x128xbf16, #tpu.memory_space<vmem>>, vector<1x8x128xbf16>
    %11 = vector.shape_cast %10 : vector<1x8x128xbf16> to vector<8x128xbf16>
    %cst = arith.constant dense<0.000000e+00> : vector<64x128xf32>
    %12 = tpu.matmul %9, %11, %cst {dimension_numbers = #tpu.dot_dimension_numbers<[1], [0], [0], [1], [0, 0, 1, 1], [], []>} : vector<64x8xbf16>, vector<8x128xbf16>, vector<64x128xf32> -> vector<64x128xf32>
    %c0_4 = arith.constant 0 : index
    %c0_5 = arith.constant 0 : index
    %13 = vector.load %arg5[%c0_4, %c0_5] : memref<64x1xf32, #tpu.memory_space<vmem>>, vector<64x1xf32>
    %14 = vector.broadcast %13 : vector<64x1xf32> to vector<64x128xf32>
    %15 = arith.mulf %14, %12 : vector<64x128xf32>
    %c0_6 = arith.constant 0 : index
    %c0_7 = arith.constant 0 : index
    %16 = vector.load %arg6[%c0_6, %c0_7] : memref<64x1xf32, #tpu.memory_space<vmem>>, vector<64x1xf32>
    %17 = vector.broadcast %16 : vector<64x1xf32> to vector<64x128xf32>
    %18 = arith.addf %15, %17 : vector<64x128xf32>
    %cst_8 = arith.constant 0.000000e+00 : f32
    %19 = vector.broadcast %cst_8 : f32 to vector<64x128xf32>
    %20 = arith.maximumf %18, %19 : vector<64x128xf32>
    %c0_9 = arith.constant 0 : index
    %c0_10 = arith.constant 0 : index
    %c0_11 = arith.constant 0 : index
    %21 = vector.load %arg2[%c0_9, %c0_10, %c0_11] : memref<1x8x128xbf16, #tpu.memory_space<vmem>>, vector<1x8x128xbf16>
    %22 = vector.shape_cast %21 : vector<1x8x128xbf16> to vector<8x128xbf16>
    %cst_12 = arith.constant dense<0.000000e+00> : vector<64x128xf32>
    %23 = tpu.matmul %9, %22, %cst_12 {dimension_numbers = #tpu.dot_dimension_numbers<[1], [0], [0], [1], [0, 0, 1, 1], [], []>} : vector<64x8xbf16>, vector<8x128xbf16>, vector<64x128xf32> -> vector<64x128xf32>
    %c0_13 = arith.constant 0 : index
    %c0_14 = arith.constant 0 : index
    %24 = vector.load %arg5[%c0_13, %c0_14] : memref<64x1xf32, #tpu.memory_space<vmem>>, vector<64x1xf32>
    %25 = vector.broadcast %24 : vector<64x1xf32> to vector<64x128xf32>
    %26 = arith.mulf %25, %23 : vector<64x128xf32>
    %c0_15 = arith.constant 0 : index
    %c0_16 = arith.constant 0 : index
    %27 = vector.load %arg6[%c0_15, %c0_16] : memref<64x1xf32, #tpu.memory_space<vmem>>, vector<64x1xf32>
    %28 = vector.broadcast %27 : vector<64x1xf32> to vector<64x128xf32>
    %29 = arith.addf %26, %28 : vector<64x128xf32>
    %cst_17 = arith.constant 0.000000e+00 : f32
    %30 = vector.broadcast %cst_17 : f32 to vector<64x128xf32>
    %31 = arith.maximumf %29, %30 : vector<64x128xf32>
    %c0_18 = arith.constant 0 : index
    %c0_19 = arith.constant 0 : index
    %c0_20 = arith.constant 0 : index
    %32 = vector.load %arg3[%c0_18, %c0_19, %c0_20] : memref<1x8x128xbf16, #tpu.memory_space<vmem>>, vector<1x8x128xbf16>
    %33 = vector.shape_cast %32 : vector<1x8x128xbf16> to vector<8x128xbf16>
    %cst_21 = arith.constant dense<0.000000e+00> : vector<64x128xf32>
    %34 = tpu.matmul %9, %33, %cst_21 {dimension_numbers = #tpu.dot_dimension_numbers<[1], [0], [0], [1], [0, 0, 1, 1], [], []>} : vector<64x8xbf16>, vector<8x128xbf16>, vector<64x128xf32> -> vector<64x128xf32>
    %c0_22 = arith.constant 0 : index
    %c0_23 = arith.constant 0 : index
    %35 = vector.load %arg5[%c0_22, %c0_23] : memref<64x1xf32, #tpu.memory_space<vmem>>, vector<64x1xf32>
    %36 = vector.broadcast %35 : vector<64x1xf32> to vector<64x128xf32>
    %37 = arith.mulf %36, %34 : vector<64x128xf32>
    %c0_24 = arith.constant 0 : index
    %c0_25 = arith.constant 0 : index
    %38 = vector.load %arg6[%c0_24, %c0_25] : memref<64x1xf32, #tpu.memory_space<vmem>>, vector<64x1xf32>
    %39 = vector.broadcast %38 : vector<64x1xf32> to vector<64x128xf32>
    %40 = arith.addf %37, %39 : vector<64x128xf32>
    %cst_26 = arith.constant 0.000000e+00 : f32
    %41 = vector.broadcast %cst_26 : f32 to vector<64x128xf32>
    %42 = arith.maximumf %40, %41 : vector<64x128xf32>
    %c1_i32 = arith.constant 1 : i32
    %43 = tpu.dynamic_rotate %31 by %c1_i32 dim 1 : vector<64x128xf32>, i32 -> vector<64x128xf32>
    %44 = vector.broadcast %4 : vector<1x128xf32> to vector<64x128xf32>
    %45 = arith.mulf %43, %44 : vector<64x128xf32>
    %c127_i32_27 = arith.constant 127 : i32
    %46 = tpu.dynamic_rotate %31 by %c127_i32_27 dim 1 : vector<64x128xf32>, i32 -> vector<64x128xf32>
    %47 = vector.broadcast %8 : vector<1x128xf32> to vector<64x128xf32>
    %48 = arith.mulf %46, %47 : vector<64x128xf32>
    %49 = arith.maximumf %20, %42 : vector<64x128xf32>
    %50 = arith.maximumf %45, %48 : vector<64x128xf32>
    %51 = arith.maximumf %31, %50 : vector<64x128xf32>
    %52 = arith.maximumf %49, %51 : vector<64x128xf32>
    %c1_i32_28 = arith.constant 1 : i32
    %53 = tpu.dynamic_rotate %52 by %c1_i32_28 dim 1 : vector<64x128xf32>, i32 -> vector<64x128xf32>
    %54 = vector.broadcast %4 : vector<1x128xf32> to vector<64x128xf32>
    %55 = arith.mulf %53, %54 : vector<64x128xf32>
    %c127_i32_29 = arith.constant 127 : i32
    %56 = tpu.dynamic_rotate %52 by %c127_i32_29 dim 1 : vector<64x128xf32>, i32 -> vector<64x128xf32>
    %57 = vector.broadcast %8 : vector<1x128xf32> to vector<64x128xf32>
    %58 = arith.mulf %56, %57 : vector<64x128xf32>
    %59 = tpu.concatenate %55, %52, %58 in 0 : vector<64x128xf32>, vector<64x128xf32>, vector<64x128xf32> -> vector<192x128xf32>
    %60 = arith.truncf %59 : vector<192x128xf32> to vector<192x128xbf16>
    %c0_30 = arith.constant 0 : index
    %c0_31 = arith.constant 0 : index
    %61 = vector.load %arg7[%c0_30, %c0_31] : memref<64x192xbf16, #tpu.memory_space<vmem>>, vector<64x192xbf16>
    %cst_32 = arith.constant dense<0.000000e+00> : vector<64x128xf32>
    %62 = tpu.matmul %61, %60, %cst_32 {dimension_numbers = #tpu.dot_dimension_numbers<[1], [0], [0], [1], [0, 0, 1, 1], [], []>} : vector<64x192xbf16>, vector<192x128xbf16>, vector<64x128xf32> -> vector<64x128xf32>
    %c0_33 = arith.constant 0 : index
    %c0_34 = arith.constant 0 : index
    %63 = vector.load %arg8[%c0_33, %c0_34] : memref<64x1xf32, #tpu.memory_space<vmem>>, vector<64x1xf32>
    %64 = vector.broadcast %63 : vector<64x1xf32> to vector<64x128xf32>
    %65 = arith.mulf %64, %62 : vector<64x128xf32>
    %c0_35 = arith.constant 0 : index
    %c0_36 = arith.constant 0 : index
    %66 = vector.load %arg9[%c0_35, %c0_36] : memref<64x1xf32, #tpu.memory_space<vmem>>, vector<64x1xf32>
    %67 = vector.broadcast %66 : vector<64x1xf32> to vector<64x128xf32>
    %68 = arith.addf %65, %67 : vector<64x128xf32>
    %cst_37 = arith.constant 0.000000e+00 : f32
    %69 = vector.broadcast %cst_37 : f32 to vector<64x128xf32>
    %70 = arith.maximumf %68, %69 : vector<64x128xf32>
    %c0_38 = arith.constant 0 : index
    %c0_39 = arith.constant 0 : index
    %71 = vector.load %arg11[%c0_38, %c0_39] : memref<64x1xf32, #tpu.memory_space<vmem>>, vector<64x1xf32>
    %c1_i32_40 = arith.constant 1 : i32
    %72 = tpu.dynamic_rotate %70 by %c1_i32_40 dim 1 : vector<64x128xf32>, i32 -> vector<64x128xf32>
    %73 = vector.broadcast %4 : vector<1x128xf32> to vector<64x128xf32>
    %74 = arith.mulf %72, %73 : vector<64x128xf32>
    %c127_i32_41 = arith.constant 127 : i32
    %75 = tpu.dynamic_rotate %70 by %c127_i32_41 dim 1 : vector<64x128xf32>, i32 -> vector<64x128xf32>
    %76 = vector.broadcast %8 : vector<1x128xf32> to vector<64x128xf32>
    %77 = arith.mulf %75, %76 : vector<64x128xf32>
    %78 = tpu.concatenate %74, %70, %77 in 0 : vector<64x128xf32>, vector<64x128xf32>, vector<64x128xf32> -> vector<192x128xf32>
    %79 = arith.truncf %78 : vector<192x128xf32> to vector<192x128xbf16>
    %c0_42 = arith.constant 0 : index
    %c0_43 = arith.constant 0 : index
    %80 = vector.load %arg10[%c0_42, %c0_43] : memref<64x192xbf16, #tpu.memory_space<vmem>>, vector<64x192xbf16>
    %cst_44 = arith.constant dense<0.000000e+00> : vector<64x128xf32>
    %81 = tpu.matmul %80, %79, %cst_44 {dimension_numbers = #tpu.dot_dimension_numbers<[1], [0], [0], [1], [0, 0, 1, 1], [], []>} : vector<64x192xbf16>, vector<192x128xbf16>, vector<64x128xf32> -> vector<64x128xf32>
    %82 = vector.broadcast %71 : vector<64x1xf32> to vector<64x128xf32>
    %83 = arith.mulf %82, %81 : vector<64x128xf32>
    %c0_45 = arith.constant 0 : index
    %c0_46 = arith.constant 0 : index
    %84 = vector.load %arg12[%c0_45, %c0_46] : memref<64x1xf32, #tpu.memory_space<vmem>>, vector<64x1xf32>
    %85 = vector.broadcast %84 : vector<64x1xf32> to vector<64x128xf32>
    %86 = arith.addf %83, %85 : vector<64x128xf32>
    %87 = arith.addf %86, %52 : vector<64x128xf32>
    %cst_47 = arith.constant 0.000000e+00 : f32
    %88 = vector.broadcast %cst_47 : f32 to vector<64x128xf32>
    %89 = arith.maximumf %87, %88 : vector<64x128xf32>
    %c1_i32_48 = arith.constant 1 : i32
    %90 = tpu.dynamic_rotate %89 by %c1_i32_48 dim 1 : vector<64x128xf32>, i32 -> vector<64x128xf32>
    %91 = vector.broadcast %4 : vector<1x128xf32> to vector<64x128xf32>
    %92 = arith.mulf %90, %91 : vector<64x128xf32>
    %c127_i32_49 = arith.constant 127 : i32
    %93 = tpu.dynamic_rotate %89 by %c127_i32_49 dim 1 : vector<64x128xf32>, i32 -> vector<64x128xf32>
    %94 = vector.broadcast %8 : vector<1x128xf32> to vector<64x128xf32>
    %95 = arith.mulf %93, %94 : vector<64x128xf32>
    %96 = tpu.concatenate %92, %89, %95 in 0 : vector<64x128xf32>, vector<64x128xf32>, vector<64x128xf32> -> vector<192x128xf32>
    %97 = arith.truncf %96 : vector<192x128xf32> to vector<192x128xbf16>
    %c0_50 = arith.constant 0 : index
    %c0_51 = arith.constant 0 : index
    %98 = vector.load %arg13[%c0_50, %c0_51] : memref<128x192xbf16, #tpu.memory_space<vmem>>, vector<128x192xbf16>
    %cst_52 = arith.constant dense<0.000000e+00> : vector<128x128xf32>
    %99 = tpu.matmul %98, %97, %cst_52 {dimension_numbers = #tpu.dot_dimension_numbers<[1], [0], [0], [1], [0, 0, 1, 1], [], []>} : vector<128x192xbf16>, vector<192x128xbf16>, vector<128x128xf32> -> vector<128x128xf32>
    %c0_53 = arith.constant 0 : index
    %c0_54 = arith.constant 0 : index
    %100 = vector.load %arg14[%c0_53, %c0_54] : memref<128x1xf32, #tpu.memory_space<vmem>>, vector<128x1xf32>
    %101 = vector.broadcast %100 : vector<128x1xf32> to vector<128x128xf32>
    %102 = arith.mulf %101, %99 : vector<128x128xf32>
    %c0_55 = arith.constant 0 : index
    %c0_56 = arith.constant 0 : index
    %103 = vector.load %arg15[%c0_55, %c0_56] : memref<128x1xf32, #tpu.memory_space<vmem>>, vector<128x1xf32>
    %104 = vector.broadcast %103 : vector<128x1xf32> to vector<128x128xf32>
    %105 = arith.addf %102, %104 : vector<128x128xf32>
    %cst_57 = arith.constant 0.000000e+00 : f32
    %106 = vector.broadcast %cst_57 : f32 to vector<128x128xf32>
    %107 = arith.maximumf %105, %106 : vector<128x128xf32>
    %c0_58 = arith.constant 0 : index
    %c0_59 = arith.constant 0 : index
    %108 = vector.load %arg17[%c0_58, %c0_59] : memref<128x1xf32, #tpu.memory_space<vmem>>, vector<128x1xf32>
    %c1_i32_60 = arith.constant 1 : i32
    %109 = tpu.dynamic_rotate %107 by %c1_i32_60 dim 1 : vector<128x128xf32>, i32 -> vector<128x128xf32>
    %110 = vector.broadcast %4 : vector<1x128xf32> to vector<128x128xf32>
    %111 = arith.mulf %109, %110 : vector<128x128xf32>
    %c127_i32_61 = arith.constant 127 : i32
    %112 = tpu.dynamic_rotate %107 by %c127_i32_61 dim 1 : vector<128x128xf32>, i32 -> vector<128x128xf32>
    %113 = vector.broadcast %8 : vector<1x128xf32> to vector<128x128xf32>
    %114 = arith.mulf %112, %113 : vector<128x128xf32>
    %115 = tpu.concatenate %111, %107, %114 in 0 : vector<128x128xf32>, vector<128x128xf32>, vector<128x128xf32> -> vector<384x128xf32>
    %116 = arith.truncf %115 : vector<384x128xf32> to vector<384x128xbf16>
    %c0_62 = arith.constant 0 : index
    %c0_63 = arith.constant 0 : index
    %117 = vector.load %arg16[%c0_62, %c0_63] : memref<128x384xbf16, #tpu.memory_space<vmem>>, vector<128x384xbf16>
    %cst_64 = arith.constant dense<0.000000e+00> : vector<128x128xf32>
    %118 = tpu.matmul %117, %116, %cst_64 {dimension_numbers = #tpu.dot_dimension_numbers<[1], [0], [0], [1], [0, 0, 1, 1], [], []>} : vector<128x384xbf16>, vector<384x128xbf16>, vector<128x128xf32> -> vector<128x128xf32>
    %119 = vector.broadcast %108 : vector<128x1xf32> to vector<128x128xf32>
    %120 = arith.mulf %119, %118 : vector<128x128xf32>
    %c0_65 = arith.constant 0 : index
    %c0_66 = arith.constant 0 : index
    %121 = vector.load %arg18[%c0_65, %c0_66] : memref<128x1xf32, #tpu.memory_space<vmem>>, vector<128x1xf32>
    %122 = vector.broadcast %121 : vector<128x1xf32> to vector<128x128xf32>
    %123 = arith.addf %120, %122 : vector<128x128xf32>
    %c0_67 = arith.constant 0 : index
    %c0_68 = arith.constant 0 : index
    %124 = vector.load %arg27[%c0_67, %c0_68] : memref<256x128xf32, #tpu.memory_space<vmem>>, vector<128x128xf32>
    tpu.vector_store %arg27[%c0_67, %c0_68], %123 {strides = array<i32>} : memref<256x128xf32, #tpu.memory_space<vmem>>, vector<128x128xf32>,
    %c32 = arith.constant 32 : index
    %c0_69 = arith.constant 0 : index
    %125 = vector.load %arg27[%c32, %c0_69] : memref<256x128xf32, #tpu.memory_space<vmem>>, vector<64x128xf32>
    %126 = arith.addf %125, %89 : vector<64x128xf32>
    %c32_70 = arith.constant 32 : index
    %c0_71 = arith.constant 0 : index
    %127 = vector.load %arg27[%c32_70, %c0_71] : memref<256x128xf32, #tpu.memory_space<vmem>>, vector<64x128xf32>
    tpu.vector_store %arg27[%c32_70, %c0_71], %126 {strides = array<i32>} : memref<256x128xf32, #tpu.memory_space<vmem>>, vector<64x128xf32>,
    %c0_72 = arith.constant 0 : index
    %c0_73 = arith.constant 0 : index
    %128 = vector.load %arg27[%c0_72, %c0_73] : memref<256x128xf32, #tpu.memory_space<vmem>>, vector<128x128xf32>
    %cst_74 = arith.constant 0.000000e+00 : f32
    %129 = vector.broadcast %cst_74 : f32 to vector<128x128xf32>
    %130 = arith.maximumf %128, %129 : vector<128x128xf32>
    %c1_i32_75 = arith.constant 1 : i32
    %131 = tpu.dynamic_rotate %130 by %c1_i32_75 dim 1 : vector<128x128xf32>, i32 -> vector<128x128xf32>
    %132 = vector.broadcast %4 : vector<1x128xf32> to vector<128x128xf32>
    %133 = arith.mulf %131, %132 : vector<128x128xf32>
    %c127_i32_76 = arith.constant 127 : i32
    %134 = tpu.dynamic_rotate %130 by %c127_i32_76 dim 1 : vector<128x128xf32>, i32 -> vector<128x128xf32>
    %135 = vector.broadcast %8 : vector<1x128xf32> to vector<128x128xf32>
    %136 = arith.mulf %134, %135 : vector<128x128xf32>
    %137 = tpu.concatenate %133, %130, %136 in 0 : vector<128x128xf32>, vector<128x128xf32>, vector<128x128xf32> -> vector<384x128xf32>
    %138 = arith.truncf %137 : vector<384x128xf32> to vector<384x128xbf16>
    %c0_77 = arith.constant 0 : index
    %c0_78 = arith.constant 0 : index
    %139 = vector.load %arg19[%c0_77, %c0_78] : memref<256x384xbf16, #tpu.memory_space<vmem>>, vector<256x384xbf16>
    %cst_79 = arith.constant dense<0.000000e+00> : vector<256x128xf32>
    %140 = tpu.matmul %139, %138, %cst_79 {dimension_numbers = #tpu.dot_dimension_numbers<[1], [0], [0], [1], [0, 0, 1, 1], [], []>} : vector<256x384xbf16>, vector<384x128xbf16>, vector<256x128xf32> -> vector<256x128xf32>
    %c0_80 = arith.constant 0 : index
    %c0_81 = arith.constant 0 : index
    %141 = vector.load %arg20[%c0_80, %c0_81] : memref<256x1xf32, #tpu.memory_space<vmem>>, vector<256x1xf32>
    %142 = vector.broadcast %141 : vector<256x1xf32> to vector<256x128xf32>
    %143 = arith.mulf %142, %140 : vector<256x128xf32>
    %c0_82 = arith.constant 0 : index
    %c0_83 = arith.constant 0 : index
    %144 = vector.load %arg21[%c0_82, %c0_83] : memref<256x1xf32, #tpu.memory_space<vmem>>, vector<256x1xf32>
    %145 = vector.broadcast %144 : vector<256x1xf32> to vector<256x128xf32>
    %146 = arith.addf %143, %145 : vector<256x128xf32>
    %cst_84 = arith.constant 0.000000e+00 : f32
    %147 = vector.broadcast %cst_84 : f32 to vector<256x128xf32>
    %148 = arith.maximumf %146, %147 : vector<256x128xf32>
    %c0_85 = arith.constant 0 : index
    %c0_86 = arith.constant 0 : index
    %149 = vector.load %arg23[%c0_85, %c0_86] : memref<256x1xf32, #tpu.memory_space<vmem>>, vector<256x1xf32>
    %c1_i32_87 = arith.constant 1 : i32
    %150 = tpu.dynamic_rotate %148 by %c1_i32_87 dim 1 : vector<256x128xf32>, i32 -> vector<256x128xf32>
    %151 = vector.broadcast %4 : vector<1x128xf32> to vector<256x128xf32>
    %152 = arith.mulf %150, %151 : vector<256x128xf32>
    %c127_i32_88 = arith.constant 127 : i32
    %153 = tpu.dynamic_rotate %148 by %c127_i32_88 dim 1 : vector<256x128xf32>, i32 -> vector<256x128xf32>
    %154 = vector.broadcast %8 : vector<1x128xf32> to vector<256x128xf32>
    %155 = arith.mulf %153, %154 : vector<256x128xf32>
    %156 = tpu.concatenate %152, %148, %155 in 0 : vector<256x128xf32>, vector<256x128xf32>, vector<256x128xf32> -> vector<768x128xf32>
    %157 = arith.truncf %156 : vector<768x128xf32> to vector<768x128xbf16>
    %c0_89 = arith.constant 0 : index
    %c0_90 = arith.constant 0 : index
    %158 = vector.load %arg22[%c0_89, %c0_90] : memref<256x768xbf16, #tpu.memory_space<vmem>>, vector<256x768xbf16>
    %cst_91 = arith.constant dense<0.000000e+00> : vector<256x128xf32>
    %159 = tpu.matmul %158, %157, %cst_91 {dimension_numbers = #tpu.dot_dimension_numbers<[1], [0], [0], [1], [0, 0, 1, 1], [], []>} : vector<256x768xbf16>, vector<768x128xbf16>, vector<256x128xf32> -> vector<256x128xf32>
    %160 = vector.broadcast %149 : vector<256x1xf32> to vector<256x128xf32>
    %161 = arith.mulf %160, %159 : vector<256x128xf32>
    %c0_92 = arith.constant 0 : index
    %c0_93 = arith.constant 0 : index
    %162 = vector.load %arg24[%c0_92, %c0_93] : memref<256x1xf32, #tpu.memory_space<vmem>>, vector<256x1xf32>
    %163 = vector.broadcast %162 : vector<256x1xf32> to vector<256x128xf32>
    %164 = arith.addf %161, %163 : vector<256x128xf32>
    %c0_94 = arith.constant 0 : index
    %c0_95 = arith.constant 0 : index
    %165 = vector.load %arg27[%c0_94, %c0_95] : memref<256x128xf32, #tpu.memory_space<vmem>>, vector<256x128xf32>
    tpu.vector_store %arg27[%c0_94, %c0_95], %164 {strides = array<i32>} : memref<256x128xf32, #tpu.memory_space<vmem>>, vector<256x128xf32>,
    %c64 = arith.constant 64 : index
    %c0_96 = arith.constant 0 : index
    %166 = vector.load %arg27[%c64, %c0_96] : memref<256x128xf32, #tpu.memory_space<vmem>>, vector<128x128xf32>
    %167 = arith.addf %166, %130 : vector<128x128xf32>
    %c64_97 = arith.constant 64 : index
    %c0_98 = arith.constant 0 : index
    %168 = vector.load %arg27[%c64_97, %c0_98] : memref<256x128xf32, #tpu.memory_space<vmem>>, vector<128x128xf32>
    tpu.vector_store %arg27[%c64_97, %c0_98], %167 {strides = array<i32>} : memref<256x128xf32, #tpu.memory_space<vmem>>, vector<128x128xf32>,
    %c0_99 = arith.constant 0 : index
    %c0_100 = arith.constant 0 : index
    %169 = vector.load %arg27[%c0_99, %c0_100] : memref<256x128xf32, #tpu.memory_space<vmem>>, vector<256x128xf32>
    %cst_101 = arith.constant 0.000000e+00 : f32
    %170 = vector.broadcast %cst_101 : f32 to vector<256x128xf32>
    %171 = arith.maximumf %169, %170 : vector<256x128xf32>
    %c0_102 = arith.constant 0 : index
    %c0_103 = arith.constant 0 : index
    %172 = vector.load %arg25[%c0_102, %c0_103] : memref<16x256xbf16, #tpu.memory_space<vmem>>, vector<16x256xbf16>
    %173 = arith.truncf %171 : vector<256x128xf32> to vector<256x128xbf16>
    %cst_104 = arith.constant dense<0.000000e+00> : vector<16x128xf32>
    %174 = tpu.matmul %172, %173, %cst_104 {dimension_numbers = #tpu.dot_dimension_numbers<[1], [0], [0], [1], [0, 0, 1, 1], [], []>} : vector<16x256xbf16>, vector<256x128xbf16>, vector<16x128xf32> -> vector<16x128xf32>
    %cst_105 = arith.constant dense<0.000000e+00> : vector<16xf32>
    %175 = vector.multi_reduction <add>, %174, %cst_105 [1] : vector<16x128xf32> to vector<16xf32>
    %176 = vector.shape_cast %175 : vector<16xf32> to vector<16x1xf32>
    %cst_106 = arith.constant 1.280000e+02 : f32
    %177 = vector.broadcast %cst_106 : f32 to vector<16x1xf32>
    %178 = arith.divf %176, %177 : vector<16x1xf32>
    %c0_107 = arith.constant 0 : index
    %c0_108 = arith.constant 0 : index
    %c0_109 = arith.constant 0 : index
    %179 = vector.load %arg26[%c0_107, %c0_108, %c0_109] : memref<1x16x1xf32, #tpu.memory_space<vmem>>, vector<1x16x1xf32>
    %180 = vector.shape_cast %179 : vector<1x16x1xf32> to vector<16x1xf32>
    %181 = vector.shape_cast %178 : vector<16x1xf32> to vector<1x16x1xf32>
    tpu.vector_store %arg26[%c0_107, %c0_108, %c0_109], %181 {strides = array<i32>} : memref<1x16x1xf32, #tpu.memory_space<vmem>>, vector<1x16x1xf32>,
    return
  }
  func.func @transform_0(%arg0: i32) -> (i32, i32, i32) {
    %c0_i32 = arith.constant 0 : i32
    %c0_i32_0 = arith.constant 0 : i32
    %c0_i32_1 = arith.constant 0 : i32
    return %arg0, %c0_i32, %c0_i32_0 : i32, i32, i32
  }
  func.func @transform_1(%arg0: i32) -> (i32, i32, i32) {
    %c0_i32 = arith.constant 0 : i32
    %c0_i32_0 = arith.constant 0 : i32
    %c0_i32_1 = arith.constant 0 : i32
    return %arg0, %c0_i32, %c0_i32_0 : i32, i32, i32
  }
  func.func @transform_2(%arg0: i32) -> (i32, i32, i32) {
    %c0_i32 = arith.constant 0 : i32
    %c0_i32_0 = arith.constant 0 : i32
    %c0_i32_1 = arith.constant 0 : i32
    return %arg0, %c0_i32, %c0_i32_0 : i32, i32, i32
  }
  func.func @transform_3(%arg0: i32) -> (i32, i32) {
    %c0_i32 = arith.constant 0 : i32
    %c0_i32_0 = arith.constant 0 : i32
    %c0_i32_1 = arith.constant 0 : i32
    return %c0_i32, %c0_i32_0 : i32, i32
  }
  func.func @transform_4(%arg0: i32) -> (i32, i32) {
    %c0_i32 = arith.constant 0 : i32
    %c0_i32_0 = arith.constant 0 : i32
    %c0_i32_1 = arith.constant 0 : i32
    return %c0_i32, %c0_i32_0 : i32, i32
  }
  func.func @transform_5(%arg0: i32) -> (i32, i32) {
    %c0_i32 = arith.constant 0 : i32
    %c0_i32_0 = arith.constant 0 : i32
    %c0_i32_1 = arith.constant 0 : i32
    return %c0_i32, %c0_i32_0 : i32, i32
  }
  func.func @transform_6(%arg0: i32) -> (i32, i32) {
    %c0_i32 = arith.constant 0 : i32
    %c0_i32_0 = arith.constant 0 : i32
    %c0_i32_1 = arith.constant 0 : i32
    return %c0_i32, %c0_i32_0 : i32, i32
  }
  func.func @transform_7(%arg0: i32) -> (i32, i32) {
    %c0_i32 = arith.constant 0 : i32
    %c0_i32_0 = arith.constant 0 : i32
    %c0_i32_1 = arith.constant 0 : i32
    return %c0_i32, %c0_i32_0 : i32, i32
  }
  func.func @transform_8(%arg0: i32) -> (i32, i32) {
    %c0_i32 = arith.constant 0 : i32
    %c0_i32_0 = arith.constant 0 : i32
    %c0_i32_1 = arith.constant 0 : i32
    return %c0_i32, %c0_i32_0 : i32, i32
  }
  func.func @transform_9(%arg0: i32) -> (i32, i32) {
    %c0_i32 = arith.constant 0 : i32
    %c0_i32_0 = arith.constant 0 : i32
    %c0_i32_1 = arith.constant 0 : i32
    return %c0_i32, %c0_i32_0 : i32, i32
  }
  func.func @transform_10(%arg0: i32) -> (i32, i32) {
    %c0_i32 = arith.constant 0 : i32
    %c0_i32_0 = arith.constant 0 : i32
    %c0_i32_1 = arith.constant 0 : i32
    return %c0_i32, %c0_i32_0 : i32, i32
  }
  func.func @transform_11(%arg0: i32) -> (i32, i32) {
    %c0_i32 = arith.constant 0 : i32
    %c0_i32_0 = arith.constant 0 : i32
    %c0_i32_1 = arith.constant 0 : i32
    return %c0_i32, %c0_i32_0 : i32, i32
  }
  func.func @transform_12(%arg0: i32) -> (i32, i32) {
    %c0_i32 = arith.constant 0 : i32
    %c0_i32_0 = arith.constant 0 : i32
    %c0_i32_1 = arith.constant 0 : i32
    return %c0_i32, %c0_i32_0 : i32, i32
  }
  func.func @transform_13(%arg0: i32) -> (i32, i32) {
    %c0_i32 = arith.constant 0 : i32
    %c0_i32_0 = arith.constant 0 : i32
    %c0_i32_1 = arith.constant 0 : i32
    return %c0_i32, %c0_i32_0 : i32, i32
  }
  func.func @transform_14(%arg0: i32) -> (i32, i32) {
    %c0_i32 = arith.constant 0 : i32
    %c0_i32_0 = arith.constant 0 : i32
    %c0_i32_1 = arith.constant 0 : i32
    return %c0_i32, %c0_i32_0 : i32, i32
  }
  func.func @transform_15(%arg0: i32) -> (i32, i32) {
    %c0_i32 = arith.constant 0 : i32
    %c0_i32_0 = arith.constant 0 : i32
    %c0_i32_1 = arith.constant 0 : i32
    return %c0_i32, %c0_i32_0 : i32, i32
  }
  func.func @transform_16(%arg0: i32) -> (i32, i32) {
    %c0_i32 = arith.constant 0 : i32
    %c0_i32_0 = arith.constant 0 : i32
    %c0_i32_1 = arith.constant 0 : i32
    return %c0_i32, %c0_i32_0 : i32, i32
  }
  func.func @transform_17(%arg0: i32) -> (i32, i32) {
    %c0_i32 = arith.constant 0 : i32
    %c0_i32_0 = arith.constant 0 : i32
    %c0_i32_1 = arith.constant 0 : i32
    return %c0_i32, %c0_i32_0 : i32, i32
  }
  func.func @transform_18(%arg0: i32) -> (i32, i32) {
    %c0_i32 = arith.constant 0 : i32
    %c0_i32_0 = arith.constant 0 : i32
    %c0_i32_1 = arith.constant 0 : i32
    return %c0_i32, %c0_i32_0 : i32, i32
  }
  func.func @transform_19(%arg0: i32) -> (i32, i32) {
    %c0_i32 = arith.constant 0 : i32
    %c0_i32_0 = arith.constant 0 : i32
    %c0_i32_1 = arith.constant 0 : i32
    return %c0_i32, %c0_i32_0 : i32, i32
  }
  func.func @transform_20(%arg0: i32) -> (i32, i32) {
    %c0_i32 = arith.constant 0 : i32
    %c0_i32_0 = arith.constant 0 : i32
    %c0_i32_1 = arith.constant 0 : i32
    return %c0_i32, %c0_i32_0 : i32, i32
  }
  func.func @transform_21(%arg0: i32) -> (i32, i32) {
    %c0_i32 = arith.constant 0 : i32
    %c0_i32_0 = arith.constant 0 : i32
    %c0_i32_1 = arith.constant 0 : i32
    return %c0_i32, %c0_i32_0 : i32, i32
  }
  func.func @transform_22(%arg0: i32) -> (i32, i32) {
    %c0_i32 = arith.constant 0 : i32
    %c0_i32_0 = arith.constant 0 : i32
    %c0_i32_1 = arith.constant 0 : i32
    return %c0_i32, %c0_i32_0 : i32, i32
  }
  func.func @transform_23(%arg0: i32) -> (i32, i32) {
    %c0_i32 = arith.constant 0 : i32
    %c0_i32_0 = arith.constant 0 : i32
    %c0_i32_1 = arith.constant 0 : i32
    return %c0_i32, %c0_i32_0 : i32, i32
  }
  func.func @transform_24(%arg0: i32) -> (i32, i32) {
    %c0_i32 = arith.constant 0 : i32
    %c0_i32_0 = arith.constant 0 : i32
    %c0_i32_1 = arith.constant 0 : i32
    return %c0_i32, %c0_i32_0 : i32, i32
  }
  func.func @transform_25(%arg0: i32) -> (i32, i32, i32) {
    %c0_i32 = arith.constant 0 : i32
    %c0_i32_0 = arith.constant 0 : i32
    %c0_i32_1 = arith.constant 0 : i32
    return %arg0, %c0_i32, %c0_i32_0 : i32, i32, i32
  }
}

</mosaic_0001>

<llo_original>
// kernel: freqnet_forward.1
$region0: #{freqnet_forward.1}
  #allocation0 [shape = 'u32[]', space=smem, size = 0x4, offset = 0x4, fixed_abs, tag = 'smem constant byte address 0x4 - core index']
  #allocation1 [shape = 'u32[144,128]{1,0:T(1,128)}', space=vmem, size = 0x12000, scoped, tag = 'internal scratch']
  #allocation2 [shape = 'f32[256,128]{1,0:T(8,128)}', space=vmem, size = 0x20000, scoped, tag = 'scratch operand']
  %s0 = inlined_call_operand.vmem [shape: bf16[2,8,128], index: 0, kind: input, shape index: {}]
  %s1 = inlined_call_operand.vmem [shape: bf16[2,8,128], index: 1, kind: input, shape index: {}]
  %s2 = inlined_call_operand.vmem [shape: bf16[2,8,128], index: 2, kind: input, shape index: {}]
  %s3 = inlined_call_operand.vmem [shape: bf16[64,8], index: 3, kind: input, shape index: {}]
  %s4 = inlined_call_operand.vmem [shape: f32[64,1], index: 4, kind: input, shape index: {}]
  %s5 = inlined_call_operand.vmem [shape: f32[64,1], index: 5, kind: input, shape index: {}]
  %s6 = inlined_call_operand.vmem [shape: bf16[64,192], index: 6, kind: input, shape index: {}]
  %s7 = inlined_call_operand.vmem [shape: f32[64,1], index: 7, kind: input, shape index: {}]
  %s8 = inlined_call_operand.vmem [shape: f32[64,1], index: 8, kind: input, shape index: {}]
  %s9 = inlined_call_operand.vmem [shape: bf16[64,192], index: 9, kind: input, shape index: {}]
  %s10 = inlined_call_operand.vmem [shape: f32[64,1], index: 10, kind: input, shape index: {}]
  %s11 = inlined_call_operand.vmem [shape: f32[64,1], index: 11, kind: input, shape index: {}]
  %s12 = inlined_call_operand.vmem [shape: bf16[128,192], index: 12, kind: input, shape index: {}]
  %s13 = inlined_call_operand.vmem [shape: f32[128,1], index: 13, kind: input, shape index: {}]
  %s14 = inlined_call_operand.vmem [shape: f32[128,1], index: 14, kind: input, shape index: {}]
  %s15 = inlined_call_operand.vmem [shape: bf16[128,384], index: 15, kind: input, shape index: {}]
  %s16 = inlined_call_operand.vmem [shape: f32[128,1], index: 16, kind: input, shape index: {}]
  %s17 = inlined_call_operand.vmem [shape: f32[128,1], index: 17, kind: input, shape index: {}]
  %s18 = inlined_call_operand.vmem [shape: bf16[256,384], index: 18, kind: input, shape index: {}]
  %s19 = inlined_call_operand.vmem [shape: f32[256,1], index: 19, kind: input, shape index: {}]
  %s20 = inlined_call_operand.vmem [shape: f32[256,1], index: 20, kind: input, shape index: {}]
  %s21 = inlined_call_operand.vmem [shape: bf16[256,768], index: 21, kind: input, shape index: {}]
  %s22 = inlined_call_operand.vmem [shape: f32[256,1], index: 22, kind: input, shape index: {}]
  %s23 = inlined_call_operand.vmem [shape: f32[256,1], index: 23, kind: input, shape index: {}]
  %s24 = inlined_call_operand.vmem [shape: bf16[16,256], index: 24, kind: input, shape index: {}]
  %s25 = inlined_call_operand.vmem [shape: f32[2,16,1], index: 25, kind: output, shape index: {}]
  %s26 = sld [smem:[#allocation0]]
  $region133: #{freqnet_forward.1} parent=0
    _
  %s28 = ssub.s32 1, %s26
  %s29 = scalar_select 0, %s28, %s26
  loop: start=0, step=1, limit=4
  $region2: #{freqnet_forward.1} parent=0 // loop_pre_header
    _
  $region3: #{freqnet_forward.1} parent=0 // loop_header
    %s31 = sphi 0, %s35
    %p32 = scmp.ge.s32.totalorder %s31, 4
    %s41 = sphi 0, %s43
    %s44 = sphi 0, %s41
    %s45 = sphi 0, %s44
    %s61 = sphi 0, %s45
    %s67 = sphi 0, %s69
    %s70 = sphi 0, %s67
    %s71 = sphi 0, %s70
    %s87 = sphi 0, %s71
    %s93 = sphi 0, %s95
    %s96 = sphi 0, %s93
    %s97 = sphi 0, %s96
    %s113 = sphi 0, %s97
    %s117 = sphi 0, %s117
    %s119 = sphi 0, %s117
    %s120 = sphi 0, %s119
    %s134 = sphi 0, %s120
    %s138 = sphi 0, %s138
    %s140 = sphi 0, %s138
    %s141 = sphi 0, %s140
    %s155 = sphi 0, %s141
    %s159 = sphi 0, %s159
    %s161 = sphi 0, %s159
    %s162 = sphi 0, %s161
    %s176 = sphi 0, %s162
    %s180 = sphi 0, %s180
    %s182 = sphi 0, %s180
    %s183 = sphi 0, %s182
    %s197 = sphi 0, %s183
    %s201 = sphi 0, %s201
    %s203 = sphi 0, %s201
    %s204 = sphi 0, %s203
    %s218 = sphi 0, %s204
    %s222 = sphi 0, %s222
    %s224 = sphi 0, %s222
    %s225 = sphi 0, %s224
    %s239 = sphi 0, %s225
    %s243 = sphi 0, %s243
    %s245 = sphi 0, %s243
    %s246 = sphi 0, %s245
    %s260 = sphi 0, %s246
    %s264 = sphi 0, %s264
    %s266 = sphi 0, %s264
    %s267 = sphi 0, %s266
    %s281 = sphi 0, %s267
    %s285 = sphi 0, %s285
    %s287 = sphi 0, %s285
    %s288 = sphi 0, %s287
    %s302 = sphi 0, %s288
    %s306 = sphi 0, %s306
    %s308 = sphi 0, %s306
    %s309 = sphi 0, %s308
    %s323 = sphi 0, %s309
    %s327 = sphi 0, %s327
    %s329 = sphi 0, %s327
    %s330 = sphi 0, %s329
    %s344 = sphi 0, %s330
    %s348 = sphi 0, %s348
    %s350 = sphi 0, %s348
    %s351 = sphi 0, %s350
    %s365 = sphi 0, %s351
    %s369 = sphi 0, %s369
    %s371 = sphi 0, %s369
    %s372 = sphi 0, %s371
    %s386 = sphi 0, %s372
    %s390 = sphi 0, %s390
    %s392 = sphi 0, %s390
    %s393 = sphi 0, %s392
    %s407 = sphi 0, %s393
    %s411 = sphi 0, %s411
    %s413 = sphi 0, %s411
    %s414 = sphi 0, %s413
    %s428 = sphi 0, %s414
    %s432 = sphi 0, %s432
    %s434 = sphi 0, %s432
    %s435 = sphi 0, %s434
    %s449 = sphi 0, %s435
    %s453 = sphi 0, %s453
    %s455 = sphi 0, %s453
    %s456 = sphi 0, %s455
    %s470 = sphi 0, %s456
    %s474 = sphi 0, %s474
    %s476 = sphi 0, %s474
    %s477 = sphi 0, %s476
    %s491 = sphi 0, %s477
    %s495 = sphi 0, %s495
    %s497 = sphi 0, %s495
    %s498 = sphi 0, %s497
    %s512 = sphi 0, %s498
    %s516 = sphi 0, %s516
    %s518 = sphi 0, %s516
    %s519 = sphi 0, %s518
    %s533 = sphi 0, %s519
    %s537 = sphi 0, %s537
    %s539 = sphi 0, %s537
    %s540 = sphi 0, %s539
    %s554 = sphi 0, %s540
    %s558 = sphi 0, %s558
    %s560 = sphi 0, %s558
    %s561 = sphi 0, %s560
    %s575 = sphi 0, %s561
    %s581 = sphi 0, %s583
    %s584 = sphi 0, %s581
    %s585 = sphi 0, %s584
    %s601 = sphi 0, %s585
  $region4: #{freqnet_forward.1} parent=0 // loop_header_branch
    %34 = sbr.rel (%p32) target = $region8
  $region5: #{freqnet_forward.1} parent=0 // loop_body
    %s36 = ssub.s32 %s31, 1
    %s37 = ssub.s32 %s31, 2
    %s38 = sadd.s32 %s31, 1
    %s39 = ssub.s32 %s31, %s38
    %p40 = scmp.eq.s32.totalorder %s39, 0
    %s42 = sadd.s32 %s41, 1
    %s43 = scalar_select %p40, %s41, %s42
    %p46 = pneg %p40
    %p47 = scmp.eq.s32.totalorder %s31, 1
    %p48 = por %p46, %p47
    %p49 = scmp.ne.s32.totalorder %s41, %s44
    %p50 = scmp.eq.s32.totalorder %s31, 0
    %p51 = por %p49, %p50
    %p52 = scmp.ne.s32.totalorder %s41, %s44
    %p53 = scmp.eq.s32.totalorder %s36, 1
    %p54 = por %p52, %p53
    %p55 = scmp.ne.s32.totalorder %s44, %s45
    %p56 = scmp.eq.s32.totalorder %s36, 0
    %p57 = por %p55, %p56
    %p58 = scmp.ne.s32.totalorder %s44, %s45
    %p59 = scmp.eq.s32.totalorder %s37, 1
    %p60 = por %p58, %p59
    %p62 = scmp.ne.s32.totalorder %s45, %s61
    %p63 = scmp.eq.s32.totalorder %s37, 0
    %p64 = por %p62, %p63
    %s65 = ssub.s32 %s31, %s38
    %p66 = scmp.eq.s32.totalorder %s65, 0
    %s68 = sadd.s32 %s67, 1
    %s69 = scalar_select %p66, %s67, %s68
    %p72 = pneg %p66
    %p73 = scmp.eq.s32.totalorder %s31, 1
    %p74 = por %p72, %p73
    %p75 = scmp.ne.s32.totalorder %s67, %s70
    %p76 = scmp.eq.s32.totalorder %s31, 0
    %p77 = por %p75, %p76
    %p78 = scmp.ne.s32.totalorder %s67, %s70
    %p79 = scmp.eq.s32.totalorder %s36, 1
    %p80 = por %p78, %p79
    %p81 = scmp.ne.s32.totalorder %s70, %s71
    %p82 = scmp.eq.s32.totalorder %s36, 0
    %p83 = por %p81, %p82
    %p84 = scmp.ne.s32.totalorder %s70, %s71
    %p85 = scmp.eq.s32.totalorder %s37, 1
    %p86 = por %p84, %p85
    %p88 = scmp.ne.s32.totalorder %s71, %s87
    %p89 = scmp.eq.s32.totalorder %s37, 0
    %p90 = por %p88, %p89
    %s91 = ssub.s32 %s31, %s38
    %p92 = scmp.eq.s32.totalorder %s91, 0
    %s94 = sadd.s32 %s93, 1
    %s95 = scalar_select %p92, %s93, %s94
    %p98 = pneg %p92
    %p99 = scmp.eq.s32.totalorder %s31, 1
    %p100 = por %p98, %p99
    %p101 = scmp.ne.s32.totalorder %s93, %s96
    %p102 = scmp.eq.s32.totalorder %s31, 0
    %p103 = por %p101, %p102
    %p104 = scmp.ne.s32.totalorder %s93, %s96
    %p105 = scmp.eq.s32.totalorder %s36, 1
    %p106 = por %p104, %p105
    %p107 = scmp.ne.s32.totalorder %s96, %s97
    %p108 = scmp.eq.s32.totalorder %s36, 0
    %p109 = por %p107, %p108
    %p110 = scmp.ne.s32.totalorder %s96, %s97
    %p111 = scmp.eq.s32.totalorder %s37, 1
    %p112 = por %p110, %p111
    %p114 = scmp.ne.s32.totalorder %s97, %s113
    %p115 = scmp.eq.s32.totalorder %s37, 0
    %p116 = por %p114, %p115
    %s118 = sadd.s32 %s117, 1
    %p121 = scmp.eq.s32.totalorder %s31, 1
    %p122 = scmp.ne.s32.totalorder %s117, %s119
    %p123 = scmp.eq.s32.totalorder %s31, 0
    %p124 = por %p122, %p123
    %p125 = scmp.ne.s32.totalorder %s117, %s119
    %p126 = scmp.eq.s32.totalorder %s36, 1
    %p127 = por %p125, %p126
    %p128 = scmp.ne.s32.totalorder %s119, %s120
    %p129 = scmp.eq.s32.totalorder %s36, 0
    %p130 = por %p128, %p129
    %p131 = scmp.ne.s32.totalorder %s119, %s120
    %p132 = scmp.eq.s32.totalorder %s37, 1
    %p133 = por %p131, %p132
    %p135 = scmp.ne.s32.totalorder %s120, %s134
    %p136 = scmp.eq.s32.totalorder %s37, 0
    %p137 = por %p135, %p136
    %s139 = sadd.s32 %s138, 1
    %p142 = scmp.eq.s32.totalorder %s31, 1
    %p143 = scmp.ne.s32.totalorder %s138, %s140
    %p144 = scmp.eq.s32.totalorder %s31, 0
    %p145 = por %p143, %p144
    %p146 = scmp.ne.s32.totalorder %s138, %s140
    %p147 = scmp.eq.s32.totalorder %s36, 1
    %p148 = por %p146, %p147
    %p149 = scmp.ne.s32.totalorder %s140, %s141
    %p150 = scmp.eq.s32.totalorder %s36, 0
    %p151 = por %p149, %p150
    %p152 = scmp.ne.s32.totalorder %s140, %s141
    %p153 = scmp.eq.s32.totalorder %s37, 1
    %p154 = por %p152, %p153
    %p156 = scmp.ne.s32.totalorder %s141, %s155
    %p157 = scmp.eq.s32.totalorder %s37, 0
    %p158 = por %p156, %p157
    %s160 = sadd.s32 %s159, 1
    %p163 = scmp.eq.s32.totalorder %s31, 1
    %p164 = scmp.ne.s32.totalorder %s159, %s161
    %p165 = scmp.eq.s32.totalorder %s31, 0
    %p166 = por %p164, %p165
    %p167 = scmp.ne.s32.totalorder %s159, %s161
    %p168 = scmp.eq.s32.totalorder %s36, 1
    %p169 = por %p167, %p168
    %p170 = scmp.ne.s32.totalorder %s161, %s162
    %p171 = scmp.eq.s32.totalorder %s36, 0
    %p172 = por %p170, %p171
    %p173 = scmp.ne.s32.totalorder %s161, %s162
    %p174 = scmp.eq.s32.totalorder %s37, 1
    %p175 = por %p173, %p174
    %p177 = scmp.ne.s32.totalorder %s162, %s176
    %p178 = scmp.eq.s32.totalorder %s37, 0
    %p179 = por %p177, %p178
    %s181 = sadd.s32 %s180, 1
    %p184 = scmp.eq.s32.totalorder %s31, 1
    %p185 = scmp.ne.s32.totalorder %s180, %s182
    %p186 = scmp.eq.s32.totalorder %s31, 0
    %p187 = por %p185, %p186
    %p188 = scmp.ne.s32.totalorder %s180, %s182
    %p189 = scmp.eq.s32.totalorder %s36, 1
    %p190 = por %p188, %p189
    %p191 = scmp.ne.s32.totalorder %s182, %s183
    %p192 = scmp.eq.s32.totalorder %s36, 0
    %p193 = por %p191, %p192
    %p194 = scmp.ne.s32.totalorder %s182, %s183
    %p195 = scmp.eq.s32.totalorder %s37, 1
    %p196 = por %p194, %p195
    %p198 = scmp.ne.s32.totalorder %s183, %s197
    %p199 = scmp.eq.s32.totalorder %s37, 0
    %p200 = por %p198, %p199
    %s202 = sadd.s32 %s201, 1
    %p205 = scmp.eq.s32.totalorder %s31, 1
    %p206 = scmp.ne.s32.totalorder %s201, %s203
    %p207 = scmp.eq.s32.totalorder %s31, 0
    %p208 = por %p206, %p207
    %p209 = scmp.ne.s32.totalorder %s201, %s203
    %p210 = scmp.eq.s32.totalorder %s36, 1
    %p211 = por %p209, %p210
    %p212 = scmp.ne.s32.totalorder %s203, %s204
    %p213 = scmp.eq.s32.totalorder %s36, 0
    %p214 = por %p212, %p213
    %p215 = scmp.ne.s32.totalorder %s203, %s204
    %p216 = scmp.eq.s32.totalorder %s37, 1
    %p217 = por %p215, %p216
    %p219 = scmp.ne.s32.totalorder %s204, %s218
    %p220 = scmp.eq.s32.totalorder %s37, 0
    %p221 = por %p219, %p220
    %s223 = sadd.s32 %s222, 1
    %p226 = scmp.eq.s32.totalorder %s31, 1
    %p227 = scmp.ne.s32.totalorder %s222, %s224
    %p228 = scmp.eq.s32.totalorder %s31, 0
    %p229 = por %p227, %p228
    %p230 = scmp.ne.s32.totalorder %s222, %s224
    %p231 = scmp.eq.s32.totalorder %s36, 1
    %p232 = por %p230, %p231
    %p233 = scmp.ne.s32.totalorder %s224, %s225
    %p234 = scmp.eq.s32.totalorder %s36, 0
    %p235 = por %p233, %p234
    %p236 = scmp.ne.s32.totalorder %s224, %s225
    %p237 = scmp.eq.s32.totalorder %s37, 1
    %p238 = por %p236, %p237
    %p240 = scmp.ne.s32.totalorder %s225, %s239
    %p241 = scmp.eq.s32.totalorder %s37, 0
    %p242 = por %p240, %p241
    %s244 = sadd.s32 %s243, 1
    %p247 = scmp.eq.s32.totalorder %s31, 1
    %p248 = scmp.ne.s32.totalorder %s243, %s245
    %p249 = scmp.eq.s32.totalorder %s31, 0
    %p250 = por %p248, %p249
    %p251 = scmp.ne.s32.totalorder %s243, %s245
    %p252 = scmp.eq.s32.totalorder %s36, 1
    %p253 = por %p251, %p252
    %p254 = scmp.ne.s32.totalorder %s245, %s246
    %p255 = scmp.eq.s32.totalorder %s36, 0
    %p256 = por %p254, %p255
    %p257 = scmp.ne.s32.totalorder %s245, %s246
    %p258 = scmp.eq.s32.totalorder %s37, 1
    %p259 = por %p257, %p258
    %p261 = scmp.ne.s32.totalorder %s246, %s260
    %p262 = scmp.eq.s32.totalorder %s37, 0
    %p263 = por %p261, %p262
    %s265 = sadd.s32 %s264, 1
    %p268 = scmp.eq.s32.totalorder %s31, 1
    %p269 = scmp.ne.s32.totalorder %s264, %s266
    %p270 = scmp.eq.s32.totalorder %s31, 0
    %p271 = por %p269, %p270
    %p272 = scmp.ne.s32.totalorder %s264, %s266
    %p273 = scmp.eq.s32.totalorder %s36, 1
    %p274 = por %p272, %p273
    %p275 = scmp.ne.s32.totalorder %s266, %s267
    %p276 = scmp.eq.s32.totalorder %s36, 0
    %p277 = por %p275, %p276
    %p278 = scmp.ne.s32.totalorder %s266, %s267
    %p279 = scmp.eq.s32.totalorder %s37, 1
    %p280 = por %p278, %p279
    %p282 = scmp.ne.s32.totalorder %s267, %s281
    %p283 = scmp.eq.s32.totalorder %s37, 0
    %p284 = por %p282, %p283
    %s286 = sadd.s32 %s285, 1
    %p289 = scmp.eq.s32.totalorder %s31, 1
    %p290 = scmp.ne.s32.totalorder %s285, %s287
    %p291 = scmp.eq.s32.totalorder %s31, 0
    %p292 = por %p290, %p291
    %p293 = scmp.ne.s32.totalorder %s285, %s287
    %p294 = scmp.eq.s32.totalorder %s36, 1
    %p295 = por %p293, %p294
    %p296 = scmp.ne.s32.totalorder %s287, %s288
    %p297 = scmp.eq.s32.totalorder %s36, 0
    %p298 = por %p296, %p297
    %p299 = scmp.ne.s32.totalorder %s287, %s288
    %p300 = scmp.eq.s32.totalorder %s37, 1
    %p301 = por %p299, %p300
    %p303 = scmp.ne.s32.totalorder %s288, %s302
    %p304 = scmp.eq.s32.totalorder %s37, 0
    %p305 = por %p303, %p304
    %s307 = sadd.s32 %s306, 1
    %p310 = scmp.eq.s32.totalorder %s31, 1
    %p311 = scmp.ne.s32.totalorder %s306, %s308
    %p312 = scmp.eq.s32.totalorder %s31, 0
    %p313 = por %p311, %p312
    %p314 = scmp.ne.s32.totalorder %s306, %s308
    %p315 = scmp.eq.s32.totalorder %s36, 1
    %p316 = por %p314, %p315
    %p317 = scmp.ne.s32.totalorder %s308, %s309
    %p318 = scmp.eq.s32.totalorder %s36, 0
    %p319 = por %p317, %p318
    %p320 = scmp.ne.s32.totalorder %s308, %s309
    %p321 = scmp.eq.s32.totalorder %s37, 1
    %p322 = por %p320, %p321
    %p324 = scmp.ne.s32.totalorder %s309, %s323
    %p325 = scmp.eq.s32.totalorder %s37, 0
    %p326 = por %p324, %p325
    %s328 = sadd.s32 %s327, 1
    %p331 = scmp.eq.s32.totalorder %s31, 1
    %p332 = scmp.ne.s32.totalorder %s327, %s329
    %p333 = scmp.eq.s32.totalorder %s31, 0
    %p334 = por %p332, %p333
    %p335 = scmp.ne.s32.totalorder %s327, %s329
    %p336 = scmp.eq.s32.totalorder %s36, 1
    %p337 = por %p335, %p336
    %p338 = scmp.ne.s32.totalorder %s329, %s330
    %p339 = scmp.eq.s32.totalorder %s36, 0
    %p340 = por %p338, %p339
    %p341 = scmp.ne.s32.totalorder %s329, %s330
    %p342 = scmp.eq.s32.totalorder %s37, 1
    %p343 = por %p341, %p342
    %p345 = scmp.ne.s32.totalorder %s330, %s344
    %p346 = scmp.eq.s32.totalorder %s37, 0
    %p347 = por %p345, %p346
    %s349 = sadd.s32 %s348, 1
    %p352 = scmp.eq.s32.totalorder %s31, 1
    %p353 = scmp.ne.s32.totalorder %s348, %s350
    %p354 = scmp.eq.s32.totalorder %s31, 0
    %p355 = por %p353, %p354
    %p356 = scmp.ne.s32.totalorder %s348, %s350
    %p357 = scmp.eq.s32.totalorder %s36, 1
    %p358 = por %p356, %p357
    %p359 = scmp.ne.s32.totalorder %s350, %s351
    %p360 = scmp.eq.s32.totalorder %s36, 0
    %p361 = por %p359, %p360
    %p362 = scmp.ne.s32.totalorder %s350, %s351
    %p363 = scmp.eq.s32.totalorder %s37, 1
    %p364 = por %p362, %p363
    %p366 = scmp.ne.s32.totalorder %s351, %s365
    %p367 = scmp.eq.s32.totalorder %s37, 0
    %p368 = por %p366, %p367
    %s370 = sadd.s32 %s369, 1
    %p373 = scmp.eq.s32.totalorder %s31, 1
    %p374 = scmp.ne.s32.totalorder %s369, %s371
    %p375 = scmp.eq.s32.totalorder %s31, 0
    %p376 = por %p374, %p375
    %p377 = scmp.ne.s32.totalorder %s369, %s371
    %p378 = scmp.eq.s32.totalorder %s36, 1
    %p379 = por %p377, %p378
    %p380 = scmp.ne.s32.totalorder %s371, %s372
    %p381 = scmp.eq.s32.totalorder %s36, 0
    %p382 = por %p380, %p381
    %p383 = scmp.ne.s32.totalorder %s371, %s372
    %p384 = scmp.eq.s32.totalorder %s37, 1
    %p385 = por %p383, %p384
    %p387 = scmp.ne.s32.totalorder %s372, %s386
    %p388 = scmp.eq.s32.totalorder %s37, 0
    %p389 = por %p387, %p388
    %s391 = sadd.s32 %s390, 1
    %p394 = scmp.eq.s32.totalorder %s31, 1
    %p395 = scmp.ne.s32.totalorder %s390, %s392
    %p396 = scmp.eq.s32.totalorder %s31, 0
    %p397 = por %p395, %p396
    %p398 = scmp.ne.s32.totalorder %s390, %s392
    %p399 = scmp.eq.s32.totalorder %s36, 1
    %p400 = por %p398, %p399
    %p401 = scmp.ne.s32.totalorder %s392, %s393
    %p402 = scmp.eq.s32.totalorder %s36, 0
    %p403 = por %p401, %p402
    %p404 = scmp.ne.s32.totalorder %s392, %s393
    %p405 = scmp.eq.s32.totalorder %s37, 1
    %p406 = por %p404, %p405
    %p408 = scmp.ne.s32.totalorder %s393, %s407
    %p409 = scmp.eq.s32.totalorder %s37, 0
    %p410 = por %p408, %p409
    %s412 = sadd.s32 %s411, 1
    %p415 = scmp.eq.s32.totalorder %s31, 1
    %p416 = scmp.ne.s32.totalorder %s411, %s413
    %p417 = scmp.eq.s32.totalorder %s31, 0
    %p418 = por %p416, %p417
    %p419 = scmp.ne.s32.totalorder %s411, %s413
    %p420 = scmp.eq.s32.totalorder %s36, 1
    %p421 = por %p419, %p420
    %p422 = scmp.ne.s32.totalorder %s413, %s414
    %p423 = scmp.eq.s32.totalorder %s36, 0
    %p424 = por %p422, %p423
    %p425 = scmp.ne.s32.totalorder %s413, %s414
    %p426 = scmp.eq.s32.totalorder %s37, 1
    %p427 = por %p425, %p426
    %p429 = scmp.ne.s32.totalorder %s414, %s428
    %p430 = scmp.eq.s32.totalorder %s37, 0
    %p431 = por %p429, %p430
    %s433 = sadd.s32 %s432, 1
    %p436 = scmp.eq.s32.totalorder %s31, 1
    %p437 = scmp.ne.s32.totalorder %s432, %s434
    %p438 = scmp.eq.s32.totalorder %s31, 0
    %p439 = por %p437, %p438
    %p440 = scmp.ne.s32.totalorder %s432, %s434
    %p441 = scmp.eq.s32.totalorder %s36, 1
    %p442 = por %p440, %p441
    %p443 = scmp.ne.s32.totalorder %s434, %s435
    %p444 = scmp.eq.s32.totalorder %s36, 0
    %p445 = por %p443, %p444
    %p446 = scmp.ne.s32.totalorder %s434, %s435
    %p447 = scmp.eq.s32.totalorder %s37, 1
    %p448 = por %p446, %p447
    %p450 = scmp.ne.s32.totalorder %s435, %s449
    %p451 = scmp.eq.s32.totalorder %s37, 0
    %p452 = por %p450, %p451
    %s454 = sadd.s32 %s453, 1
    %p457 = scmp.eq.s32.totalorder %s31, 1
    %p458 = scmp.ne.s32.totalorder %s453, %s455
    %p459 = scmp.eq.s32.totalorder %s31, 0
    %p460 = por %p458, %p459
    %p461 = scmp.ne.s32.totalorder %s453, %s455
    %p462 = scmp.eq.s32.totalorder %s36, 1
    %p463 = por %p461, %p462
    %p464 = scmp.ne.s32.totalorder %s455, %s456
    %p465 = scmp.eq.s32.totalorder %s36, 0
    %p466 = por %p464, %p465
    %p467 = scmp.ne.s32.totalorder %s455, %s456
    %p468 = scmp.eq.s32.totalorder %s37, 1
    %p469 = por %p467, %p468
    %p471 = scmp.ne.s32.totalorder %s456, %s470
    %p472 = scmp.eq.s32.totalorder %s37, 0
    %p473 = por %p471, %p472
    %s475 = sadd.s32 %s474, 1
    %p478 = scmp.eq.s32.totalorder %s31, 1
    %p479 = scmp.ne.s32.totalorder %s474, %s476
    %p480 = scmp.eq.s32.totalorder %s31, 0
    %p481 = por %p479, %p480
    %p482 = scmp.ne.s32.totalorder %s474, %s476
    %p483 = scmp.eq.s32.totalorder %s36, 1
    %p484 = por %p482, %p483
    %p485 = scmp.ne.s32.totalorder %s476, %s477
    %p486 = scmp.eq.s32.totalorder %s36, 0
    %p487 = por %p485, %p486
    %p488 = scmp.ne.s32.totalorder %s476, %s477
    %p489 = scmp.eq.s32.totalorder %s37, 1
    %p490 = por %p488, %p489
    %p492 = scmp.ne.s32.totalorder %s477, %s491
    %p493 = scmp.eq.s32.totalorder %s37, 0
    %p494 = por %p492, %p493
    %s496 = sadd.s32 %s495, 1
    %p499 = scmp.eq.s32.totalorder %s31, 1
    %p500 = scmp.ne.s32.totalorder %s495, %s497
    %p501 = scmp.eq.s32.totalorder %s31, 0
    %p502 = por %p500, %p501
    %p503 = scmp.ne.s32.totalorder %s495, %s497
    %p504 = scmp.eq.s32.totalorder %s36, 1
    %p505 = por %p503, %p504
    %p506 = scmp.ne.s32.totalorder %s497, %s498
    %p507 = scmp.eq.s32.totalorder %s36, 0
    %p508 = por %p506, %p507
    %p509 = scmp.ne.s32.totalorder %s497, %s498
    %p510 = scmp.eq.s32.totalorder %s37, 1
    %p511 = por %p509, %p510
    %p513 = scmp.ne.s32.totalorder %s498, %s512
    %p514 = scmp.eq.s32.totalorder %s37, 0
    %p515 = por %p513, %p514
    %s517 = sadd.s32 %s516, 1
    %p520 = scmp.eq.s32.totalorder %s31, 1
    %p521 = scmp.ne.s32.totalorder %s516, %s518
    %p522 = scmp.eq.s32.totalorder %s31, 0
    %p523 = por %p521, %p522
    %p524 = scmp.ne.s32.totalorder %s516, %s518
    %p525 = scmp.eq.s32.totalorder %s36, 1
    %p526 = por %p524, %p525
    %p527 = scmp.ne.s32.totalorder %s518, %s519
    %p528 = scmp.eq.s32.totalorder %s36, 0
    %p529 = por %p527, %p528
    %p530 = scmp.ne.s32.totalorder %s518, %s519
    %p531 = scmp.eq.s32.totalorder %s37, 1
    %p532 = por %p530, %p531
    %p534 = scmp.ne.s32.totalorder %s519, %s533
    %p535 = scmp.eq.s32.totalorder %s37, 0
    %p536 = por %p534, %p535
    %s538 = sadd.s32 %s537, 1
    %p541 = scmp.eq.s32.totalorder %s31, 1
    %p542 = scmp.ne.s32.totalorder %s537, %s539
    %p543 = scmp.eq.s32.totalorder %s31, 0
    %p544 = por %p542, %p543
    %p545 = scmp.ne.s32.totalorder %s537, %s539
    %p546 = scmp.eq.s32.totalorder %s36, 1
    %p547 = por %p545, %p546
    %p548 = scmp.ne.s32.totalorder %s539, %s540
    %p549 = scmp.eq.s32.totalorder %s36, 0
    %p550 = por %p548, %p549
    %p551 = scmp.ne.s32.totalorder %s539, %s540
    %p552 = scmp.eq.s32.totalorder %s37, 1
    %p553 = por %p551, %p552
    %p555 = scmp.ne.s32.totalorder %s540, %s554
    %p556 = scmp.eq.s32.totalorder %s37, 0
    %p557 = por %p555, %p556
    %s559 = sadd.s32 %s558, 1
    %p562 = scmp.eq.s32.totalorder %s31, 1
    %p563 = scmp.ne.s32.totalorder %s558, %s560
    %p564 = scmp.eq.s32.totalorder %s31, 0
    %p565 = por %p563, %p564
    %p566 = scmp.ne.s32.totalorder %s558, %s560
    %p567 = scmp.eq.s32.totalorder %s36, 1
    %p568 = por %p566, %p567
    %p569 = scmp.ne.s32.totalorder %s560, %s561
    %p570 = scmp.eq.s32.totalorder %s36, 0
    %p571 = por %p569, %p570
    %p572 = scmp.ne.s32.totalorder %s560, %s561
    %p573 = scmp.eq.s32.totalorder %s37, 1
    %p574 = por %p572, %p573
    %p576 = scmp.ne.s32.totalorder %s561, %s575
    %p577 = scmp.eq.s32.totalorder %s37, 0
    %p578 = por %p576, %p577
    %s579 = ssub.s32 %s31, %s38
    %p580 = scmp.eq.s32.totalorder %s579, 0
    %s582 = sadd.s32 %s581, 1
    %s583 = scalar_select %p580, %s581, %s582
    %p586 = pneg %p580
    %p587 = scmp.eq.s32.totalorder %s31, 1
    %p588 = por %p586, %p587
    %p589 = scmp.ne.s32.totalorder %s581, %s584
    %p590 = scmp.eq.s32.totalorder %s31, 0
    %p591 = por %p589, %p590
    %p592 = scmp.ne.s32.totalorder %s581, %s584
    %p593 = scmp.eq.s32.totalorder %s36, 1
    %p594 = por %p592, %p593
    %p595 = scmp.ne.s32.totalorder %s584, %s585
    %p596 = scmp.eq.s32.totalorder %s36, 0
    %p597 = por %p595, %p596
    %p598 = scmp.ne.s32.totalorder %s584, %s585
    %p599 = scmp.eq.s32.totalorder %s37, 1
    %p600 = por %p598, %p599
    %p602 = scmp.ne.s32.totalorder %s585, %s601
    %p603 = scmp.eq.s32.totalorder %s37, 0
    %p604 = por %p602, %p603
    %p605 = scmp.le.s32.totalorder 1, %s31
    %p606 = scmp.lt.s32.totalorder %s31, 3
    %p607 = pnand %p605, %p606
    %p608 = pneg %p607
    // Predicated region
    $region9: #{freqnet_forward.1} parent=5 // pred_check
      _
    $region10: #{freqnet_forward.1} parent=5 // pred_check_branch
      %610 = sbr.rel (%p607) target = $region12
    $region11: #{freqnet_forward.1} parent=5 // pred_region
      %s611 = ssub.s32 %s31, 1
      // Predicated region
      $region13: #{freqnet_forward.1} parent=11 // pred_check
        %p612 = pneg %p130
      $region14: #{freqnet_forward.1} parent=11 // pred_check_branch
        %614 = sbr.rel (%p612) target = $region16
      $region15: #{freqnet_forward.1} parent=11 // pred_region
        _
      $region16: #{freqnet_forward.1} parent=11 // pred_fallthru
        _
      // Predicated region
      $region17: #{freqnet_forward.1} parent=11 // pred_check
        %p615 = pneg %p151
      $region18: #{freqnet_forward.1} parent=11 // pred_check_branch
        %617 = sbr.rel (%p615) target = $region20
      $region19: #{freqnet_forward.1} parent=11 // pred_region
        _
      $region20: #{freqnet_forward.1} parent=11 // pred_fallthru
        _
      // Predicated region
      $region21: #{freqnet_forward.1} parent=11 // pred_check
        %p618 = pneg %p172
      $region22: #{freqnet_forward.1} parent=11 // pred_check_branch
        %620 = sbr.rel (%p618) target = $region24
      $region23: #{freqnet_forward.1} parent=11 // pred_region
        _
      $region24: #{freqnet_forward.1} parent=11 // pred_fallthru
        _
      // Predicated region
      $region25: #{freqnet_forward.1} parent=11 // pred_check
        %p621 = pneg %p193
      $region26: #{freqnet_forward.1} parent=11 // pred_check_branch
        %623 = sbr.rel (%p621) target = $region28
      $region27: #{freqnet_forward.1} parent=11 // pred_region
        _
      $region28: #{freqnet_forward.1} parent=11 // pred_fallthru
        _
      // Predicated region
      $region29: #{freqnet_forward.1} parent=11 // pred_check
        %p624 = pneg %p214
      $region30: #{freqnet_forward.1} parent=11 // pred_check_branch
        %626 = sbr.rel (%p624) target = $region32
      $region31: #{freqnet_forward.1} parent=11 // pred_region
        _
      $region32: #{freqnet_forward.1} parent=11 // pred_fallthru
        _
      // Predicated region
      $region33: #{freqnet_forward.1} parent=11 // pred_check
        %p627 = pneg %p235
      $region34: #{freqnet_forward.1} parent=11 // pred_check_branch
        %629 = sbr.rel (%p627) target = $region36
      $region35: #{freqnet_forward.1} parent=11 // pred_region
        _
      $region36: #{freqnet_forward.1} parent=11 // pred_fallthru
        _
      // Predicated region
      $region37: #{freqnet_forward.1} parent=11 // pred_check
        %p630 = pneg %p256
      $region38: #{freqnet_forward.1} parent=11 // pred_check_branch
        %632 = sbr.rel (%p630) target = $region40
      $region39: #{freqnet_forward.1} parent=11 // pred_region
        _
      $region40: #{freqnet_forward.1} parent=11 // pred_fallthru
        _
      // Predicated region
      $region41: #{freqnet_forward.1} parent=11 // pred_check
        %p633 = pneg %p277
      $region42: #{freqnet_forward.1} parent=11 // pred_check_branch
        %635 = sbr.rel (%p633) target = $region44
      $region43: #{freqnet_forward.1} parent=11 // pred_region
        _
      $region44: #{freqnet_forward.1} parent=11 // pred_fallthru
        _
      // Predicated region
      $region45: #{freqnet_forward.1} parent=11 // pred_check
        %p636 = pneg %p298
      $region46: #{freqnet_forward.1} parent=11 // pred_check_branch
        %638 = sbr.rel (%p636) target = $region48
      $region47: #{freqnet_forward.1} parent=11 // pred_region
        _
      $region48: #{freqnet_forward.1} parent=11 // pred_fallthru
        _
      // Predicated region
      $region49: #{freqnet_forward.1} parent=11 // pred_check
        %p639 = pneg %p319
      $region50: #{freqnet_forward.1} parent=11 // pred_check_branch
        %641 = sbr.rel (%p639) target = $region52
      $region51: #{freqnet_forward.1} parent=11 // pred_region
        _
      $region52: #{freqnet_forward.1} parent=11 // pred_fallthru
        _
      // Predicated region
      $region53: #{freqnet_forward.1} parent=11 // pred_check
        %p642 = pneg %p340
      $region54: #{freqnet_forward.1} parent=11 // pred_check_branch
        %644 = sbr.rel (%p642) target = $region56
      $region55: #{freqnet_forward.1} parent=11 // pred_region
        _
      $region56: #{freqnet_forward.1} parent=11 // pred_fallthru
        _
      // Predicated region
      $region57: #{freqnet_forward.1} parent=11 // pred_check
        %p645 = pneg %p361
      $region58: #{freqnet_forward.1} parent=11 // pred_check_branch
        %647 = sbr.rel (%p645) target = $region60
      $region59: #{freqnet_forward.1} parent=11 // pred_region
        _
      $region60: #{freqnet_forward.1} parent=11 // pred_fallthru
        _
      // Predicated region
      $region61: #{freqnet_forward.1} parent=11 // pred_check
        %p648 = pneg %p382
      $region62: #{freqnet_forward.1} parent=11 // pred_check_branch
        %650 = sbr.rel (%p648) target = $region64
      $region63: #{freqnet_forward.1} parent=11 // pred_region
        _
      $region64: #{freqnet_forward.1} parent=11 // pred_fallthru
        _
      // Predicated region
      $region65: #{freqnet_forward.1} parent=11 // pred_check
        %p651 = pneg %p403
      $region66: #{freqnet_forward.1} parent=11 // pred_check_branch
        %653 = sbr.rel (%p651) target = $region68
      $region67: #{freqnet_forward.1} parent=11 // pred_region
        _
      $region68: #{freqnet_forward.1} parent=11 // pred_fallthru
        _
      // Predicated region
      $region69: #{freqnet_forward.1} parent=11 // pred_check
        %p654 = pneg %p424
      $region70: #{freqnet_forward.1} parent=11 // pred_check_branch
        %656 = sbr.rel (%p654) target = $region72
      $region71: #{freqnet_forward.1} parent=11 // pred_region
        _
      $region72: #{freqnet_forward.1} parent=11 // pred_fallthru
        _
      // Predicated region
      $region73: #{freqnet_forward.1} parent=11 // pred_check
        %p657 = pneg %p445
      $region74: #{freqnet_forward.1} parent=11 // pred_check_branch
        %659 = sbr.rel (%p657) target = $region76
      $region75: #{freqnet_forward.1} parent=11 // pred_region
        _
      $region76: #{freqnet_forward.1} parent=11 // pred_fallthru
        _
      // Predicated region
      $region77: #{freqnet_forward.1} parent=11 // pred_check
        %p660 = pneg %p466
      $region78: #{freqnet_forward.1} parent=11 // pred_check_branch
        %662 = sbr.rel (%p660) target = $region80
      $region79: #{freqnet_forward.1} parent=11 // pred_region
        _
      $region80: #{freqnet_forward.1} parent=11 // pred_fallthru
        _
      // Predicated region
      $region81: #{freqnet_forward.1} parent=11 // pred_check
        %p663 = pneg %p487
      $region82: #{freqnet_forward.1} parent=11 // pred_check_branch
        %665 = sbr.rel (%p663) target = $region84
      $region83: #{freqnet_forward.1} parent=11 // pred_region
        _
      $region84: #{freqnet_forward.1} parent=11 // pred_fallthru
        _
      // Predicated region
      $region85: #{freqnet_forward.1} parent=11 // pred_check
        %p666 = pneg %p508
      $region86: #{freqnet_forward.1} parent=11 // pred_check_branch
        %668 = sbr.rel (%p666) target = $region88
      $region87: #{freqnet_forward.1} parent=11 // pred_region
        _
      $region88: #{freqnet_forward.1} parent=11 // pred_fallthru
        _
      // Predicated region
      $region89: #{freqnet_forward.1} parent=11 // pred_check
        %p669 = pneg %p529
      $region90: #{freqnet_forward.1} parent=11 // pred_check_branch
        %671 = sbr.rel (%p669) target = $region92
      $region91: #{freqnet_forward.1} parent=11 // pred_region
        _
      $region92: #{freqnet_forward.1} parent=11 // pred_fallthru
        _
      // Predicated region
      $region93: #{freqnet_forward.1} parent=11 // pred_check
        %p672 = pneg %p550
      $region94: #{freqnet_forward.1} parent=11 // pred_check_branch
        %674 = sbr.rel (%p672) target = $region96
      $region95: #{freqnet_forward.1} parent=11 // pred_region
        _
      $region96: #{freqnet_forward.1} parent=11 // pred_fallthru
        _
      // Predicated region
      $region97: #{freqnet_forward.1} parent=11 // pred_check
        %p675 = pneg %p571
      $region98: #{freqnet_forward.1} parent=11 // pred_check_branch
        %677 = sbr.rel (%p675) target = $region100
      $region99: #{freqnet_forward.1} parent=11 // pred_region
        _
      $region100: #{freqnet_forward.1} parent=11 // pred_fallthru
        _
    $region12: #{freqnet_forward.1} parent=5 // pred_fallthru
      _
    %p678 = scmp.lt.s32.totalorder %s31, 2
    // Predicated region
    $region101: #{freqnet_forward.1} parent=5 // pred_check
      %p679 = pneg %p678
    $region102: #{freqnet_forward.1} parent=5 // pred_check_branch
      %681 = sbr.rel (%p679) target = $region104
    $region103: #{freqnet_forward.1} parent=5 // pred_region
      // Predicated region
      $region105: #{freqnet_forward.1} parent=103 // pred_check
        %p682 = pneg %p51
      $region106: #{freqnet_forward.1} parent=103 // pred_check_branch
        %684 = sbr.rel (%p682) target = $region108
      $region107: #{freqnet_forward.1} parent=103 // pred_region
        %p685 = scmp.lt.s32.totalorder %s31, 1
        %s686 = scalar_select %p685, %s31, 1
        %s687 = smul.addr %s686, 4
        %s688 = scalar_lea.vmem %s0, %s687
      $region108: #{freqnet_forward.1} parent=103 // pred_fallthru
        _
      // Predicated region
      $region109: #{freqnet_forward.1} parent=103 // pred_check
        %p689 = pneg %p77
      $region110: #{freqnet_forward.1} parent=103 // pred_check_branch
        %691 = sbr.rel (%p689) target = $region112
      $region111: #{freqnet_forward.1} parent=103 // pred_region
        %p692 = scmp.lt.s32.totalorder %s31, 1
        %s693 = scalar_select %p692, %s31, 1
        %s694 = smul.addr %s693, 4
        %s695 = scalar_lea.vmem %s1, %s694
      $region112: #{freqnet_forward.1} parent=103 // pred_fallthru
        _
      // Predicated region
      $region113: #{freqnet_forward.1} parent=103 // pred_check
        %p696 = pneg %p103
      $region114: #{freqnet_forward.1} parent=103 // pred_check_branch
        %698 = sbr.rel (%p696) target = $region116
      $region115: #{freqnet_forward.1} parent=103 // pred_region
        %p699 = scmp.lt.s32.totalorder %s31, 1
        %s700 = scalar_select %p699, %s31, 1
        %s701 = smul.addr %s700, 4
        %s702 = scalar_lea.vmem %s2, %s701
      $region116: #{freqnet_forward.1} parent=103 // pred_fallthru
        _
    $region104: #{freqnet_forward.1} parent=5 // pred_fallthru
      _
    %p703 = scmp.le.s32.totalorder 1, %s31
    %p704 = scmp.lt.s32.totalorder %s31, 3
    %p705 = pnand %p703, %p704
    %p706 = pneg %p705
    // Predicated region
    $region117: #{freqnet_forward.1} parent=5 // pred_check
      _
    $region118: #{freqnet_forward.1} parent=5 // pred_check_branch
      %708 = sbr.rel (%p705) target = $region120
    $region119: #{freqnet_forward.1} parent=5 // pred_region
      %s709 = ssub.s32 %s31, 1
      %p710 = scmp.lt.s32.totalorder %s36, 1
      %s711 = scalar_select %p710, %s36, 1
      %s712 = smul.addr %s711, 4
      %s713 = scalar_lea.vmem %s0, %s712
      %p714 = pneg %p57
      %p715 = pneg %p54
      %p716 = scmp.lt.s32.totalorder %s36, 1
      %s717 = scalar_select %p716, %s36, 1
      %s718 = smul.addr %s717, 4
      %s719 = scalar_lea.vmem %s1, %s718
      %p720 = pneg %p83
      %p721 = pneg %p80
      %p722 = scmp.lt.s32.totalorder %s36, 1
      %s723 = scalar_select %p722, %s36, 1
      %s724 = smul.addr %s723, 4
      %s725 = scalar_lea.vmem %s2, %s724
      %p726 = pneg %p109
      %p727 = pneg %p106
      %p728 = pneg %p130
      %p729 = pneg %p127
      %p730 = pneg %p151
      %p731 = pneg %p148
      %p732 = pneg %p172
      %p733 = pneg %p169
      %p734 = pneg %p193
      %p735 = pneg %p190
      %p736 = pneg %p214
      %p737 = pneg %p211
      %p738 = pneg %p235
      %p739 = pneg %p232
      %p740 = pneg %p256
      %p741 = pneg %p253
      %p742 = pneg %p277
      %p743 = pneg %p274
      %p744 = pneg %p298
      %p745 = pneg %p295
      %p746 = pneg %p319
      %p747 = pneg %p316
      %p748 = pneg %p340
      %p749 = pneg %p337
      %p750 = pneg %p361
      %p751 = pneg %p358
      %p752 = pneg %p382
      %p753 = pneg %p379
      %p754 = pneg %p403
      %p755 = pneg %p400
      %p756 = pneg %p424
      %p757 = pneg %p421
      %p758 = pneg %p445
      %p759 = pneg %p442
      %p760 = pneg %p466
      %p761 = pneg %p463
      %p762 = pneg %p487
      %p763 = pneg %p484
      %p764 = pneg %p508
      %p765 = pneg %p505
      %p766 = pneg %p529
      %p767 = pneg %p526
      %p768 = pneg %p550
      %p769 = pneg %p547
      %p770 = pneg %p571
      %p771 = pneg %p568
      %p772 = pneg %p597
      %p773 = pneg %p594
      %p774 = scmp.lt.s32.totalorder %s36, 1
      %s775 = scalar_select %p774, %s36, 1
      %s776 = smul.addr %s775, 2
      %s777 = smul.addr %s776, 8
      %s778 = scalar_lea.vmem %s25, %s777
      %p779 = scmp.lt.s32.totalorder %s36, 1
      %s780 = scalar_select %p779, %s36, 1
      %s781 = smul.addr %s780, 4
      %s782 = scalar_lea.vmem %s0, %s781
      %p783 = scmp.lt.s32.totalorder %s36, 1
      %s784 = scalar_select %p783, %s36, 1
      %s785 = smul.addr %s784, 4
      %s786 = scalar_lea.vmem %s1, %s785
      %p787 = scmp.lt.s32.totalorder %s36, 1
      %s788 = scalar_select %p787, %s36, 1
      %s789 = smul.addr %s788, 4
      %s790 = scalar_lea.vmem %s2, %s789
      %p791 = scmp.lt.s32.totalorder %s36, 1
      %s792 = scalar_select %p791, %s36, 1
      %s793 = smul.addr %s792, 2
      %s794 = smul.addr %s793, 8
      %s795 = scalar_lea.vmem %s25, %s794
      %v797 = vlaneseq
      %v798 = vand.u32 %v797, 127
      %vm799 = vcmp.gt.s32.totalorder %v798, 0
      %v800 = vsel %vm799, 1, 0
      %v801 = vcvt.s32.f32 %v800
      %vm802 = vcmp.lt.s32.totalorder %v798, 127
      %v803 = vsel %vm802, 1, 0
      %v804 = vcvt.s32.f32 %v803
      %v805 = vld [vmem:[%s3] sm:$0xf]
      %v806 = vld [vmem:[%s3 + $0x4] sm:$0xf]
      %v807 = vld [vmem:[%s3 + $0x8] sm:$0xf]
      %v808 = vld [vmem:[%s3 + $0xc] sm:$0xf]
      %v809 = vld [vmem:[%s3 + $0x10] sm:$0xf]
      %v810 = vld [vmem:[%s3 + $0x14] sm:$0xf]
      %v811 = vld [vmem:[%s3 + $0x18] sm:$0xf]
      %v812 = vld [vmem:[%s3 + $0x1c] sm:$0xf]
      %v813 = vld [vmem:[%s782] sm:$0xf]
      %v822 = vunpack.c.l.b16 %v805
      %v823 = vunpack.c.l.b16 %v806
      %v824 = vunpack.c.l.b16 %v807
      %v825 = vunpack.c.l.b16 %v808
      %v826 = vunpack.c.l.b16 %v809
      %v827 = vunpack.c.l.b16 %v810
      %v828 = vunpack.c.l.b16 %v811
      %v829 = vunpack.c.l.b16 %v812
      %v830 = vpack.c.b16 %v823, %v822
      %v831 = vpack.c.b16 %v825, %v824
      %v832 = vpack.c.b16 %v827, %v826
      %v833 = vpack.c.b16 %v829, %v828
      %vm834 = vcmask 64512
      %v836 = vsel %vm834, %v830, 0
      %v839 = vsel %vm834, %v831, 0
      %v842 = vsel %vm834, %v832, 0
      %v845 = vsel %vm834, %v833, 0
      %vm847 = vcmask 1043456
      %v849 = vsel %vm847, %v813, 0
      %851 = vmatprep.subr.bf16.mxu0 0
      %852 = vmatpush1.bf16.msra.mxu0 %v849
      %853 = vmatprep.subr.bf16.mxu0 0
      %854 = vmatpush1.bf16.msra.mxu0 0
      %855 = vmatprep.subr.bf16.mxu0 0
      %856 = vmatpush1.bf16.msra.mxu0 0
      %857 = vmatprep.subr.bf16.mxu0 0
      %858 = vmatpush1.bf16.msra.mxu0 0
      %859 = vmatprep.subr.bf16.mxu0 0
      %860 = vmatpush1.bf16.msra.mxu0 0
      %861 = vmatprep.subr.bf16.mxu0 0
      %862 = vmatpush1.bf16.msra.mxu0 0
      %863 = vmatprep.subr.bf16.mxu0 0
      %864 = vmatpush1.bf16.msra.mxu0 0
      %865 = vmatprep.subr.bf16.mxu0 0
      %866 = vmatpush1.bf16.msra.mxu0 0
      %867 = vmatprep.subr.bf16.mxu0 0
      %868 = vmatpush1.bf16.msra.mxu0 0
      %869 = vmatprep.subr.bf16.mxu0 0
      %870 = vmatpush1.bf16.msra.mxu0 0
      %871 = vmatprep.subr.bf16.mxu0 0
      %872 = vmatpush1.bf16.msra.mxu0 0
      %873 = vmatprep.subr.bf16.mxu0 0
      %874 = vmatpush1.bf16.msra.mxu0 0
      %875 = vmatprep.subr.bf16.mxu0 0
      %876 = vmatpush1.bf16.msra.mxu0 0
      %877 = vmatprep.subr.bf16.mxu0 0
      %878 = vmatpush1.bf16.msra.mxu0 0
      %879 = vmatprep.subr.bf16.mxu0 0
      %880 = vmatpush1.bf16.msra.mxu0 0
      %881 = vmatprep.subr.bf16.mxu0 0
      %882 = vmatpush1.bf16.msra.mxu0 0
      %883 = vmatprep.mubr.bf16.mxu0 0
      %884 = vmatmul.mubr.bf16.gmra.mrb[0].mxu0 %v836
      %v885 = vpop.f32.mrb[0].mxu0
      %v886 = vadd.f32 0.0, %v885
      %v887 = vpop.f32.mrb[0].mxu0
      %v888 = vpop.f32.mrb[0].mxu0
      %v889 = vadd.f32 0.0, %v888
      %v890 = vpop.f32.mrb[0].mxu0
      %891 = vmatprep.mubr.bf16.mxu0 0
      %892 = vmatmul.mubr.bf16.gmra.mrb[0].mxu0 %v839
      %v893 = vpop.f32.mrb[0].mxu0
      %v894 = vadd.f32 0.0, %v893
      %v895 = vpop.f32.mrb[0].mxu0
      %v896 = vpop.f32.mrb[0].mxu0
      %v897 = vadd.f32 0.0, %v896
      %v898 = vpop.f32.mrb[0].mxu0
      %899 = vmatprep.mubr.bf16.mxu0 0
      %900 = vmatmul.mubr.bf16.gmra.mrb[0].mxu0 %v842
      %v901 = vpop.f32.mrb[0].mxu0
      %v902 = vadd.f32 0.0, %v901
      %v903 = vpop.f32.mrb[0].mxu0
      %v904 = vpop.f32.mrb[0].mxu0
      %v905 = vadd.f32 0.0, %v904
      %v906 = vpop.f32.mrb[0].mxu0
      %907 = vmatprep.mubr.bf16.mxu0 0
      %908 = vmatmul.mubr.bf16.gmra.mrb[0].mxu0 %v845
      %v909 = vpop.f32.mrb[0].mxu0
      %v910 = vadd.f32 0.0, %v909
      %v911 = vpop.f32.mrb[0].mxu0
      %v912 = vpop.f32.mrb[0].mxu0
      %v913 = vadd.f32 0.0, %v912
      %v914 = vpop.f32.mrb[0].mxu0
      %915 = vdwg.mxu0
      %v916 = vld [vmem:[%s4] sm:$0xff]
      %v917 = vld [vmem:[%s4 + $0x8] sm:$0xff]
      %v918 = vld [vmem:[%s4 + $0x10] sm:$0xff]
      %v919 = vld [vmem:[%s4 + $0x18] sm:$0xff]
      %v920 = vld [vmem:[%s4 + $0x20] sm:$0xff]
      %v921 = vld [vmem:[%s4 + $0x28] sm:$0xff]
      %v922 = vld [vmem:[%s4 + $0x30] sm:$0xff]
      %v923 = vld [vmem:[%s4 + $0x38] sm:$0xff]
      %925 = vset.pattern.permute.xlu0 0
      %926 = vperm.xlu0 %925, %v916
      %v927 = vpop.permute.xlu0 %926
      %930 = vset.pattern.permute.xlu0 0
      %931 = vperm.xlu0 %930, %v917
      %v932 = vpop.permute.xlu0 %931
      %935 = vset.pattern.permute.xlu0 0
      %936 = vperm.xlu0 %935, %v918
      %v937 = vpop.permute.xlu0 %936
      %940 = vset.pattern.permute.xlu0 0
      %941 = vperm.xlu0 %940, %v919
      %v942 = vpop.permute.xlu0 %941
      %945 = vset.pattern.permute.xlu0 0
      %946 = vperm.xlu0 %945, %v920
      %v947 = vpop.permute.xlu0 %946
      %950 = vset.pattern.permute.xlu0 0
      %951 = vperm.xlu0 %950, %v921
      %v952 = vpop.permute.xlu0 %951
      %955 = vset.pattern.permute.xlu0 0
      %956 = vperm.xlu0 %955, %v922
      %v957 = vpop.permute.xlu0 %956
      %960 = vset.pattern.permute.xlu0 0
      %961 = vperm.xlu0 %960, %v923
      %v962 = vpop.permute.xlu0 %961
      %v964 = vmul.f32 %v927, %v886
      %v965 = vmul.f32 %v932, %v889
      %v966 = vmul.f32 %v937, %v894
      %v967 = vmul.f32 %v942, %v897
      %v968 = vmul.f32 %v947, %v902
      %v969 = vmul.f32 %v952, %v905
      %v970 = vmul.f32 %v957, %v910
      %v971 = vmul.f32 %v962, %v913
      %v972 = vld [vmem:[%s5] sm:$0xff]
      %v973 = vld [vmem:[%s5 + $0x8] sm:$0xff]
      %v974 = vld [vmem:[%s5 + $0x10] sm:$0xff]
      %v975 = vld [vmem:[%s5 + $0x18] sm:$0xff]
      %v976 = vld [vmem:[%s5 + $0x20] sm:$0xff]
      %v977 = vld [vmem:[%s5 + $0x28] sm:$0xff]
      %v978 = vld [vmem:[%s5 + $0x30] sm:$0xff]
      %v979 = vld [vmem:[%s5 + $0x38] sm:$0xff]
      %981 = vset.pattern.permute.xlu0 0
      %982 = vperm.xlu0 %981, %v972
      %v983 = vpop.permute.xlu0 %982
      %986 = vset.pattern.permute.xlu0 0
      %987 = vperm.xlu0 %986, %v973
      %v988 = vpop.permute.xlu0 %987
      %991 = vset.pattern.permute.xlu0 0
      %992 = vperm.xlu0 %991, %v974
      %v993 = vpop.permute.xlu0 %992
      %996 = vset.pattern.permute.xlu0 0
      %997 = vperm.xlu0 %996, %v975
      %v998 = vpop.permute.xlu0 %997
      %1001 = vset.pattern.permute.xlu0 0
      %1002 = vperm.xlu0 %1001, %v976
      %v1003 = vpop.permute.xlu0 %1002
      %1006 = vset.pattern.permute.xlu0 0
      %1007 = vperm.xlu0 %1006, %v977
      %v1008 = vpop.permute.xlu0 %1007
      %1011 = vset.pattern.permute.xlu0 0
      %1012 = vperm.xlu0 %1011, %v978
      %v1013 = vpop.permute.xlu0 %1012
      %1016 = vset.pattern.permute.xlu0 0
      %1017 = vperm.xlu0 %1016, %v979
      %v1018 = vpop.permute.xlu0 %1017
      %v1020 = vadd.f32 %v964, %v983
      %v1021 = vadd.f32 %v965, %v988
      %v1022 = vadd.f32 %v966, %v993
      %v1023 = vadd.f32 %v967, %v998
      %v1024 = vadd.f32 %v968, %v1003
      %v1025 = vadd.f32 %v969, %v1008
      %v1026 = vadd.f32 %v970, %v1013
      %v1027 = vadd.f32 %v971, %v1018
      %v1028 = vmax.f32 %v1020, 0.0
      %v1029 = vmax.f32 %v1021, 0.0
      %v1030 = vmax.f32 %v1022, 0.0
      %v1031 = vmax.f32 %v1023, 0.0
      %v1032 = vmax.f32 %v1024, 0.0
      %v1033 = vmax.f32 %v1025, 0.0
      %v1034 = vmax.f32 %v1026, 0.0
      %v1035 = vmax.f32 %v1027, 0.0
      %v1036 = vld [vmem:[%s786] sm:$0xf]
      %v1038 = vsel %vm847, %v1036, 0
      %1040 = vmatprep.subr.bf16.mxu0 0
      %1041 = vmatpush1.bf16.msra.mxu0 %v1038
      %1042 = vmatprep.subr.bf16.mxu0 0
      %1043 = vmatpush1.bf16.msra.mxu0 0
      %1044 = vmatprep.subr.bf16.mxu0 0
      %1045 = vmatpush1.bf16.msra.mxu0 0
      %1046 = vmatprep.subr.bf16.mxu0 0
      %1047 = vmatpush1.bf16.msra.mxu0 0
      %1048 = vmatprep.subr.bf16.mxu0 0
      %1049 = vmatpush1.bf16.msra.mxu0 0
      %1050 = vmatprep.subr.bf16.mxu0 0
      %1051 = vmatpush1.bf16.msra.mxu0 0
      %1052 = vmatprep.subr.bf16.mxu0 0
      %1053 = vmatpush1.bf16.msra.mxu0 0
      %1054 = vmatprep.subr.bf16.mxu0 0
      %1055 = vmatpush1.bf16.msra.mxu0 0
      %1056 = vmatprep.subr.bf16.mxu0 0
      %1057 = vmatpush1.bf16.msra.mxu0 0
      %1058 = vmatprep.subr.bf16.mxu0 0
      %1059 = vmatpush1.bf16.msra.mxu0 0
      %1060 = vmatprep.subr.bf16.mxu0 0
      %1061 = vmatpush1.bf16.msra.mxu0 0
      %1062 = vmatprep.subr.bf16.mxu0 0
      %1063 = vmatpush1.bf16.msra.mxu0 0
      %1064 = vmatprep.subr.bf16.mxu0 0
      %1065 = vmatpush1.bf16.msra.mxu0 0
      %1066 = vmatprep.subr.bf16.mxu0 0
      %1067 = vmatpush1.bf16.msra.mxu0 0
      %1068 = vmatprep.subr.bf16.mxu0 0
      %1069 = vmatpush1.bf16.msra.mxu0 0
      %1070 = vmatprep.subr.bf16.mxu0 0
      %1071 = vmatpush1.bf16.msra.mxu0 0
      %1072 = vmatprep.mubr.bf16.mxu0 0
      %1073 = vmatmul.mubr.bf16.gmra.mrb[0].mxu0 %v836
      %v1074 = vpop.f32.mrb[0].mxu0
      %v1075 = vadd.f32 0.0, %v1074
      %v1076 = vpop.f32.mrb[0].mxu0
      %v1077 = vpop.f32.mrb[0].mxu0
      %v1078 = vadd.f32 0.0, %v1077
      %v1079 = vpop.f32.mrb[0].mxu0
      %1080 = vmatprep.mubr.bf16.mxu0 0
      %1081 = vmatmul.mubr.bf16.gmra.mrb[0].mxu0 %v839
      %v1082 = vpop.f32.mrb[0].mxu0
      %v1083 = vadd.f32 0.0, %v1082
      %v1084 = vpop.f32.mrb[0].mxu0
      %v1085 = vpop.f32.mrb[0].mxu0
      %v1086 = vadd.f32 0.0, %v1085
      %v1087 = vpop.f32.mrb[0].mxu0
      %1088 = vmatprep.mubr.bf16.mxu0 0
      %1089 = vmatmul.mubr.bf16.gmra.mrb[0].mxu0 %v842
      %v1090 = vpop.f32.mrb[0].mxu0
      %v1091 = vadd.f32 0.0, %v1090
      %v1092 = vpop.f32.mrb[0].mxu0
      %v1093 = vpop.f32.mrb[0].mxu0
      %v1094 = vadd.f32 0.0, %v1093
      %v1095 = vpop.f32.mrb[0].mxu0
      %1096 = vmatprep.mubr.bf16.mxu0 0
      %1097 = vmatmul.mubr.bf16.gmra.mrb[0].mxu0 %v845
      %v1098 = vpop.f32.mrb[0].mxu0
      %v1099 = vadd.f32 0.0, %v1098
      %v1100 = vpop.f32.mrb[0].mxu0
      %v1101 = vpop.f32.mrb[0].mxu0
      %v1102 = vadd.f32 0.0, %v1101
      %v1103 = vpop.f32.mrb[0].mxu0
      %1104 = vdwg.mxu0
      %v1105 = vmul.f32 %v927, %v1075
      %v1106 = vmul.f32 %v932, %v1078
      %v1107 = vmul.f32 %v937, %v1083
      %v1108 = vmul.f32 %v942, %v1086
      %v1109 = vmul.f32 %v947, %v1091
      %v1110 = vmul.f32 %v952, %v1094
      %v1111 = vmul.f32 %v957, %v1099
      %v1112 = vmul.f32 %v962, %v1102
      %v1113 = vadd.f32 %v1105, %v983
      %v1114 = vadd.f32 %v1106, %v988
      %v1115 = vadd.f32 %v1107, %v993
      %v1116 = vadd.f32 %v1108, %v998
      %v1117 = vadd.f32 %v1109, %v1003
      %v1118 = vadd.f32 %v1110, %v1008
      %v1119 = vadd.f32 %v1111, %v1013
      %v1120 = vadd.f32 %v1112, %v1018
      %v1121 = vmax.f32 %v1113, 0.0
      %v1122 = vmax.f32 %v1114, 0.0
      %v1123 = vmax.f32 %v1115, 0.0
      %v1124 = vmax.f32 %v1116, 0.0
      %v1125 = vmax.f32 %v1117, 0.0
      %v1126 = vmax.f32 %v1118, 0.0
      %v1127 = vmax.f32 %v1119, 0.0
      %v1128 = vmax.f32 %v1120, 0.0
      %v1129 = vld [vmem:[%s790] sm:$0xf]
      %v1131 = vsel %vm847, %v1129, 0
      %1133 = vmatprep.subr.bf16.mxu0 0
      %1134 = vmatpush1.bf16.msra.mxu0 %v1131
      %1135 = vmatprep.subr.bf16.mxu0 0
      %1136 = vmatpush1.bf16.msra.mxu0 0
      %1137 = vmatprep.subr.bf16.mxu0 0
      %1138 = vmatpush1.bf16.msra.mxu0 0
      %1139 = vmatprep.subr.bf16.mxu0 0
      %1140 = vmatpush1.bf16.msra.mxu0 0
      %1141 = vmatprep.subr.bf16.mxu0 0
      %1142 = vmatpush1.bf16.msra.mxu0 0
      %1143 = vmatprep.subr.bf16.mxu0 0
      %1144 = vmatpush1.bf16.msra.mxu0 0
      %1145 = vmatprep.subr.bf16.mxu0 0
      %1146 = vmatpush1.bf16.msra.mxu0 0
      %1147 = vmatprep.subr.bf16.mxu0 0
      %1148 = vmatpush1.bf16.msra.mxu0 0
      %1149 = vmatprep.subr.bf16.mxu0 0
      %1150 = vmatpush1.bf16.msra.mxu0 0
      %1151 = vmatprep.subr.bf16.mxu0 0
      %1152 = vmatpush1.bf16.msra.mxu0 0
      %1153 = vmatprep.subr.bf16.mxu0 0
      %1154 = vmatpush1.bf16.msra.mxu0 0
      %1155 = vmatprep.subr.bf16.mxu0 0
      %1156 = vmatpush1.bf16.msra.mxu0 0
      %1157 = vmatprep.subr.bf16.mxu0 0
      %1158 = vmatpush1.bf16.msra.mxu0 0
      %1159 = vmatprep.subr.bf16.mxu0 0
      %1160 = vmatpush1.bf16.msra.mxu0 0
      %1161 = vmatprep.subr.bf16.mxu0 0
      %1162 = vmatpush1.bf16.msra.mxu0 0
      %1163 = vmatprep.subr.bf16.mxu0 0
      %1164 = vmatpush1.bf16.msra.mxu0 0
      %1165 = vmatprep.mubr.bf16.mxu0 0
      %1166 = vmatmul.mubr.bf16.gmra.mrb[0].mxu0 %v836
      %v1167 = vpop.f32.mrb[0].mxu0
      %v1168 = vadd.f32 0.0, %v1167
      %v1169 = vpop.f32.mrb[0].mxu0
      %v1170 = vpop.f32.mrb[0].mxu0
      %v1171 = vadd.f32 0.0, %v1170
      %v1172 = vpop.f32.mrb[0].mxu0
      %1173 = vmatprep.mubr.bf16.mxu0 0
      %1174 = vmatmul.mubr.bf16.gmra.mrb[0].mxu0 %v839
      %v1175 = vpop.f32.mrb[0].mxu0
      %v1176 = vadd.f32 0.0, %v1175
      %v1177 = vpop.f32.mrb[0].mxu0
      %v1178 = vpop.f32.mrb[0].mxu0
      %v1179 = vadd.f32 0.0, %v1178
      %v1180 = vpop.f32.mrb[0].mxu0
      %1181 = vmatprep.mubr.bf16.mxu0 0
      %1182 = vmatmul.mubr.bf16.gmra.mrb[0].mxu0 %v842
      %v1183 = vpop.f32.mrb[0].mxu0
      %v1184 = vadd.f32 0.0, %v1183
      %v1185 = vpop.f32.mrb[0].mxu0
      %v1186 = vpop.f32.mrb[0].mxu0
      %v1187 = vadd.f32 0.0, %v1186
      %v1188 = vpop.f32.mrb[0].mxu0
      %1189 = vmatprep.mubr.bf16.mxu0 0
      %1190 = vmatmul.mubr.bf16.gmra.mrb[0].mxu0 %v845
      %v1191 = vpop.f32.mrb[0].mxu0
      %v1192 = vadd.f32 0.0, %v1191
      %v1193 = vpop.f32.mrb[0].mxu0
      %v1194 = vpop.f32.mrb[0].mxu0
      %v1195 = vadd.f32 0.0, %v1194
      %v1196 = vpop.f32.mrb[0].mxu0
      %1197 = vdwg.mxu0
      %v1198 = vmul.f32 %v927, %v1168
      %v1199 = vmul.f32 %v932, %v1171
      %v1200 = vmul.f32 %v937, %v1176
      %v1201 = vmul.f32 %v942, %v1179
      %v1202 = vmul.f32 %v947, %v1184
      %v1203 = vmul.f32 %v952, %v1187
      %v1204 = vmul.f32 %v957, %v1192
      %v1205 = vmul.f32 %v962, %v1195
      %v1206 = vadd.f32 %v1198, %v983
      %v1207 = vadd.f32 %v1199, %v988
      %v1208 = vadd.f32 %v1200, %v993
      %v1209 = vadd.f32 %v1201, %v998
      %v1210 = vadd.f32 %v1202, %v1003
      %v1211 = vadd.f32 %v1203, %v1008
      %v1212 = vadd.f32 %v1204, %v1013
      %v1213 = vadd.f32 %v1205, %v1018
      %v1214 = vmax.f32 %v1206, 0.0
      %v1215 = vmax.f32 %v1207, 0.0
      %v1216 = vmax.f32 %v1208, 0.0
      %v1217 = vmax.f32 %v1209, 0.0
      %v1218 = vmax.f32 %v1210, 0.0
      %v1219 = vmax.f32 %v1211, 0.0
      %v1220 = vmax.f32 %v1212, 0.0
      %v1221 = vmax.f32 %v1213, 0.0
      %1222 = vrot.lane.b32.xlu0 %v1121, 1
      %v1223 = vpop.permute.xlu0 %1222
      %1224 = vrot.lane.b32.xlu0 %v1122, 1
      %v1225 = vpop.permute.xlu0 %1224
      %1226 = vrot.lane.b32.xlu0 %v1123, 1
      %v1227 = vpop.permute.xlu0 %1226
      %1228 = vrot.lane.b32.xlu0 %v1124, 1
      %v1229 = vpop.permute.xlu0 %1228
      %1230 = vrot.lane.b32.xlu0 %v1125, 1
      %v1231 = vpop.permute.xlu0 %1230
      %1232 = vrot.lane.b32.xlu0 %v1126, 1
      %v1233 = vpop.permute.xlu0 %1232
      %1234 = vrot.lane.b32.xlu0 %v1127, 1
      %v1235 = vpop.permute.xlu0 %1234
      %1236 = vrot.lane.b32.xlu0 %v1128, 1
      %v1237 = vpop.permute.xlu0 %1236
      %v1238 = vmul.f32 %v1223, %v801
      %v1239 = vmul.f32 %v1225, %v801
      %v1240 = vmul.f32 %v1227, %v801
      %v1241 = vmul.f32 %v1229, %v801
      %v1242 = vmul.f32 %v1231, %v801
      %v1243 = vmul.f32 %v1233, %v801
      %v1244 = vmul.f32 %v1235, %v801
      %v1245 = vmul.f32 %v1237, %v801
      %1246 = vrot.lane.b32.xlu0 %v1121, 127
      %v1247 = vpop.permute.xlu0 %1246
      %1248 = vrot.lane.b32.xlu0 %v1122, 127
      %v1249 = vpop.permute.xlu0 %1248
      %1250 = vrot.lane.b32.xlu0 %v1123, 127
      %v1251 = vpop.permute.xlu0 %1250
      %1252 = vrot.lane.b32.xlu0 %v1124, 127
      %v1253 = vpop.permute.xlu0 %1252
      %1254 = vrot.lane.b32.xlu0 %v1125, 127
      %v1255 = vpop.permute.xlu0 %1254
      %1256 = vrot.lane.b32.xlu0 %v1126, 127
      %v1257 = vpop.permute.xlu0 %1256
      %1258 = vrot.lane.b32.xlu0 %v1127, 127
      %v1259 = vpop.permute.xlu0 %1258
      %1260 = vrot.lane.b32.xlu0 %v1128, 127
      %v1261 = vpop.permute.xlu0 %1260
      %v1262 = vmul.f32 %v1247, %v804
      %v1263 = vmul.f32 %v1249, %v804
      %v1264 = vmul.f32 %v1251, %v804
      %v1265 = vmul.f32 %v1253, %v804
      %v1266 = vmul.f32 %v1255, %v804
      %v1267 = vmul.f32 %v1257, %v804
      %v1268 = vmul.f32 %v1259, %v804
      %v1269 = vmul.f32 %v1261, %v804
      %v1270 = vmax.f32 %v1028, %v1214
      %v1271 = vmax.f32 %v1029, %v1215
      %v1272 = vmax.f32 %v1030, %v1216
      %v1273 = vmax.f32 %v1031, %v1217
      %v1274 = vmax.f32 %v1032, %v1218
      %v1275 = vmax.f32 %v1033, %v1219
      %v1276 = vmax.f32 %v1034, %v1220
      %v1277 = vmax.f32 %v1035, %v1221
      %v1278 = vmax.f32 %v1238, %v1262
      %v1279 = vmax.f32 %v1239, %v1263
      %v1280 = vmax.f32 %v1240, %v1264
      %v1281 = vmax.f32 %v1241, %v1265
      %v1282 = vmax.f32 %v1242, %v1266
      %v1283 = vmax.f32 %v1243, %v1267
      %v1284 = vmax.f32 %v1244, %v1268
      %v1285 = vmax.f32 %v1245, %v1269
      %v1286 = vmax.f32 %v1121, %v1278
      %v1287 = vmax.f32 %v1122, %v1279
      %v1288 = vmax.f32 %v1123, %v1280
      %v1289 = vmax.f32 %v1124, %v1281
      %v1290 = vmax.f32 %v1125, %v1282
      %v1291 = vmax.f32 %v1126, %v1283
      %v1292 = vmax.f32 %v1127, %v1284
      %v1293 = vmax.f32 %v1128, %v1285
      %v1294 = vmax.f32 %v1270, %v1286
      %v1295 = vmax.f32 %v1271, %v1287
      %v1296 = vmax.f32 %v1272, %v1288
      %v1297 = vmax.f32 %v1273, %v1289
      %v1298 = vmax.f32 %v1274, %v1290
      %v1299 = vmax.f32 %v1275, %v1291
      %v1300 = vmax.f32 %v1276, %v1292
      %v1301 = vmax.f32 %v1277, %v1293
      %1302 = vrot.lane.b32.xlu0 %v1294, 1
      %v1303 = vpop.permute.xlu0 %1302
      %1304 = vrot.lane.b32.xlu0 %v1295, 1
      %v1305 = vpop.permute.xlu0 %1304
      %1306 = vrot.lane.b32.xlu0 %v1296, 1
      %v1307 = vpop.permute.xlu0 %1306
      %1308 = vrot.lane.b32.xlu0 %v1297, 1
      %v1309 = vpop.permute.xlu0 %1308
      %1310 = vrot.lane.b32.xlu0 %v1298, 1
      %v1311 = vpop.permute.xlu0 %1310
      %1312 = vrot.lane.b32.xlu0 %v1299, 1
      %v1313 = vpop.permute.xlu0 %1312
      %1314 = vrot.lane.b32.xlu0 %v1300, 1
      %v1315 = vpop.permute.xlu0 %1314
      %1316 = vrot.lane.b32.xlu0 %v1301, 1
      %v1317 = vpop.permute.xlu0 %1316
      %v1318 = vmul.f32 %v1303, %v801
      %v1319 = vmul.f32 %v1305, %v801
      %v1320 = vmul.f32 %v1307, %v801
      %v1321 = vmul.f32 %v1309, %v801
      %v1322 = vmul.f32 %v1311, %v801
      %v1323 = vmul.f32 %v1313, %v801
      %v1324 = vmul.f32 %v1315, %v801
      %v1325 = vmul.f32 %v1317, %v801
      %1326 = vrot.lane.b32.xlu0 %v1294, 127
      %v1327 = vpop.permute.xlu0 %1326
      %1328 = vrot.lane.b32.xlu0 %v1295, 127
      %v1329 = vpop.permute.xlu0 %1328
      %1330 = vrot.lane.b32.xlu0 %v1296, 127
      %v1331 = vpop.permute.xlu0 %1330
      %1332 = vrot.lane.b32.xlu0 %v1297, 127
      %v1333 = vpop.permute.xlu0 %1332
      %1334 = vrot.lane.b32.xlu0 %v1298, 127
      %v1335 = vpop.permute.xlu0 %1334
      %1336 = vrot.lane.b32.xlu0 %v1299, 127
      %v1337 = vpop.permute.xlu0 %1336
      %1338 = vrot.lane.b32.xlu0 %v1300, 127
      %v1339 = vpop.permute.xlu0 %1338
      %1340 = vrot.lane.b32.xlu0 %v1301, 127
      %v1341 = vpop.permute.xlu0 %1340
      %v1342 = vmul.f32 %v1327, %v804
      %v1343 = vmul.f32 %v1329, %v804
      %v1344 = vmul.f32 %v1331, %v804
      %v1345 = vmul.f32 %v1333, %v804
      %v1346 = vmul.f32 %v1335, %v804
      %v1347 = vmul.f32 %v1337, %v804
      %v1348 = vmul.f32 %v1339, %v804
      %v1349 = vmul.f32 %v1341, %v804
      %v1350 = vpack.c.bf16 %v1319, %v1318
      %v1351 = vpack.c.bf16 %v1321, %v1320
      %v1352 = vpack.c.bf16 %v1323, %v1322
      %v1353 = vpack.c.bf16 %v1325, %v1324
      %v1354 = vpack.c.bf16 %v1295, %v1294
      %v1355 = vpack.c.bf16 %v1297, %v1296
      %v1356 = vpack.c.bf16 %v1299, %v1298
      %v1357 = vpack.c.bf16 %v1301, %v1300
      %v1358 = vpack.c.bf16 %v1343, %v1342
      %v1359 = vpack.c.bf16 %v1345, %v1344
      %v1360 = vpack.c.bf16 %v1347, %v1346
      %v1361 = vpack.c.bf16 %v1349, %v1348
      %v1362 = vld [vmem:[%s6] sm:$0xff]
      %v1363 = vld [vmem:[%s6 + $0x8] sm:$0xff]
      %v1364 = vld [vmem:[%s6 + $0x10] sm:$0xff]
      %v1365 = vld [vmem:[%s6 + $0x18] sm:$0xff]
      %v1366 = vld [vmem:[%s6 + $0x20] sm:$0xff]
      %v1367 = vld [vmem:[%s6 + $0x28] sm:$0xff]
      %v1368 = vld [vmem:[%s6 + $0x30] sm:$0xff]
      %v1369 = vld [vmem:[%s6 + $0x38] sm:$0xff]
      %v1378 = vunpack.c.l.b16 %v1362
      %v1379 = vunpack.c.h.b16 %v1362
      %v1380 = vunpack.c.l.b16 %v1363
      %v1381 = vunpack.c.h.b16 %v1363
      %v1382 = vunpack.c.l.b16 %v1364
      %v1383 = vunpack.c.h.b16 %v1364
      %v1384 = vunpack.c.l.b16 %v1365
      %v1385 = vunpack.c.h.b16 %v1365
      %v1386 = vunpack.c.l.b16 %v1366
      %v1387 = vunpack.c.h.b16 %v1366
      %v1388 = vunpack.c.l.b16 %v1367
      %v1389 = vunpack.c.h.b16 %v1367
      %v1390 = vunpack.c.l.b16 %v1368
      %v1391 = vunpack.c.h.b16 %v1368
      %v1392 = vunpack.c.l.b16 %v1369
      %v1393 = vunpack.c.h.b16 %v1369
      %v1394 = vpack.c.b16 %v1380, %v1378
      %v1395 = vpack.c.b16 %v1381, %v1379
      %v1396 = vpack.c.b16 %v1384, %v1382
      %v1397 = vpack.c.b16 %v1385, %v1383
      %v1398 = vpack.c.b16 %v1388, %v1386
      %v1399 = vpack.c.b16 %v1389, %v1387
      %v1400 = vpack.c.b16 %v1392, %v1390
      %v1401 = vpack.c.b16 %v1393, %v1391
      %vm1406 = vcmask 523264
      %v1408 = vsel %vm1406, %v1395, 0
      %v1411 = vsel %vm1406, %v1397, 0
      %v1414 = vsel %vm1406, %v1399, 0
      %v1417 = vsel %vm1406, %v1401, 0
      %1419 = vmatprep.subr.bf16.mxu0 0
      %1420 = vmatpush1.bf16.msra.mxu0 %v1350
      %1421 = vmatprep.subr.bf16.mxu0 0
      %1422 = vmatpush1.bf16.msra.mxu0 %v1351
      %1423 = vmatprep.subr.bf16.mxu0 0
      %1424 = vmatpush1.bf16.msra.mxu0 %v1352
      %1425 = vmatprep.subr.bf16.mxu0 0
      %1426 = vmatpush1.bf16.msra.mxu0 %v1353
      %1427 = vmatprep.subr.bf16.mxu0 0
      %1428 = vmatpush1.bf16.msra.mxu0 %v1354
      %1429 = vmatprep.subr.bf16.mxu0 0
      %1430 = vmatpush1.bf16.msra.mxu0 %v1355
      %1431 = vmatprep.subr.bf16.mxu0 0
      %1432 = vmatpush1.bf16.msra.mxu0 %v1356
      %1433 = vmatprep.subr.bf16.mxu0 0
      %1434 = vmatpush1.bf16.msra.mxu0 %v1357
      %1435 = vmatprep.subr.bf16.mxu0 0
      %1436 = vmatpush1.bf16.msra.mxu0 %v1358
      %1437 = vmatprep.subr.bf16.mxu0 0
      %1438 = vmatpush1.bf16.msra.mxu0 %v1359
      %1439 = vmatprep.subr.bf16.mxu0 0
      %1440 = vmatpush1.bf16.msra.mxu0 %v1360
      %1441 = vmatprep.subr.bf16.mxu0 0
      %1442 = vmatpush1.bf16.msra.mxu0 %v1361
      %1443 = vmatprep.subr.bf16.mxu0 0
      %1444 = vmatpush1.bf16.msra.mxu0 0
      %1445 = vmatprep.subr.bf16.mxu0 0
      %1446 = vmatpush1.bf16.msra.mxu0 0
      %1447 = vmatprep.subr.bf16.mxu0 0
      %1448 = vmatpush1.bf16.msra.mxu0 0
      %1449 = vmatprep.subr.bf16.mxu0 0
      %1450 = vmatpush1.bf16.msra.mxu0 0
      %1451 = vmatprep.mubr.bf16.mxu0 %v1408
      %1452 = vmatmul.mubr.bf16.gmra.mrb[0].mxu0 %v1394
      %v1453 = vpop.f32.mrb[0].mxu0
      %v1454 = vadd.f32 0.0, %v1453
      %v1455 = vpop.f32.mrb[0].mxu0
      %v1456 = vpop.f32.mrb[0].mxu0
      %v1457 = vadd.f32 0.0, %v1456
      %v1458 = vpop.f32.mrb[0].mxu0
      %1459 = vmatprep.mubr.bf16.mxu0 %v1411
      %1460 = vmatmul.mubr.bf16.gmra.mrb[0].mxu0 %v1396
      %v1461 = vpop.f32.mrb[0].mxu0
      %v1462 = vadd.f32 0.0, %v1461
      %v1463 = vpop.f32.mrb[0].mxu0
      %v1464 = vpop.f32.mrb[0].mxu0
      %v1465 = vadd.f32 0.0, %v1464
      %v1466 = vpop.f32.mrb[0].mxu0
      %1467 = vmatprep.mubr.bf16.mxu0 %v1414
      %1468 = vmatmul.mubr.bf16.gmra.mrb[0].mxu0 %v1398
      %v1469 = vpop.f32.mrb[0].mxu0
      %v1470 = vadd.f32 0.0, %v1469
      %v1471 = vpop.f32.mrb[0].mxu0
      %v1472 = vpop.f32.mrb[0].mxu0
      %v1473 = vadd.f32 0.0, %v1472
      %v1474 = vpop.f32.mrb[0].mxu0
      %1475 = vmatprep.mubr.bf16.mxu0 %v1417
      %1476 = vmatmul.mubr.bf16.gmra.mrb[0].mxu0 %v1400
      %v1477 = vpop.f32.mrb[0].mxu0
      %v1478 = vadd.f32 0.0, %v1477
      %v1479 = vpop.f32.mrb[0].mxu0
      %v1480 = vpop.f32.mrb[0].mxu0
      %v1481 = vadd.f32 0.0, %v1480
      %v1482 = vpop.f32.mrb[0].mxu0
      %1483 = vdwg.mxu0
      %v1484 = vld [vmem:[%s7] sm:$0xff]
      %v1485 = vld [vmem:[%s7 + $0x8] sm:$0xff]
      %v1486 = vld [vmem:[%s7 + $0x10] sm:$0xff]
      %v1487 = vld [vmem:[%s7 + $0x18] sm:$0xff]
      %v1488 = vld [vmem:[%s7 + $0x20] sm:$0xff]
      %v1489 = vld [vmem:[%s7 + $0x28] sm:$0xff]
      %v1490 = vld [vmem:[%s7 + $0x30] sm:$0xff]
      %v1491 = vld [vmem:[%s7 + $0x38] sm:$0xff]
      %1493 = vset.pattern.permute.xlu0 0
      %1494 = vperm.xlu0 %1493, %v1484
      %v1495 = vpop.permute.xlu0 %1494
      %1498 = vset.pattern.permute.xlu0 0
      %1499 = vperm.xlu0 %1498, %v1485
      %v1500 = vpop.permute.xlu0 %1499
      %1503 = vset.pattern.permute.xlu0 0
      %1504 = vperm.xlu0 %1503, %v1486
      %v1505 = vpop.permute.xlu0 %1504
      %1508 = vset.pattern.permute.xlu0 0
      %1509 = vperm.xlu0 %1508, %v1487
      %v1510 = vpop.permute.xlu0 %1509
      %1513 = vset.pattern.permute.xlu0 0
      %1514 = vperm.xlu0 %1513, %v1488
      %v1515 = vpop.permute.xlu0 %1514
      %1518 = vset.pattern.permute.xlu0 0
      %1519 = vperm.xlu0 %1518, %v1489
      %v1520 = vpop.permute.xlu0 %1519
      %1523 = vset.pattern.permute.xlu0 0
      %1524 = vperm.xlu0 %1523, %v1490
      %v1525 = vpop.permute.xlu0 %1524
      %1528 = vset.pattern.permute.xlu0 0
      %1529 = vperm.xlu0 %1528, %v1491
      %v1530 = vpop.permute.xlu0 %1529
      %v1532 = vmul.f32 %v1495, %v1454
      %v1533 = vmul.f32 %v1500, %v1457
      %v1534 = vmul.f32 %v1505, %v1462
      %v1535 = vmul.f32 %v1510, %v1465
      %v1536 = vmul.f32 %v1515, %v1470
      %v1537 = vmul.f32 %v1520, %v1473
      %v1538 = vmul.f32 %v1525, %v1478
      %v1539 = vmul.f32 %v1530, %v1481
      %v1540 = vld [vmem:[%s8] sm:$0xff]
      %v1541 = vld [vmem:[%s8 + $0x8] sm:$0xff]
      %v1542 = vld [vmem:[%s8 + $0x10] sm:$0xff]
      %v1543 = vld [vmem:[%s8 + $0x18] sm:$0xff]
      %v1544 = vld [vmem:[%s8 + $0x20] sm:$0xff]
      %v1545 = vld [vmem:[%s8 + $0x28] sm:$0xff]
      %v1546 = vld [vmem:[%s8 + $0x30] sm:$0xff]
      %v1547 = vld [vmem:[%s8 + $0x38] sm:$0xff]
      %1549 = vset.pattern.permute.xlu0 0
      %1550 = vperm.xlu0 %1549, %v1540
      %v1551 = vpop.permute.xlu0 %1550
      %1554 = vset.pattern.permute.xlu0 0
      %1555 = vperm.xlu0 %1554, %v1541
      %v1556 = vpop.permute.xlu0 %1555
      %1559 = vset.pattern.permute.xlu0 0
      %1560 = vperm.xlu0 %1559, %v1542
      %v1561 = vpop.permute.xlu0 %1560
      %1564 = vset.pattern.permute.xlu0 0
      %1565 = vperm.xlu0 %1564, %v1543
      %v1566 = vpop.permute.xlu0 %1565
      %1569 = vset.pattern.permute.xlu0 0
      %1570 = vperm.xlu0 %1569, %v1544
      %v1571 = vpop.permute.xlu0 %1570
      %1574 = vset.pattern.permute.xlu0 0
      %1575 = vperm.xlu0 %1574, %v1545
      %v1576 = vpop.permute.xlu0 %1575
      %1579 = vset.pattern.permute.xlu0 0
      %1580 = vperm.xlu0 %1579, %v1546
      %v1581 = vpop.permute.xlu0 %1580
      %1584 = vset.pattern.permute.xlu0 0
      %1585 = vperm.xlu0 %1584, %v1547
      %v1586 = vpop.permute.xlu0 %1585
      %v1588 = vadd.f32 %v1532, %v1551
      %v1589 = vadd.f32 %v1533, %v1556
      %v1590 = vadd.f32 %v1534, %v1561
      %v1591 = vadd.f32 %v1535, %v1566
      %v1592 = vadd.f32 %v1536, %v1571
      %v1593 = vadd.f32 %v1537, %v1576
      %v1594 = vadd.f32 %v1538, %v1581
      %v1595 = vadd.f32 %v1539, %v1586
      %v1596 = vmax.f32 %v1588, 0.0
      %v1597 = vmax.f32 %v1589, 0.0
      %v1598 = vmax.f32 %v1590, 0.0
      %v1599 = vmax.f32 %v1591, 0.0
      %v1600 = vmax.f32 %v1592, 0.0
      %v1601 = vmax.f32 %v1593, 0.0
      %v1602 = vmax.f32 %v1594, 0.0
      %v1603 = vmax.f32 %v1595, 0.0
      %v1604 = vld [vmem:[%s10] sm:$0xff]
      %v1605 = vld [vmem:[%s10 + $0x8] sm:$0xff]
      %v1606 = vld [vmem:[%s10 + $0x10] sm:$0xff]
      %v1607 = vld [vmem:[%s10 + $0x18] sm:$0xff]
      %v1608 = vld [vmem:[%s10 + $0x20] sm:$0xff]
      %v1609 = vld [vmem:[%s10 + $0x28] sm:$0xff]
      %v1610 = vld [vmem:[%s10 + $0x30] sm:$0xff]
      %v1611 = vld [vmem:[%s10 + $0x38] sm:$0xff]
      %1612 = vrot.lane.b32.xlu0 %v1596, 1
      %v1613 = vpop.permute.xlu0 %1612
      %1614 = vrot.lane.b32.xlu0 %v1597, 1
      %v1615 = vpop.permute.xlu0 %1614
      %1616 = vrot.lane.b32.xlu0 %v1598, 1
      %v1617 = vpop.permute.xlu0 %1616
      %1618 = vrot.lane.b32.xlu0 %v1599, 1
      %v1619 = vpop.permute.xlu0 %1618
      %1620 = vrot.lane.b32.xlu0 %v1600, 1
      %v1621 = vpop.permute.xlu0 %1620
      %1622 = vrot.lane.b32.xlu0 %v1601, 1
      %v1623 = vpop.permute.xlu0 %1622
      %1624 = vrot.lane.b32.xlu0 %v1602, 1
      %v1625 = vpop.permute.xlu0 %1624
      %1626 = vrot.lane.b32.xlu0 %v1603, 1
      %v1627 = vpop.permute.xlu0 %1626
      %v1628 = vmul.f32 %v1613, %v801
      %v1629 = vmul.f32 %v1615, %v801
      %v1630 = vmul.f32 %v1617, %v801
      %v1631 = vmul.f32 %v1619, %v801
      %v1632 = vmul.f32 %v1621, %v801
      %v1633 = vmul.f32 %v1623, %v801
      %v1634 = vmul.f32 %v1625, %v801
      %v1635 = vmul.f32 %v1627, %v801
      %1636 = vrot.lane.b32.xlu0 %v1596, 127
      %v1637 = vpop.permute.xlu0 %1636
      %1638 = vrot.lane.b32.xlu0 %v1597, 127
      %v1639 = vpop.permute.xlu0 %1638
      %1640 = vrot.lane.b32.xlu0 %v1598, 127
      %v1641 = vpop.permute.xlu0 %1640
      %1642 = vrot.lane.b32.xlu0 %v1599, 127
      %v1643 = vpop.permute.xlu0 %1642
      %1644 = vrot.lane.b32.xlu0 %v1600, 127
      %v1645 = vpop.permute.xlu0 %1644
      %1646 = vrot.lane.b32.xlu0 %v1601, 127
      %v1647 = vpop.permute.xlu0 %1646
      %1648 = vrot.lane.b32.xlu0 %v1602, 127
      %v1649 = vpop.permute.xlu0 %1648
      %1650 = vrot.lane.b32.xlu0 %v1603, 127
      %v1651 = vpop.permute.xlu0 %1650
      %v1652 = vmul.f32 %v1637, %v804
      %v1653 = vmul.f32 %v1639, %v804
      %v1654 = vmul.f32 %v1641, %v804
      %v1655 = vmul.f32 %v1643, %v804
      %v1656 = vmul.f32 %v1645, %v804
      %v1657 = vmul.f32 %v1647, %v804
      %v1658 = vmul.f32 %v1649, %v804
      %v1659 = vmul.f32 %v1651, %v804
      %v1660 = vpack.c.bf16 %v1629, %v1628
      %v1661 = vpack.c.bf16 %v1631, %v1630
      %v1662 = vpack.c.bf16 %v1633, %v1632
      %v1663 = vpack.c.bf16 %v1635, %v1634
      %v1664 = vpack.c.bf16 %v1597, %v1596
      %v1665 = vpack.c.bf16 %v1599, %v1598
      %v1666 = vpack.c.bf16 %v1601, %v1600
      %v1667 = vpack.c.bf16 %v1603, %v1602
      %v1668 = vpack.c.bf16 %v1653, %v1652
      %v1669 = vpack.c.bf16 %v1655, %v1654
      %v1670 = vpack.c.bf16 %v1657, %v1656
      %v1671 = vpack.c.bf16 %v1659, %v1658
      %v1672 = vld [vmem:[%s9] sm:$0xff]
      %v1673 = vld [vmem:[%s9 + $0x8] sm:$0xff]
      %v1674 = vld [vmem:[%s9 + $0x10] sm:$0xff]
      %v1675 = vld [vmem:[%s9 + $0x18] sm:$0xff]
      %v1676 = vld [vmem:[%s9 + $0x20] sm:$0xff]
      %v1677 = vld [vmem:[%s9 + $0x28] sm:$0xff]
      %v1678 = vld [vmem:[%s9 + $0x30] sm:$0xff]
      %v1679 = vld [vmem:[%s9 + $0x38] sm:$0xff]
      %v1688 = vunpack.c.l.b16 %v1672
      %v1689 = vunpack.c.h.b16 %v1672
      %v1690 = vunpack.c.l.b16 %v1673
      %v1691 = vunpack.c.h.b16 %v1673
      %v1692 = vunpack.c.l.b16 %v1674
      %v1693 = vunpack.c.h.b16 %v1674
      %v1694 = vunpack.c.l.b16 %v1675
      %v1695 = vunpack.c.h.b16 %v1675
      %v1696 = vunpack.c.l.b16 %v1676
      %v1697 = vunpack.c.h.b16 %v1676
      %v1698 = vunpack.c.l.b16 %v1677
      %v1699 = vunpack.c.h.b16 %v1677
      %v1700 = vunpack.c.l.b16 %v1678
      %v1701 = vunpack.c.h.b16 %v1678
      %v1702 = vunpack.c.l.b16 %v1679
      %v1703 = vunpack.c.h.b16 %v1679
      %v1704 = vpack.c.b16 %v1690, %v1688
      %v1705 = vpack.c.b16 %v1691, %v1689
      %v1706 = vpack.c.b16 %v1694, %v1692
      %v1707 = vpack.c.b16 %v1695, %v1693
      %v1708 = vpack.c.b16 %v1698, %v1696
      %v1709 = vpack.c.b16 %v1699, %v1697
      %v1710 = vpack.c.b16 %v1702, %v1700
      %v1711 = vpack.c.b16 %v1703, %v1701
      %v1717 = vsel %vm1406, %v1705, 0
      %v1720 = vsel %vm1406, %v1707, 0
      %v1723 = vsel %vm1406, %v1709, 0
      %v1726 = vsel %vm1406, %v1711, 0
      %1728 = vmatprep.subr.bf16.mxu0 0
      %1729 = vmatpush1.bf16.msra.mxu0 %v1660
      %1730 = vmatprep.subr.bf16.mxu0 0
      %1731 = vmatpush1.bf16.msra.mxu0 %v1661
      %1732 = vmatprep.subr.bf16.mxu0 0
      %1733 = vmatpush1.bf16.msra.mxu0 %v1662
      %1734 = vmatprep.subr.bf16.mxu0 0
      %1735 = vmatpush1.bf16.msra.mxu0 %v1663
      %1736 = vmatprep.subr.bf16.mxu0 0
      %1737 = vmatpush1.bf16.msra.mxu0 %v1664
      %1738 = vmatprep.subr.bf16.mxu0 0
      %1739 = vmatpush1.bf16.msra.mxu0 %v1665
      %1740 = vmatprep.subr.bf16.mxu0 0
      %1741 = vmatpush1.bf16.msra.mxu0 %v1666
      %1742 = vmatprep.subr.bf16.mxu0 0
      %1743 = vmatpush1.bf16.msra.mxu0 %v1667
      %1744 = vmatprep.subr.bf16.mxu0 0
      %1745 = vmatpush1.bf16.msra.mxu0 %v1668
      %1746 = vmatprep.subr.bf16.mxu0 0
      %1747 = vmatpush1.bf16.msra.mxu0 %v1669
      %1748 = vmatprep.subr.bf16.mxu0 0
      %1749 = vmatpush1.bf16.msra.mxu0 %v1670
      %1750 = vmatprep.subr.bf16.mxu0 0
      %1751 = vmatpush1.bf16.msra.mxu0 %v1671
      %1752 = vmatprep.subr.bf16.mxu0 0
      %1753 = vmatpush1.bf16.msra.mxu0 0
      %1754 = vmatprep.subr.bf16.mxu0 0
      %1755 = vmatpush1.bf16.msra.mxu0 0
      %1756 = vmatprep.subr.bf16.mxu0 0
      %1757 = vmatpush1.bf16.msra.mxu0 0
      %1758 = vmatprep.subr.bf16.mxu0 0
      %1759 = vmatpush1.bf16.msra.mxu0 0
      %1760 = vmatprep.mubr.bf16.mxu0 %v1717
      %1761 = vmatmul.mubr.bf16.gmra.mrb[0].mxu0 %v1704
      %v1762 = vpop.f32.mrb[0].mxu0
      %v1763 = vadd.f32 0.0, %v1762
      %v1764 = vpop.f32.mrb[0].mxu0
      %v1765 = vpop.f32.mrb[0].mxu0
      %v1766 = vadd.f32 0.0, %v1765
      %v1767 = vpop.f32.mrb[0].mxu0
      %1768 = vmatprep.mubr.bf16.mxu0 %v1720
      %1769 = vmatmul.mubr.bf16.gmra.mrb[0].mxu0 %v1706
      %v1770 = vpop.f32.mrb[0].mxu0
      %v1771 = vadd.f32 0.0, %v1770
      %v1772 = vpop.f32.mrb[0].mxu0
      %v1773 = vpop.f32.mrb[0].mxu0
      %v1774 = vadd.f32 0.0, %v1773
      %v1775 = vpop.f32.mrb[0].mxu0
      %1776 = vmatprep.mubr.bf16.mxu0 %v1723
      %1777 = vmatmul.mubr.bf16.gmra.mrb[0].mxu0 %v1708
      %v1778 = vpop.f32.mrb[0].mxu0
      %v1779 = vadd.f32 0.0, %v1778
      %v1780 = vpop.f32.mrb[0].mxu0
      %v1781 = vpop.f32.mrb[0].mxu0
      %v1782 = vadd.f32 0.0, %v1781
      %v1783 = vpop.f32.mrb[0].mxu0
      %1784 = vmatprep.mubr.bf16.mxu0 %v1726
      %1785 = vmatmul.mubr.bf16.gmra.mrb[0].mxu0 %v1710
      %v1786 = vpop.f32.mrb[0].mxu0
      %v1787 = vadd.f32 0.0, %v1786
      %v1788 = vpop.f32.mrb[0].mxu0
      %v1789 = vpop.f32.mrb[0].mxu0
      %v1790 = vadd.f32 0.0, %v1789
      %v1791 = vpop.f32.mrb[0].mxu0
      %1792 = vdwg.mxu0
      %1794 = vset.pattern.permute.xlu0 0
      %1795 = vperm.xlu0 %1794, %v1604
      %v1796 = vpop.permute.xlu0 %1795
      %1799 = vset.pattern.permute.xlu0 0
      %1800 = vperm.xlu0 %1799, %v1605
      %v1801 = vpop.permute.xlu0 %1800
      %1804 = vset.pattern.permute.xlu0 0
      %1805 = vperm.xlu0 %1804, %v1606
      %v1806 = vpop.permute.xlu0 %1805
      %1809 = vset.pattern.permute.xlu0 0
      %1810 = vperm.xlu0 %1809, %v1607
      %v1811 = vpop.permute.xlu0 %1810
      %1814 = vset.pattern.permute.xlu0 0
      %1815 = vperm.xlu0 %1814, %v1608
      %v1816 = vpop.permute.xlu0 %1815
      %1819 = vset.pattern.permute.xlu0 0
      %1820 = vperm.xlu0 %1819, %v1609
      %v1821 = vpop.permute.xlu0 %1820
      %1824 = vset.pattern.permute.xlu0 0
      %1825 = vperm.xlu0 %1824, %v1610
      %v1826 = vpop.permute.xlu0 %1825
      %1829 = vset.pattern.permute.xlu0 0
      %1830 = vperm.xlu0 %1829, %v1611
      %v1831 = vpop.permute.xlu0 %1830
      %v1833 = vmul.f32 %v1796, %v1763
      %v1834 = vmul.f32 %v1801, %v1766
      %v1835 = vmul.f32 %v1806, %v1771
      %v1836 = vmul.f32 %v1811, %v1774
      %v1837 = vmul.f32 %v1816, %v1779
      %v1838 = vmul.f32 %v1821, %v1782
      %v1839 = vmul.f32 %v1826, %v1787
      %v1840 = vmul.f32 %v1831, %v1790
      %v1841 = vld [vmem:[%s11] sm:$0xff]
      %v1842 = vld [vmem:[%s11 + $0x8] sm:$0xff]
      %v1843 = vld [vmem:[%s11 + $0x10] sm:$0xff]
      %v1844 = vld [vmem:[%s11 + $0x18] sm:$0xff]
      %v1845 = vld [vmem:[%s11 + $0x20] sm:$0xff]
      %v1846 = vld [vmem:[%s11 + $0x28] sm:$0xff]
      %v1847 = vld [vmem:[%s11 + $0x30] sm:$0xff]
      %v1848 = vld [vmem:[%s11 + $0x38] sm:$0xff]
      %1850 = vset.pattern.permute.xlu0 0
      %1851 = vperm.xlu0 %1850, %v1841
      %v1852 = vpop.permute.xlu0 %1851
      %1855 = vset.pattern.permute.xlu0 0
      %1856 = vperm.xlu0 %1855, %v1842
      %v1857 = vpop.permute.xlu0 %1856
      %1860 = vset.pattern.permute.xlu0 0
      %1861 = vperm.xlu0 %1860, %v1843
      %v1862 = vpop.permute.xlu0 %1861
      %1865 = vset.pattern.permute.xlu0 0
      %1866 = vperm.xlu0 %1865, %v1844
      %v1867 = vpop.permute.xlu0 %1866
      %1870 = vset.pattern.permute.xlu0 0
      %1871 = vperm.xlu0 %1870, %v1845
      %v1872 = vpop.permute.xlu0 %1871
      %1875 = vset.pattern.permute.xlu0 0
      %1876 = vperm.xlu0 %1875, %v1846
      %v1877 = vpop.permute.xlu0 %1876
      %1880 = vset.pattern.permute.xlu0 0
      %1881 = vperm.xlu0 %1880, %v1847
      %v1882 = vpop.permute.xlu0 %1881
      %1885 = vset.pattern.permute.xlu0 0
      %1886 = vperm.xlu0 %1885, %v1848
      %v1887 = vpop.permute.xlu0 %1886
      %v1889 = vadd.f32 %v1833, %v1852
      %v1890 = vadd.f32 %v1834, %v1857
      %v1891 = vadd.f32 %v1835, %v1862
      %v1892 = vadd.f32 %v1836, %v1867
      %v1893 = vadd.f32 %v1837, %v1872
      %v1894 = vadd.f32 %v1838, %v1877
      %v1895 = vadd.f32 %v1839, %v1882
      %v1896 = vadd.f32 %v1840, %v1887
      %v1897 = vadd.f32 %v1889, %v1294
      %v1898 = vadd.f32 %v1890, %v1295
      %v1899 = vadd.f32 %v1891, %v1296
      %v1900 = vadd.f32 %v1892, %v1297
      %v1901 = vadd.f32 %v1893, %v1298
      %v1902 = vadd.f32 %v1894, %v1299
      %v1903 = vadd.f32 %v1895, %v1300
      %v1904 = vadd.f32 %v1896, %v1301
      %v1905 = vmax.f32 %v1897, 0.0
      %v1906 = vmax.f32 %v1898, 0.0
      %v1907 = vmax.f32 %v1899, 0.0
      %v1908 = vmax.f32 %v1900, 0.0
      %v1909 = vmax.f32 %v1901, 0.0
      %v1910 = vmax.f32 %v1902, 0.0
      %v1911 = vmax.f32 %v1903, 0.0
      %v1912 = vmax.f32 %v1904, 0.0
      %1913 = vrot.lane.b32.xlu0 %v1905, 1
      %v1914 = vpop.permute.xlu0 %1913
      %1915 = vrot.lane.b32.xlu0 %v1906, 1
      %v1916 = vpop.permute.xlu0 %1915
      %1917 = vrot.lane.b32.xlu0 %v1907, 1
      %v1918 = vpop.permute.xlu0 %1917
      %1919 = vrot.lane.b32.xlu0 %v1908, 1
      %v1920 = vpop.permute.xlu0 %1919
      %1921 = vrot.lane.b32.xlu0 %v1909, 1
      %v1922 = vpop.permute.xlu0 %1921
      %1923 = vrot.lane.b32.xlu0 %v1910, 1
      %v1924 = vpop.permute.xlu0 %1923
      %1925 = vrot.lane.b32.xlu0 %v1911, 1
      %v1926 = vpop.permute.xlu0 %1925
      %1927 = vrot.lane.b32.xlu0 %v1912, 1
      %v1928 = vpop.permute.xlu0 %1927
      %v1929 = vmul.f32 %v1914, %v801
      %v1930 = vmul.f32 %v1916, %v801
      %v1931 = vmul.f32 %v1918, %v801
      %v1932 = vmul.f32 %v1920, %v801
      %v1933 = vmul.f32 %v1922, %v801
      %v1934 = vmul.f32 %v1924, %v801
      %v1935 = vmul.f32 %v1926, %v801
      %v1936 = vmul.f32 %v1928, %v801
      %1937 = vrot.lane.b32.xlu0 %v1905, 127
      %v1938 = vpop.permute.xlu0 %1937
      %1939 = vrot.lane.b32.xlu0 %v1906, 127
      %v1940 = vpop.permute.xlu0 %1939
      %1941 = vrot.lane.b32.xlu0 %v1907, 127
      %v1942 = vpop.permute.xlu0 %1941
      %1943 = vrot.lane.b32.xlu0 %v1908, 127
      %v1944 = vpop.permute.xlu0 %1943
      %1945 = vrot.lane.b32.xlu0 %v1909, 127
      %v1946 = vpop.permute.xlu0 %1945
      %1947 = vrot.lane.b32.xlu0 %v1910, 127
      %v1948 = vpop.permute.xlu0 %1947
      %1949 = vrot.lane.b32.xlu0 %v1911, 127
      %v1950 = vpop.permute.xlu0 %1949
      %1951 = vrot.lane.b32.xlu0 %v1912, 127
      %v1952 = vpop.permute.xlu0 %1951
      %v1953 = vmul.f32 %v1938, %v804
      %v1954 = vmul.f32 %v1940, %v804
      %v1955 = vmul.f32 %v1942, %v804
      %v1956 = vmul.f32 %v1944, %v804
      %v1957 = vmul.f32 %v1946, %v804
      %v1958 = vmul.f32 %v1948, %v804
      %v1959 = vmul.f32 %v1950, %v804
      %v1960 = vmul.f32 %v1952, %v804
      %v1961 = vpack.c.bf16 %v1930, %v1929
      %v1962 = vpack.c.bf16 %v1932, %v1931
      %v1963 = vpack.c.bf16 %v1934, %v1933
      %v1964 = vpack.c.bf16 %v1936, %v1935
      %v1965 = vpack.c.bf16 %v1906, %v1905
      %v1966 = vpack.c.bf16 %v1908, %v1907
      %v1967 = vpack.c.bf16 %v1910, %v1909
      %v1968 = vpack.c.bf16 %v1912, %v1911
      %v1969 = vpack.c.bf16 %v1954, %v1953
      %v1970 = vpack.c.bf16 %v1956, %v1955
      %v1971 = vpack.c.bf16 %v1958, %v1957
      %v1972 = vpack.c.bf16 %v1960, %v1959
      %v1973 = vld [vmem:[%s12] sm:$0xff]
      %v1974 = vld [vmem:[%s12 + $0x8] sm:$0xff]
      %v1975 = vld [vmem:[%s12 + $0x10] sm:$0xff]
      %v1976 = vld [vmem:[%s12 + $0x18] sm:$0xff]
      %v1977 = vld [vmem:[%s12 + $0x20] sm:$0xff]
      %v1978 = vld [vmem:[%s12 + $0x28] sm:$0xff]
      %v1979 = vld [vmem:[%s12 + $0x30] sm:$0xff]
      %v1980 = vld [vmem:[%s12 + $0x38] sm:$0xff]
      %v1981 = vld [vmem:[%s12 + $0x40] sm:$0xff]
      %v1982 = vld [vmem:[%s12 + $0x48] sm:$0xff]
      %v1983 = vld [vmem:[%s12 + $0x50] sm:$0xff]
      %v1984 = vld [vmem:[%s12 + $0x58] sm:$0xff]
      %v1985 = vld [vmem:[%s12 + $0x60] sm:$0xff]
      %v1986 = vld [vmem:[%s12 + $0x68] sm:$0xff]
      %v1987 = vld [vmem:[%s12 + $0x70] sm:$0xff]
      %v1988 = vld [vmem:[%s12 + $0x78] sm:$0xff]
      %v2005 = vunpack.c.l.b16 %v1973
      %v2006 = vunpack.c.h.b16 %v1973
      %v2007 = vunpack.c.l.b16 %v1974
      %v2008 = vunpack.c.h.b16 %v1974
      %v2009 = vunpack.c.l.b16 %v1975
      %v2010 = vunpack.c.h.b16 %v1975
      %v2011 = vunpack.c.l.b16 %v1976
      %v2012 = vunpack.c.h.b16 %v1976
      %v2013 = vunpack.c.l.b16 %v1977
      %v2014 = vunpack.c.h.b16 %v1977
      %v2015 = vunpack.c.l.b16 %v1978
      %v2016 = vunpack.c.h.b16 %v1978
      %v2017 = vunpack.c.l.b16 %v1979
      %v2018 = vunpack.c.h.b16 %v1979
      %v2019 = vunpack.c.l.b16 %v1980
      %v2020 = vunpack.c.h.b16 %v1980
      %v2021 = vunpack.c.l.b16 %v1981
      %v2022 = vunpack.c.h.b16 %v1981
      %v2023 = vunpack.c.l.b16 %v1982
      %v2024 = vunpack.c.h.b16 %v1982
      %v2025 = vunpack.c.l.b16 %v1983
      %v2026 = vunpack.c.h.b16 %v1983
      %v2027 = vunpack.c.l.b16 %v1984
      %v2028 = vunpack.c.h.b16 %v1984
      %v2029 = vunpack.c.l.b16 %v1985
      %v2030 = vunpack.c.h.b16 %v1985
      %v2031 = vunpack.c.l.b16 %v1986
      %v2032 = vunpack.c.h.b16 %v1986
      %v2033 = vunpack.c.l.b16 %v1987
      %v2034 = vunpack.c.h.b16 %v1987
      %v2035 = vunpack.c.l.b16 %v1988
      %v2036 = vunpack.c.h.b16 %v1988
      %v2037 = vpack.c.b16 %v2007, %v2005
      %v2038 = vpack.c.b16 %v2008, %v2006
      %v2039 = vpack.c.b16 %v2011, %v2009
      %v2040 = vpack.c.b16 %v2012, %v2010
      %v2041 = vpack.c.b16 %v2015, %v2013
      %v2042 = vpack.c.b16 %v2016, %v2014
      %v2043 = vpack.c.b16 %v2019, %v2017
      %v2044 = vpack.c.b16 %v2020, %v2018
      %v2045 = vpack.c.b16 %v2023, %v2021
      %v2046 = vpack.c.b16 %v2024, %v2022
      %v2047 = vpack.c.b16 %v2027, %v2025
      %v2048 = vpack.c.b16 %v2028, %v2026
      %v2049 = vpack.c.b16 %v2031, %v2029
      %v2050 = vpack.c.b16 %v2032, %v2030
      %v2051 = vpack.c.b16 %v2035, %v2033
      %v2052 = vpack.c.b16 %v2036, %v2034
      %v2062 = vsel %vm1406, %v2038, 0
      %v2065 = vsel %vm1406, %v2040, 0
      %v2068 = vsel %vm1406, %v2042, 0
      %v2071 = vsel %vm1406, %v2044, 0
      %v2074 = vsel %vm1406, %v2046, 0
      %v2077 = vsel %vm1406, %v2048, 0
      %v2080 = vsel %vm1406, %v2050, 0
      %v2083 = vsel %vm1406, %v2052, 0
      %2085 = vmatprep.subr.bf16.mxu0 0
      %2086 = vmatpush1.bf16.msra.mxu0 %v1961
      %2087 = vmatprep.subr.bf16.mxu0 0
      %2088 = vmatpush1.bf16.msra.mxu0 %v1962
      %2089 = vmatprep.subr.bf16.mxu0 0
      %2090 = vmatpush1.bf16.msra.mxu0 %v1963
      %2091 = vmatprep.subr.bf16.mxu0 0
      %2092 = vmatpush1.bf16.msra.mxu0 %v1964
      %2093 = vmatprep.subr.bf16.mxu0 0
      %2094 = vmatpush1.bf16.msra.mxu0 %v1965
      %2095 = vmatprep.subr.bf16.mxu0 0
      %2096 = vmatpush1.bf16.msra.mxu0 %v1966
      %2097 = vmatprep.subr.bf16.mxu0 0
      %2098 = vmatpush1.bf16.msra.mxu0 %v1967
      %2099 = vmatprep.subr.bf16.mxu0 0
      %2100 = vmatpush1.bf16.msra.mxu0 %v1968
      %2101 = vmatprep.subr.bf16.mxu0 0
      %2102 = vmatpush1.bf16.msra.mxu0 %v1969
      %2103 = vmatprep.subr.bf16.mxu0 0
      %2104 = vmatpush1.bf16.msra.mxu0 %v1970
      %2105 = vmatprep.subr.bf16.mxu0 0
      %2106 = vmatpush1.bf16.msra.mxu0 %v1971
      %2107 = vmatprep.subr.bf16.mxu0 0
      %2108 = vmatpush1.bf16.msra.mxu0 %v1972
      %2109 = vmatprep.subr.bf16.mxu0 0
      %2110 = vmatpush1.bf16.msra.mxu0 0
      %2111 = vmatprep.subr.bf16.mxu0 0
      %2112 = vmatpush1.bf16.msra.mxu0 0
      %2113 = vmatprep.subr.bf16.mxu0 0
      %2114 = vmatpush1.bf16.msra.mxu0 0
      %2115 = vmatprep.subr.bf16.mxu0 0
      %2116 = vmatpush1.bf16.msra.mxu0 0
      %2117 = vmatprep.mubr.bf16.mxu0 %v2062
      %2118 = vmatmul.mubr.bf16.gmra.mrb[0].mxu0 %v2037
      %v2119 = vpop.f32.mrb[0].mxu0
      %v2120 = vadd.f32 0.0, %v2119
      %v2121 = vpop.f32.mrb[0].mxu0
      %v2122 = vpop.f32.mrb[0].mxu0
      %v2123 = vadd.f32 0.0, %v2122
      %v2124 = vpop.f32.mrb[0].mxu0
      %2125 = vmatprep.mubr.bf16.mxu0 %v2065
      %2126 = vmatmul.mubr.bf16.gmra.mrb[0].mxu0 %v2039
      %v2127 = vpop.f32.mrb[0].mxu0
      %v2128 = vadd.f32 0.0, %v2127
      %v2129 = vpop.f32.mrb[0].mxu0
      %v2130 = vpop.f32.mrb[0].mxu0
      %v2131 = vadd.f32 0.0, %v2130
      %v2132 = vpop.f32.mrb[0].mxu0
      %2133 = vmatprep.mubr.bf16.mxu0 %v2068
      %2134 = vmatmul.mubr.bf16.gmra.mrb[0].mxu0 %v2041
      %v2135 = vpop.f32.mrb[0].mxu0
      %v2136 = vadd.f32 0.0, %v2135
      %v2137 = vpop.f32.mrb[0].mxu0
      %v2138 = vpop.f32.mrb[0].mxu0
      %v2139 = vadd.f32 0.0, %v2138
      %v2140 = vpop.f32.mrb[0].mxu0
      %2141 = vmatprep.mubr.bf16.mxu0 %v2071
      %2142 = vmatmul.mubr.bf16.gmra.mrb[0].mxu0 %v2043
      %v2143 = vpop.f32.mrb[0].mxu0
      %v2144 = vadd.f32 0.0, %v2143
      %v2145 = vpop.f32.mrb[0].mxu0
      %v2146 = vpop.f32.mrb[0].mxu0
      %v2147 = vadd.f32 0.0, %v2146
      %v2148 = vpop.f32.mrb[0].mxu0
      %2149 = vmatprep.mubr.bf16.mxu0 %v2074
      %2150 = vmatmul.mubr.bf16.gmra.mrb[0].mxu0 %v2045
      %v2151 = vpop.f32.mrb[0].mxu0
      %v2152 = vadd.f32 0.0, %v2151
      %v2153 = vpop.f32.mrb[0].mxu0
      %v2154 = vpop.f32.mrb[0].mxu0
      %v2155 = vadd.f32 0.0, %v2154
      %v2156 = vpop.f32.mrb[0].mxu0
      %2157 = vmatprep.mubr.bf16.mxu0 %v2077
      %2158 = vmatmul.mubr.bf16.gmra.mrb[0].mxu0 %v2047
      %v2159 = vpop.f32.mrb[0].mxu0
      %v2160 = vadd.f32 0.0, %v2159
      %v2161 = vpop.f32.mrb[0].mxu0
      %v2162 = vpop.f32.mrb[0].mxu0
      %v2163 = vadd.f32 0.0, %v2162
      %v2164 = vpop.f32.mrb[0].mxu0
      %2165 = vmatprep.mubr.bf16.mxu0 %v2080
      %2166 = vmatmul.mubr.bf16.gmra.mrb[0].mxu0 %v2049
      %v2167 = vpop.f32.mrb[0].mxu0
      %v2168 = vadd.f32 0.0, %v2167
      %v2169 = vpop.f32.mrb[0].mxu0
      %v2170 = vpop.f32.mrb[0].mxu0
      %v2171 = vadd.f32 0.0, %v2170
      %v2172 = vpop.f32.mrb[0].mxu0
      %2173 = vmatprep.mubr.bf16.mxu0 %v2083
      %2174 = vmatmul.mubr.bf16.gmra.mrb[0].mxu0 %v2051
      %v2175 = vpop.f32.mrb[0].mxu0
      %v2176 = vadd.f32 0.0, %v2175
      %v2177 = vpop.f32.mrb[0].mxu0
      %v2178 = vpop.f32.mrb[0].mxu0
      %v2179 = vadd.f32 0.0, %v2178
      %v2180 = vpop.f32.mrb[0].mxu0
      %2181 = vdwg.mxu0
      %v2182 = vld [vmem:[%s13] sm:$0xff]
      %v2183 = vld [vmem:[%s13 + $0x8] sm:$0xff]
      %v2184 = vld [vmem:[%s13 + $0x10] sm:$0xff]
      %v2185 = vld [vmem:[%s13 + $0x18] sm:$0xff]
      %v2186 = vld [vmem:[%s13 + $0x20] sm:$0xff]
      %v2187 = vld [vmem:[%s13 + $0x28] sm:$0xff]
      %v2188 = vld [vmem:[%s13 + $0x30] sm:$0xff]
      %v2189 = vld [vmem:[%s13 + $0x38] sm:$0xff]
      %v2190 = vld [vmem:[%s13 + $0x40] sm:$0xff]
      %v2191 = vld [vmem:[%s13 + $0x48] sm:$0xff]
      %v2192 = vld [vmem:[%s13 + $0x50] sm:$0xff]
      %v2193 = vld [vmem:[%s13 + $0x58] sm:$0xff]
      %v2194 = vld [vmem:[%s13 + $0x60] sm:$0xff]
      %v2195 = vld [vmem:[%s13 + $0x68] sm:$0xff]
      %v2196 = vld [vmem:[%s13 + $0x70] sm:$0xff]
      %v2197 = vld [vmem:[%s13 + $0x78] sm:$0xff]
      %2199 = vset.pattern.permute.xlu0 0
      %2200 = vperm.xlu0 %2199, %v2182
      %v2201 = vpop.permute.xlu0 %2200
      %2204 = vset.pattern.permute.xlu0 0
      %2205 = vperm.xlu0 %2204, %v2183
      %v2206 = vpop.permute.xlu0 %2205
      %2209 = vset.pattern.permute.xlu0 0
      %2210 = vperm.xlu0 %2209, %v2184
      %v2211 = vpop.permute.xlu0 %2210
      %2214 = vset.pattern.permute.xlu0 0
      %2215 = vperm.xlu0 %2214, %v2185
      %v2216 = vpop.permute.xlu0 %2215
      %2219 = vset.pattern.permute.xlu0 0
      %2220 = vperm.xlu0 %2219, %v2186
      %v2221 = vpop.permute.xlu0 %2220
      %2224 = vset.pattern.permute.xlu0 0
      %2225 = vperm.xlu0 %2224, %v2187
      %v2226 = vpop.permute.xlu0 %2225
      %2229 = vset.pattern.permute.xlu0 0
      %2230 = vperm.xlu0 %2229, %v2188
      %v2231 = vpop.permute.xlu0 %2230
      %2234 = vset.pattern.permute.xlu0 0
      %2235 = vperm.xlu0 %2234, %v2189
      %v2236 = vpop.permute.xlu0 %2235
      %2239 = vset.pattern.permute.xlu0 0
      %2240 = vperm.xlu0 %2239, %v2190
      %v2241 = vpop.permute.xlu0 %2240
      %2244 = vset.pattern.permute.xlu0 0
      %2245 = vperm.xlu0 %2244, %v2191
      %v2246 = vpop.permute.xlu0 %2245
      %2249 = vset.pattern.permute.xlu0 0
      %2250 = vperm.xlu0 %2249, %v2192
      %v2251 = vpop.permute.xlu0 %2250
      %2254 = vset.pattern.permute.xlu0 0
      %2255 = vperm.xlu0 %2254, %v2193
      %v2256 = vpop.permute.xlu0 %2255
      %2259 = vset.pattern.permute.xlu0 0
      %2260 = vperm.xlu0 %2259, %v2194
      %v2261 = vpop.permute.xlu0 %2260
      %2264 = vset.pattern.permute.xlu0 0
      %2265 = vperm.xlu0 %2264, %v2195
      %v2266 = vpop.permute.xlu0 %2265
      %2269 = vset.pattern.permute.xlu0 0
      %2270 = vperm.xlu0 %2269, %v2196
      %v2271 = vpop.permute.xlu0 %2270
      %2274 = vset.pattern.permute.xlu0 0
      %2275 = vperm.xlu0 %2274, %v2197
      %v2276 = vpop.permute.xlu0 %2275
      %v2278 = vmul.f32 %v2201, %v2120
      %v2279 = vmul.f32 %v2206, %v2123
      %v2280 = vmul.f32 %v2211, %v2128
      %v2281 = vmul.f32 %v2216, %v2131
      %v2282 = vmul.f32 %v2221, %v2136
      %v2283 = vmul.f32 %v2226, %v2139
      %v2284 = vmul.f32 %v2231, %v2144
      %v2285 = vmul.f32 %v2236, %v2147
      %v2286 = vmul.f32 %v2241, %v2152
      %v2287 = vmul.f32 %v2246, %v2155
      %v2288 = vmul.f32 %v2251, %v2160
      %v2289 = vmul.f32 %v2256, %v2163
      %v2290 = vmul.f32 %v2261, %v2168
      %v2291 = vmul.f32 %v2266, %v2171
      %v2292 = vmul.f32 %v2271, %v2176
      %v2293 = vmul.f32 %v2276, %v2179
      %v2294 = vld [vmem:[%s14] sm:$0xff]
      %v2295 = vld [vmem:[%s14 + $0x8] sm:$0xff]
      %v2296 = vld [vmem:[%s14 + $0x10] sm:$0xff]
      %v2297 = vld [vmem:[%s14 + $0x18] sm:$0xff]
      %v2298 = vld [vmem:[%s14 + $0x20] sm:$0xff]
      %v2299 = vld [vmem:[%s14 + $0x28] sm:$0xff]
      %v2300 = vld [vmem:[%s14 + $0x30] sm:$0xff]
      %v2301 = vld [vmem:[%s14 + $0x38] sm:$0xff]
      %v2302 = vld [vmem:[%s14 + $0x40] sm:$0xff]
      %v2303 = vld [vmem:[%s14 + $0x48] sm:$0xff]
      %v2304 = vld [vmem:[%s14 + $0x50] sm:$0xff]
      %v2305 = vld [vmem:[%s14 + $0x58] sm:$0xff]
      %v2306 = vld [vmem:[%s14 + $0x60] sm:$0xff]
      %v2307 = vld [vmem:[%s14 + $0x68] sm:$0xff]
      %v2308 = vld [vmem:[%s14 + $0x70] sm:$0xff]
      %v2309 = vld [vmem:[%s14 + $0x78] sm:$0xff]
      %2311 = vset.pattern.permute.xlu0 0
      %2312 = vperm.xlu0 %2311, %v2294
      %v2313 = vpop.permute.xlu0 %2312
      %2316 = vset.pattern.permute.xlu0 0
      %2317 = vperm.xlu0 %2316, %v2295
      %v2318 = vpop.permute.xlu0 %2317
      %2321 = vset.pattern.permute.xlu0 0
      %2322 = vperm.xlu0 %2321, %v2296
      %v2323 = vpop.permute.xlu0 %2322
      %2326 = vset.pattern.permute.xlu0 0
      %2327 = vperm.xlu0 %2326, %v2297
      %v2328 = vpop.permute.xlu0 %2327
      %2331 = vset.pattern.permute.xlu0 0
      %2332 = vperm.xlu0 %2331, %v2298
      %v2333 = vpop.permute.xlu0 %2332
      %2336 = vset.pattern.permute.xlu0 0
      %2337 = vperm.xlu0 %2336, %v2299
      %v2338 = vpop.permute.xlu0 %2337
      %2341 = vset.pattern.permute.xlu0 0
      %2342 = vperm.xlu0 %2341, %v2300
      %v2343 = vpop.permute.xlu0 %2342
      %2346 = vset.pattern.permute.xlu0 0
      %2347 = vperm.xlu0 %2346, %v2301
      %v2348 = vpop.permute.xlu0 %2347
      %2351 = vset.pattern.permute.xlu0 0
      %2352 = vperm.xlu0 %2351, %v2302
      %v2353 = vpop.permute.xlu0 %2352
      %2356 = vset.pattern.permute.xlu0 0
      %2357 = vperm.xlu0 %2356, %v2303
      %v2358 = vpop.permute.xlu0 %2357
      %2361 = vset.pattern.permute.xlu0 0
      %2362 = vperm.xlu0 %2361, %v2304
      %v2363 = vpop.permute.xlu0 %2362
      %2366 = vset.pattern.permute.xlu0 0
      %2367 = vperm.xlu0 %2366, %v2305
      %v2368 = vpop.permute.xlu0 %2367
      %2371 = vset.pattern.permute.xlu0 0
      %2372 = vperm.xlu0 %2371, %v2306
      %v2373 = vpop.permute.xlu0 %2372
      %2376 = vset.pattern.permute.xlu0 0
      %2377 = vperm.xlu0 %2376, %v2307
      %v2378 = vpop.permute.xlu0 %2377
      %2381 = vset.pattern.permute.xlu0 0
      %2382 = vperm.xlu0 %2381, %v2308
      %v2383 = vpop.permute.xlu0 %2382
      %2386 = vset.pattern.permute.xlu0 0
      %2387 = vperm.xlu0 %2386, %v2309
      %v2388 = vpop.permute.xlu0 %2387
      %v2390 = vadd.f32 %v2278, %v2313
      %v2391 = vadd.f32 %v2279, %v2318
      %v2392 = vadd.f32 %v2280, %v2323
      %v2393 = vadd.f32 %v2281, %v2328
      %v2394 = vadd.f32 %v2282, %v2333
      %v2395 = vadd.f32 %v2283, %v2338
      %v2396 = vadd.f32 %v2284, %v2343
      %v2397 = vadd.f32 %v2285, %v2348
      %v2398 = vadd.f32 %v2286, %v2353
      %v2399 = vadd.f32 %v2287, %v2358
      %v2400 = vadd.f32 %v2288, %v2363
      %v2401 = vadd.f32 %v2289, %v2368
      %v2402 = vadd.f32 %v2290, %v2373
      %v2403 = vadd.f32 %v2291, %v2378
      %v2404 = vadd.f32 %v2292, %v2383
      %v2405 = vadd.f32 %v2293, %v2388
      %v2406 = vmax.f32 %v2390, 0.0
      %v2407 = vmax.f32 %v2391, 0.0
      %v2408 = vmax.f32 %v2392, 0.0
      %v2409 = vmax.f32 %v2393, 0.0
      %v2410 = vmax.f32 %v2394, 0.0
      %v2411 = vmax.f32 %v2395, 0.0
      %v2412 = vmax.f32 %v2396, 0.0
      %v2413 = vmax.f32 %v2397, 0.0
      %v2414 = vmax.f32 %v2398, 0.0
      %v2415 = vmax.f32 %v2399, 0.0
      %v2416 = vmax.f32 %v2400, 0.0
      %v2417 = vmax.f32 %v2401, 0.0
      %v2418 = vmax.f32 %v2402, 0.0
      %v2419 = vmax.f32 %v2403, 0.0
      %v2420 = vmax.f32 %v2404, 0.0
      %v2421 = vmax.f32 %v2405, 0.0
      %v2422 = vld [vmem:[%s16] sm:$0xff]
      %v2423 = vld [vmem:[%s16 + $0x8] sm:$0xff]
      %v2424 = vld [vmem:[%s16 + $0x10] sm:$0xff]
      %v2425 = vld [vmem:[%s16 + $0x18] sm:$0xff]
      %v2426 = vld [vmem:[%s16 + $0x20] sm:$0xff]
      %v2427 = vld [vmem:[%s16 + $0x28] sm:$0xff]
      %v2428 = vld [vmem:[%s16 + $0x30] sm:$0xff]
      %v2429 = vld [vmem:[%s16 + $0x38] sm:$0xff]
      %v2430 = vld [vmem:[%s16 + $0x40] sm:$0xff]
      %v2431 = vld [vmem:[%s16 + $0x48] sm:$0xff]
      %v2432 = vld [vmem:[%s16 + $0x50] sm:$0xff]
      %v2433 = vld [vmem:[%s16 + $0x58] sm:$0xff]
      %v2434 = vld [vmem:[%s16 + $0x60] sm:$0xff]
      %v2435 = vld [vmem:[%s16 + $0x68] sm:$0xff]
      %v2436 = vld [vmem:[%s16 + $0x70] sm:$0xff]
      %v2437 = vld [vmem:[%s16 + $0x78] sm:$0xff]
      %2438 = vrot.lane.b32.xlu0 %v2406, 1
      %v2439 = vpop.permute.xlu0 %2438
      %2440 = vrot.lane.b32.xlu0 %v2407, 1
      %v2441 = vpop.permute.xlu0 %2440
      %2442 = vrot.lane.b32.xlu0 %v2408, 1
      %v2443 = vpop.permute.xlu0 %2442
      %2444 = vrot.lane.b32.xlu0 %v2409, 1
      %v2445 = vpop.permute.xlu0 %2444
      %2446 = vrot.lane.b32.xlu0 %v2410, 1
      %v2447 = vpop.permute.xlu0 %2446
      %2448 = vrot.lane.b32.xlu0 %v2411, 1
      %v2449 = vpop.permute.xlu0 %2448
      %2450 = vrot.lane.b32.xlu0 %v2412, 1
      %v2451 = vpop.permute.xlu0 %2450
      %2452 = vrot.lane.b32.xlu0 %v2413, 1
      %v2453 = vpop.permute.xlu0 %2452
      %2454 = vrot.lane.b32.xlu0 %v2414, 1
      %v2455 = vpop.permute.xlu0 %2454
      %2456 = vrot.lane.b32.xlu0 %v2415, 1
      %v2457 = vpop.permute.xlu0 %2456
      %2458 = vrot.lane.b32.xlu0 %v2416, 1
      %v2459 = vpop.permute.xlu0 %2458
      %2460 = vrot.lane.b32.xlu0 %v2417, 1
      %v2461 = vpop.permute.xlu0 %2460
      %2462 = vrot.lane.b32.xlu0 %v2418, 1
      %v2463 = vpop.permute.xlu0 %2462
      %2464 = vrot.lane.b32.xlu0 %v2419, 1
      %v2465 = vpop.permute.xlu0 %2464
      %2466 = vrot.lane.b32.xlu0 %v2420, 1
      %v2467 = vpop.permute.xlu0 %2466
      %2468 = vrot.lane.b32.xlu0 %v2421, 1
      %v2469 = vpop.permute.xlu0 %2468
      %v2470 = vmul.f32 %v2439, %v801
      %v2471 = vmul.f32 %v2441, %v801
      %v2472 = vmul.f32 %v2443, %v801
      %v2473 = vmul.f32 %v2445, %v801
      %v2474 = vmul.f32 %v2447, %v801
      %v2475 = vmul.f32 %v2449, %v801
      %v2476 = vmul.f32 %v2451, %v801
      %v2477 = vmul.f32 %v2453, %v801
      %v2478 = vmul.f32 %v2455, %v801
      %v2479 = vmul.f32 %v2457, %v801
      %v2480 = vmul.f32 %v2459, %v801
      %v2481 = vmul.f32 %v2461, %v801
      %v2482 = vmul.f32 %v2463, %v801
      %v2483 = vmul.f32 %v2465, %v801
      %v2484 = vmul.f32 %v2467, %v801
      %v2485 = vmul.f32 %v2469, %v801
      %2486 = vrot.lane.b32.xlu0 %v2406, 127
      %v2487 = vpop.permute.xlu0 %2486
      %2488 = vrot.lane.b32.xlu0 %v2407, 127
      %v2489 = vpop.permute.xlu0 %2488
      %2490 = vrot.lane.b32.xlu0 %v2408, 127
      %v2491 = vpop.permute.xlu0 %2490
      %2492 = vrot.lane.b32.xlu0 %v2409, 127
      %v2493 = vpop.permute.xlu0 %2492
      %2494 = vrot.lane.b32.xlu0 %v2410, 127
      %v2495 = vpop.permute.xlu0 %2494
      %2496 = vrot.lane.b32.xlu0 %v2411, 127
      %v2497 = vpop.permute.xlu0 %2496
      %2498 = vrot.lane.b32.xlu0 %v2412, 127
      %v2499 = vpop.permute.xlu0 %2498
      %2500 = vrot.lane.b32.xlu0 %v2413, 127
      %v2501 = vpop.permute.xlu0 %2500
      %2502 = vrot.lane.b32.xlu0 %v2414, 127
      %v2503 = vpop.permute.xlu0 %2502
      %2504 = vrot.lane.b32.xlu0 %v2415, 127
      %v2505 = vpop.permute.xlu0 %2504
      %2506 = vrot.lane.b32.xlu0 %v2416, 127
      %v2507 = vpop.permute.xlu0 %2506
      %2508 = vrot.lane.b32.xlu0 %v2417, 127
      %v2509 = vpop.permute.xlu0 %2508
      %2510 = vrot.lane.b32.xlu0 %v2418, 127
      %v2511 = vpop.permute.xlu0 %2510
      %2512 = vrot.lane.b32.xlu0 %v2419, 127
      %v2513 = vpop.permute.xlu0 %2512
      %2514 = vrot.lane.b32.xlu0 %v2420, 127
      %v2515 = vpop.permute.xlu0 %2514
      %2516 = vrot.lane.b32.xlu0 %v2421, 127
      %v2517 = vpop.permute.xlu0 %2516
      %v2518 = vmul.f32 %v2487, %v804
      %v2519 = vmul.f32 %v2489, %v804
      %v2520 = vmul.f32 %v2491, %v804
      %v2521 = vmul.f32 %v2493, %v804
      %v2522 = vmul.f32 %v2495, %v804
      %v2523 = vmul.f32 %v2497, %v804
      %v2524 = vmul.f32 %v2499, %v804
      %v2525 = vmul.f32 %v2501, %v804
      %v2526 = vmul.f32 %v2503, %v804
      %v2527 = vmul.f32 %v2505, %v804
      %v2528 = vmul.f32 %v2507, %v804
      %v2529 = vmul.f32 %v2509, %v804
      %v2530 = vmul.f32 %v2511, %v804
      %v2531 = vmul.f32 %v2513, %v804
      %v2532 = vmul.f32 %v2515, %v804
      %v2533 = vmul.f32 %v2517, %v804
      %v2534 = vpack.c.bf16 %v2471, %v2470
      %v2535 = vpack.c.bf16 %v2473, %v2472
      %v2536 = vpack.c.bf16 %v2475, %v2474
      %v2537 = vpack.c.bf16 %v2477, %v2476
      %v2538 = vpack.c.bf16 %v2479, %v2478
      %v2539 = vpack.c.bf16 %v2481, %v2480
      %v2540 = vpack.c.bf16 %v2483, %v2482
      %v2541 = vpack.c.bf16 %v2485, %v2484
      %v2542 = vpack.c.bf16 %v2407, %v2406
      %v2543 = vpack.c.bf16 %v2409, %v2408
      %v2544 = vpack.c.bf16 %v2411, %v2410
      %v2545 = vpack.c.bf16 %v2413, %v2412
      %v2546 = vpack.c.bf16 %v2415, %v2414
      %v2547 = vpack.c.bf16 %v2417, %v2416
      %v2548 = vpack.c.bf16 %v2419, %v2418
      %v2549 = vpack.c.bf16 %v2421, %v2420
      %v2550 = vpack.c.bf16 %v2519, %v2518
      %v2551 = vpack.c.bf16 %v2521, %v2520
      %v2552 = vpack.c.bf16 %v2523, %v2522
      %v2553 = vpack.c.bf16 %v2525, %v2524
      %v2554 = vpack.c.bf16 %v2527, %v2526
      %v2555 = vpack.c.bf16 %v2529, %v2528
      %v2556 = vpack.c.bf16 %v2531, %v2530
      %v2557 = vpack.c.bf16 %v2533, %v2532
      %v2558 = vld [vmem:[%s15] sm:$0xff]
      %v2559 = vld [vmem:[%s15 + $0x8] sm:$0xf]
      %v2560 = vld [vmem:[%s15 + $0xc] sm:$0xff]
      %v2561 = vld [vmem:[%s15 + $0x14] sm:$0xf]
      %v2562 = vld [vmem:[%s15 + $0x18] sm:$0xff]
      %v2563 = vld [vmem:[%s15 + $0x20] sm:$0xf]
      %v2564 = vld [vmem:[%s15 + $0x24] sm:$0xff]
      %v2565 = vld [vmem:[%s15 + $0x2c] sm:$0xf]
      %v2566 = vld [vmem:[%s15 + $0x30] sm:$0xff]
      %v2567 = vld [vmem:[%s15 + $0x38] sm:$0xf]
      %v2568 = vld [vmem:[%s15 + $0x3c] sm:$0xff]
      %v2569 = vld [vmem:[%s15 + $0x44] sm:$0xf]
      %v2570 = vld [vmem:[%s15 + $0x48] sm:$0xff]
      %v2571 = vld [vmem:[%s15 + $0x50] sm:$0xf]
      %v2572 = vld [vmem:[%s15 + $0x54] sm:$0xff]
      %v2573 = vld [vmem:[%s15 + $0x5c] sm:$0xf]
      %v2574 = vld [vmem:[%s15 + $0x60] sm:$0xff]
      %v2575 = vld [vmem:[%s15 + $0x68] sm:$0xf]
      %v2576 = vld [vmem:[%s15 + $0x6c] sm:$0xff]
      %v2577 = vld [vmem:[%s15 + $0x74] sm:$0xf]
      %v2578 = vld [vmem:[%s15 + $0x78] sm:$0xff]
      %v2579 = vld [vmem:[%s15 + $0x80] sm:$0xf]
      %v2580 = vld [vmem:[%s15 + $0x84] sm:$0xff]
      %v2581 = vld [vmem:[%s15 + $0x8c] sm:$0xf]
      %v2582 = vld [vmem:[%s15 + $0x90] sm:$0xff]
      %v2583 = vld [vmem:[%s15 + $0x98] sm:$0xf]
      %v2584 = vld [vmem:[%s15 + $0x9c] sm:$0xff]
      %v2585 = vld [vmem:[%s15 + $0xa4] sm:$0xf]
      %v2586 = vld [vmem:[%s15 + $0xa8] sm:$0xff]
      %v2587 = vld [vmem:[%s15 + $0xb0] sm:$0xf]
      %v2588 = vld [vmem:[%s15 + $0xb4] sm:$0xff]
      %v2589 = vld [vmem:[%s15 + $0xbc] sm:$0xf]
      %v2622 = vunpack.c.l.b16 %v2558
      %v2623 = vunpack.c.h.b16 %v2558
      %v2624 = vunpack.c.l.b16 %v2559
      %v2625 = vunpack.c.l.b16 %v2560
      %v2626 = vunpack.c.h.b16 %v2560
      %v2627 = vunpack.c.l.b16 %v2561
      %v2628 = vunpack.c.l.b16 %v2562
      %v2629 = vunpack.c.h.b16 %v2562
      %v2630 = vunpack.c.l.b16 %v2563
      %v2631 = vunpack.c.l.b16 %v2564
      %v2632 = vunpack.c.h.b16 %v2564
      %v2633 = vunpack.c.l.b16 %v2565
      %v2634 = vunpack.c.l.b16 %v2566
      %v2635 = vunpack.c.h.b16 %v2566
      %v2636 = vunpack.c.l.b16 %v2567
      %v2637 = vunpack.c.l.b16 %v2568
      %v2638 = vunpack.c.h.b16 %v2568
      %v2639 = vunpack.c.l.b16 %v2569
      %v2640 = vunpack.c.l.b16 %v2570
      %v2641 = vunpack.c.h.b16 %v2570
      %v2642 = vunpack.c.l.b16 %v2571
      %v2643 = vunpack.c.l.b16 %v2572
      %v2644 = vunpack.c.h.b16 %v2572
      %v2645 = vunpack.c.l.b16 %v2573
      %v2646 = vunpack.c.l.b16 %v2574
      %v2647 = vunpack.c.h.b16 %v2574
      %v2648 = vunpack.c.l.b16 %v2575
      %v2649 = vunpack.c.l.b16 %v2576
      %v2650 = vunpack.c.h.b16 %v2576
      %v2651 = vunpack.c.l.b16 %v2577
      %v2652 = vunpack.c.l.b16 %v2578
      %v2653 = vunpack.c.h.b16 %v2578
      %v2654 = vunpack.c.l.b16 %v2579
      %v2655 = vunpack.c.l.b16 %v2580
      %v2656 = vunpack.c.h.b16 %v2580
      %v2657 = vunpack.c.l.b16 %v2581
      %v2658 = vunpack.c.l.b16 %v2582
      %v2659 = vunpack.c.h.b16 %v2582
      %v2660 = vunpack.c.l.b16 %v2583
      %v2661 = vunpack.c.l.b16 %v2584
      %v2662 = vunpack.c.h.b16 %v2584
      %v2663 = vunpack.c.l.b16 %v2585
      %v2664 = vunpack.c.l.b16 %v2586
      %v2665 = vunpack.c.h.b16 %v2586
      %v2666 = vunpack.c.l.b16 %v2587
      %v2667 = vunpack.c.l.b16 %v2588
      %v2668 = vunpack.c.h.b16 %v2588
      %v2669 = vunpack.c.l.b16 %v2589
      %v2670 = vpack.c.b16 %v2625, %v2622
      %v2671 = vpack.c.b16 %v2626, %v2623
      %v2672 = vpack.c.b16 %v2627, %v2624
      %v2673 = vpack.c.b16 %v2631, %v2628
      %v2674 = vpack.c.b16 %v2632, %v2629
      %v2675 = vpack.c.b16 %v2633, %v2630
      %v2676 = vpack.c.b16 %v2637, %v2634
      %v2677 = vpack.c.b16 %v2638, %v2635
      %v2678 = vpack.c.b16 %v2639, %v2636
      %v2679 = vpack.c.b16 %v2643, %v2640
      %v2680 = vpack.c.b16 %v2644, %v2641
      %v2681 = vpack.c.b16 %v2645, %v2642
      %v2682 = vpack.c.b16 %v2649, %v2646
      %v2683 = vpack.c.b16 %v2650, %v2647
      %v2684 = vpack.c.b16 %v2651, %v2648
      %v2685 = vpack.c.b16 %v2655, %v2652
      %v2686 = vpack.c.b16 %v2656, %v2653
      %v2687 = vpack.c.b16 %v2657, %v2654
      %v2688 = vpack.c.b16 %v2661, %v2658
      %v2689 = vpack.c.b16 %v2662, %v2659
      %v2690 = vpack.c.b16 %v2663, %v2660
      %v2691 = vpack.c.b16 %v2667, %v2664
      %v2692 = vpack.c.b16 %v2668, %v2665
      %v2693 = vpack.c.b16 %v2669, %v2666
      %2718 = vmatprep.subr.bf16.mxu0 0
      %2719 = vmatpush1.bf16.msra.mxu0 %v2534
      %2720 = vmatprep.subr.bf16.mxu0 0
      %2721 = vmatpush1.bf16.msra.mxu0 %v2535
      %2722 = vmatprep.subr.bf16.mxu0 0
      %2723 = vmatpush1.bf16.msra.mxu0 %v2536
      %2724 = vmatprep.subr.bf16.mxu0 0
      %2725 = vmatpush1.bf16.msra.mxu0 %v2537
      %2726 = vmatprep.subr.bf16.mxu0 0
      %2727 = vmatpush1.bf16.msra.mxu0 %v2538
      %2728 = vmatprep.subr.bf16.mxu0 0
      %2729 = vmatpush1.bf16.msra.mxu0 %v2539
      %2730 = vmatprep.subr.bf16.mxu0 0
      %2731 = vmatpush1.bf16.msra.mxu0 %v2540
      %2732 = vmatprep.subr.bf16.mxu0 0
      %2733 = vmatpush1.bf16.msra.mxu0 %v2541
      %2734 = vmatprep.subr.bf16.mxu0 0
      %2735 = vmatpush1.bf16.msra.mxu0 %v2542
      %2736 = vmatprep.subr.bf16.mxu0 0
      %2737 = vmatpush1.bf16.msra.mxu0 %v2543
      %2738 = vmatprep.subr.bf16.mxu0 0
      %2739 = vmatpush1.bf16.msra.mxu0 %v2544
      %2740 = vmatprep.subr.bf16.mxu0 0
      %2741 = vmatpush1.bf16.msra.mxu0 %v2545
      %2742 = vmatprep.subr.bf16.mxu0 0
      %2743 = vmatpush1.bf16.msra.mxu0 %v2546
      %2744 = vmatprep.subr.bf16.mxu0 0
      %2745 = vmatpush1.bf16.msra.mxu0 %v2547
      %2746 = vmatprep.subr.bf16.mxu0 0
      %2747 = vmatpush1.bf16.msra.mxu0 %v2548
      %2748 = vmatprep.subr.bf16.mxu0 0
      %2749 = vmatpush1.bf16.msra.mxu0 %v2549
      %2750 = vmatprep.mubr.bf16.mxu0 %v2671
      %2751 = vmatmul.mubr.bf16.gmra.mrb[0].mxu0 %v2670
      %v2752 = vpop.f32.mrb[0].mxu0
      %v2753 = vadd.f32 0.0, %v2752
      %v2754 = vpop.f32.mrb[0].mxu0
      %v2755 = vpop.f32.mrb[0].mxu0
      %v2756 = vadd.f32 0.0, %v2755
      %v2757 = vpop.f32.mrb[0].mxu0
      %2758 = vmatprep.mubr.bf16.mxu0 %v2674
      %2759 = vmatmul.mubr.bf16.gmra.mrb[0].mxu0 %v2673
      %v2760 = vpop.f32.mrb[0].mxu0
      %v2761 = vadd.f32 0.0, %v2760
      %v2762 = vpop.f32.mrb[0].mxu0
      %v2763 = vpop.f32.mrb[0].mxu0
      %v2764 = vadd.f32 0.0, %v2763
      %v2765 = vpop.f32.mrb[0].mxu0
      %2766 = vmatprep.mubr.bf16.mxu0 %v2677
      %2767 = vmatmul.mubr.bf16.gmra.mrb[0].mxu0 %v2676
      %v2768 = vpop.f32.mrb[0].mxu0
      %v2769 = vadd.f32 0.0, %v2768
      %v2770 = vpop.f32.mrb[0].mxu0
      %v2771 = vpop.f32.mrb[0].mxu0
      %v2772 = vadd.f32 0.0, %v2771
      %v2773 = vpop.f32.mrb[0].mxu0
      %2774 = vmatprep.mubr.bf16.mxu0 %v2680
      %2775 = vmatmul.mubr.bf16.gmra.mrb[0].mxu0 %v2679
      %v2776 = vpop.f32.mrb[0].mxu0
      %v2777 = vadd.f32 0.0, %v2776
      %v2778 = vpop.f32.mrb[0].mxu0
      %v2779 = vpop.f32.mrb[0].mxu0
      %v2780 = vadd.f32 0.0, %v2779
      %v2781 = vpop.f32.mrb[0].mxu0
      %2782 = vmatprep.mubr.bf16.mxu0 %v2683
      %2783 = vmatmul.mubr.bf16.gmra.mrb[0].mxu0 %v2682
      %v2784 = vpop.f32.mrb[0].mxu0
      %v2785 = vadd.f32 0.0, %v2784
      %v2786 = vpop.f32.mrb[0].mxu0
      %v2787 = vpop.f32.mrb[0].mxu0
      %v2788 = vadd.f32 0.0, %v2787
      %v2789 = vpop.f32.mrb[0].mxu0
      %2790 = vmatprep.mubr.bf16.mxu0 %v2686
      %2791 = vmatmul.mubr.bf16.gmra.mrb[0].mxu0 %v2685
      %v2792 = vpop.f32.mrb[0].mxu0
      %v2793 = vadd.f32 0.0, %v2792
      %v2794 = vpop.f32.mrb[0].mxu0
      %v2795 = vpop.f32.mrb[0].mxu0
      %v2796 = vadd.f32 0.0, %v2795
      %v2797 = vpop.f32.mrb[0].mxu0
      %2798 = vmatprep.mubr.bf16.mxu0 %v2689
      %2799 = vmatmul.mubr.bf16.gmra.mrb[0].mxu0 %v2688
      %v2800 = vpop.f32.mrb[0].mxu0
      %v2801 = vadd.f32 0.0, %v2800
      %v2802 = vpop.f32.mrb[0].mxu0
      %v2803 = vpop.f32.mrb[0].mxu0
      %v2804 = vadd.f32 0.0, %v2803
      %v2805 = vpop.f32.mrb[0].mxu0
      %2806 = vmatprep.mubr.bf16.mxu0 %v2692
      %2807 = vmatmul.mubr.bf16.gmra.mrb[0].mxu0 %v2691
      %v2808 = vpop.f32.mrb[0].mxu0
      %v2809 = vadd.f32 0.0, %v2808
      %v2810 = vpop.f32.mrb[0].mxu0
      %v2811 = vpop.f32.mrb[0].mxu0
      %v2812 = vadd.f32 0.0, %v2811
      %v2813 = vpop.f32.mrb[0].mxu0
      %2814 = vdwg.mxu0
      %2815 = vmatprep.subr.bf16.mxu0 0
      %2816 = vmatpush1.bf16.msra.mxu0 %v2550
      %2817 = vmatprep.subr.bf16.mxu0 0
      %2818 = vmatpush1.bf16.msra.mxu0 %v2551
      %2819 = vmatprep.subr.bf16.mxu0 0
      %2820 = vmatpush1.bf16.msra.mxu0 %v2552
      %2821 = vmatprep.subr.bf16.mxu0 0
      %2822 = vmatpush1.bf16.msra.mxu0 %v2553
      %2823 = vmatprep.subr.bf16.mxu0 0
      %2824 = vmatpush1.bf16.msra.mxu0 %v2554
      %2825 = vmatprep.subr.bf16.mxu0 0
      %2826 = vmatpush1.bf16.msra.mxu0 %v2555
      %2827 = vmatprep.subr.bf16.mxu0 0
      %2828 = vmatpush1.bf16.msra.mxu0 %v2556
      %2829 = vmatprep.subr.bf16.mxu0 0
      %2830 = vmatpush1.bf16.msra.mxu0 %v2557
      %2831 = vmatprep.subr.bf16.mxu0 0
      %2832 = vmatpush1.bf16.msra.mxu0 0
      %2833 = vmatprep.subr.bf16.mxu0 0
      %2834 = vmatpush1.bf16.msra.mxu0 0
      %2835 = vmatprep.subr.bf16.mxu0 0
      %2836 = vmatpush1.bf16.msra.mxu0 0
      %2837 = vmatprep.subr.bf16.mxu0 0
      %2838 = vmatpush1.bf16.msra.mxu0 0
      %2839 = vmatprep.subr.bf16.mxu0 0
      %2840 = vmatpush1.bf16.msra.mxu0 0
      %2841 = vmatprep.subr.bf16.mxu0 0
      %2842 = vmatpush1.bf16.msra.mxu0 0
      %2843 = vmatprep.subr.bf16.mxu0 0
      %2844 = vmatpush1.bf16.msra.mxu0 0
      %2845 = vmatprep.subr.bf16.mxu0 0
      %2846 = vmatpush1.bf16.msra.mxu0 0
      %2847 = vmatprep.mubr.bf16.mxu0 0
      %2848 = vmatmul.mubr.bf16.gmra.mrb[0].mxu0 %v2672
      %v2849 = vpop.f32.mrb[0].mxu0
      %v2850 = vadd.f32 %v2753, %v2849
      %v2851 = vpop.f32.mrb[0].mxu0
      %v2852 = vpop.f32.mrb[0].mxu0
      %v2853 = vadd.f32 %v2756, %v2852
      %v2854 = vpop.f32.mrb[0].mxu0
      %2855 = vmatprep.mubr.bf16.mxu0 0
      %2856 = vmatmul.mubr.bf16.gmra.mrb[0].mxu0 %v2675
      %v2857 = vpop.f32.mrb[0].mxu0
      %v2858 = vadd.f32 %v2761, %v2857
      %v2859 = vpop.f32.mrb[0].mxu0
      %v2860 = vpop.f32.mrb[0].mxu0
      %v2861 = vadd.f32 %v2764, %v2860
      %v2862 = vpop.f32.mrb[0].mxu0
      %2863 = vmatprep.mubr.bf16.mxu0 0
      %2864 = vmatmul.mubr.bf16.gmra.mrb[0].mxu0 %v2678
      %v2865 = vpop.f32.mrb[0].mxu0
      %v2866 = vadd.f32 %v2769, %v2865
      %v2867 = vpop.f32.mrb[0].mxu0
      %v2868 = vpop.f32.mrb[0].mxu0
      %v2869 = vadd.f32 %v2772, %v2868
      %v2870 = vpop.f32.mrb[0].mxu0
      %2871 = vmatprep.mubr.bf16.mxu0 0
      %2872 = vmatmul.mubr.bf16.gmra.mrb[0].mxu0 %v2681
      %v2873 = vpop.f32.mrb[0].mxu0
      %v2874 = vadd.f32 %v2777, %v2873
      %v2875 = vpop.f32.mrb[0].mxu0
      %v2876 = vpop.f32.mrb[0].mxu0
      %v2877 = vadd.f32 %v2780, %v2876
      %v2878 = vpop.f32.mrb[0].mxu0
      %2879 = vmatprep.mubr.bf16.mxu0 0
      %2880 = vmatmul.mubr.bf16.gmra.mrb[0].mxu0 %v2684
      %v2881 = vpop.f32.mrb[0].mxu0
      %v2882 = vadd.f32 %v2785, %v2881
      %v2883 = vpop.f32.mrb[0].mxu0
      %v2884 = vpop.f32.mrb[0].mxu0
      %v2885 = vadd.f32 %v2788, %v2884
      %v2886 = vpop.f32.mrb[0].mxu0
      %2887 = vmatprep.mubr.bf16.mxu0 0
      %2888 = vmatmul.mubr.bf16.gmra.mrb[0].mxu0 %v2687
      %v2889 = vpop.f32.mrb[0].mxu0
      %v2890 = vadd.f32 %v2793, %v2889
      %v2891 = vpop.f32.mrb[0].mxu0
      %v2892 = vpop.f32.mrb[0].mxu0
      %v2893 = vadd.f32 %v2796, %v2892
      %v2894 = vpop.f32.mrb[0].mxu0
      %2895 = vmatprep.mubr.bf16.mxu0 0
      %2896 = vmatmul.mubr.bf16.gmra.mrb[0].mxu0 %v2690
      %v2897 = vpop.f32.mrb[0].mxu0
      %v2898 = vadd.f32 %v2801, %v2897
      %v2899 = vpop.f32.mrb[0].mxu0
      %v2900 = vpop.f32.mrb[0].mxu0
      %v2901 = vadd.f32 %v2804, %v2900
      %v2902 = vpop.f32.mrb[0].mxu0
      %2903 = vmatprep.mubr.bf16.mxu0 0
      %2904 = vmatmul.mubr.bf16.gmra.mrb[0].mxu0 %v2693
      %v2905 = vpop.f32.mrb[0].mxu0
      %v2906 = vadd.f32 %v2809, %v2905
      %v2907 = vpop.f32.mrb[0].mxu0
      %v2908 = vpop.f32.mrb[0].mxu0
      %v2909 = vadd.f32 %v2812, %v2908
      %v2910 = vpop.f32.mrb[0].mxu0
      %2911 = vdwg.mxu0
      %2913 = vset.pattern.permute.xlu0 0
      %2914 = vperm.xlu0 %2913, %v2422
      %v2915 = vpop.permute.xlu0 %2914
      %2918 = vset.pattern.permute.xlu0 0
      %2919 = vperm.xlu0 %2918, %v2423
      %v2920 = vpop.permute.xlu0 %2919
      %2923 = vset.pattern.permute.xlu0 0
      %2924 = vperm.xlu0 %2923, %v2424
      %v2925 = vpop.permute.xlu0 %2924
      %2928 = vset.pattern.permute.xlu0 0
      %2929 = vperm.xlu0 %2928, %v2425
      %v2930 = vpop.permute.xlu0 %2929
      %2933 = vset.pattern.permute.xlu0 0
      %2934 = vperm.xlu0 %2933, %v2426
      %v2935 = vpop.permute.xlu0 %2934
      %2938 = vset.pattern.permute.xlu0 0
      %2939 = vperm.xlu0 %2938, %v2427
      %v2940 = vpop.permute.xlu0 %2939
      %2943 = vset.pattern.permute.xlu0 0
      %2944 = vperm.xlu0 %2943, %v2428
      %v2945 = vpop.permute.xlu0 %2944
      %2948 = vset.pattern.permute.xlu0 0
      %2949 = vperm.xlu0 %2948, %v2429
      %v2950 = vpop.permute.xlu0 %2949
      %2953 = vset.pattern.permute.xlu0 0
      %2954 = vperm.xlu0 %2953, %v2430
      %v2955 = vpop.permute.xlu0 %2954
      %2958 = vset.pattern.permute.xlu0 0
      %2959 = vperm.xlu0 %2958, %v2431
      %v2960 = vpop.permute.xlu0 %2959
      %2963 = vset.pattern.permute.xlu0 0
      %2964 = vperm.xlu0 %2963, %v2432
      %v2965 = vpop.permute.xlu0 %2964
      %2968 = vset.pattern.permute.xlu0 0
      %2969 = vperm.xlu0 %2968, %v2433
      %v2970 = vpop.permute.xlu0 %2969
      %2973 = vset.pattern.permute.xlu0 0
      %2974 = vperm.xlu0 %2973, %v2434
      %v2975 = vpop.permute.xlu0 %2974
      %2978 = vset.pattern.permute.xlu0 0
      %2979 = vperm.xlu0 %2978, %v2435
      %v2980 = vpop.permute.xlu0 %2979
      %2983 = vset.pattern.permute.xlu0 0
      %2984 = vperm.xlu0 %2983, %v2436
      %v2985 = vpop.permute.xlu0 %2984
      %2988 = vset.pattern.permute.xlu0 0
      %2989 = vperm.xlu0 %2988, %v2437
      %v2990 = vpop.permute.xlu0 %2989
      %v2992 = vmul.f32 %v2915, %v2850
      %v2993 = vmul.f32 %v2920, %v2853
      %v2994 = vmul.f32 %v2925, %v2858
      %v2995 = vmul.f32 %v2930, %v2861
      %v2996 = vmul.f32 %v2935, %v2866
      %v2997 = vmul.f32 %v2940, %v2869
      %v2998 = vmul.f32 %v2945, %v2874
      %v2999 = vmul.f32 %v2950, %v2877
      %v3000 = vmul.f32 %v2955, %v2882
      %v3001 = vmul.f32 %v2960, %v2885
      %v3002 = vmul.f32 %v2965, %v2890
      %v3003 = vmul.f32 %v2970, %v2893
      %v3004 = vmul.f32 %v2975, %v2898
      %v3005 = vmul.f32 %v2980, %v2901
      %v3006 = vmul.f32 %v2985, %v2906
      %v3007 = vmul.f32 %v2990, %v2909
      %v3008 = vld [vmem:[%s17] sm:$0xff]
      %v3009 = vld [vmem:[%s17 + $0x8] sm:$0xff]
      %v3010 = vld [vmem:[%s17 + $0x10] sm:$0xff]
      %v3011 = vld [vmem:[%s17 + $0x18] sm:$0xff]
      %v3012 = vld [vmem:[%s17 + $0x20] sm:$0xff]
      %v3013 = vld [vmem:[%s17 + $0x28] sm:$0xff]
      %v3014 = vld [vmem:[%s17 + $0x30] sm:$0xff]
      %v3015 = vld [vmem:[%s17 + $0x38] sm:$0xff]
      %v3016 = vld [vmem:[%s17 + $0x40] sm:$0xff]
      %v3017 = vld [vmem:[%s17 + $0x48] sm:$0xff]
      %v3018 = vld [vmem:[%s17 + $0x50] sm:$0xff]
      %v3019 = vld [vmem:[%s17 + $0x58] sm:$0xff]
      %v3020 = vld [vmem:[%s17 + $0x60] sm:$0xff]
      %v3021 = vld [vmem:[%s17 + $0x68] sm:$0xff]
      %v3022 = vld [vmem:[%s17 + $0x70] sm:$0xff]
      %v3023 = vld [vmem:[%s17 + $0x78] sm:$0xff]
      %3025 = vset.pattern.permute.xlu0 0
      %3026 = vperm.xlu0 %3025, %v3008
      %v3027 = vpop.permute.xlu0 %3026
      %3030 = vset.pattern.permute.xlu0 0
      %3031 = vperm.xlu0 %3030, %v3009
      %v3032 = vpop.permute.xlu0 %3031
      %3035 = vset.pattern.permute.xlu0 0
      %3036 = vperm.xlu0 %3035, %v3010
      %v3037 = vpop.permute.xlu0 %3036
      %3040 = vset.pattern.permute.xlu0 0
      %3041 = vperm.xlu0 %3040, %v3011
      %v3042 = vpop.permute.xlu0 %3041
      %3045 = vset.pattern.permute.xlu0 0
      %3046 = vperm.xlu0 %3045, %v3012
      %v3047 = vpop.permute.xlu0 %3046
      %3050 = vset.pattern.permute.xlu0 0
      %3051 = vperm.xlu0 %3050, %v3013
      %v3052 = vpop.permute.xlu0 %3051
      %3055 = vset.pattern.permute.xlu0 0
      %3056 = vperm.xlu0 %3055, %v3014
      %v3057 = vpop.permute.xlu0 %3056
      %3060 = vset.pattern.permute.xlu0 0
      %3061 = vperm.xlu0 %3060, %v3015
      %v3062 = vpop.permute.xlu0 %3061
      %3065 = vset.pattern.permute.xlu0 0
      %3066 = vperm.xlu0 %3065, %v3016
      %v3067 = vpop.permute.xlu0 %3066
      %3070 = vset.pattern.permute.xlu0 0
      %3071 = vperm.xlu0 %3070, %v3017
      %v3072 = vpop.permute.xlu0 %3071
      %3075 = vset.pattern.permute.xlu0 0
      %3076 = vperm.xlu0 %3075, %v3018
      %v3077 = vpop.permute.xlu0 %3076
      %3080 = vset.pattern.permute.xlu0 0
      %3081 = vperm.xlu0 %3080, %v3019
      %v3082 = vpop.permute.xlu0 %3081
      %3085 = vset.pattern.permute.xlu0 0
      %3086 = vperm.xlu0 %3085, %v3020
      %v3087 = vpop.permute.xlu0 %3086
      %3090 = vset.pattern.permute.xlu0 0
      %3091 = vperm.xlu0 %3090, %v3021
      %v3092 = vpop.permute.xlu0 %3091
      %3095 = vset.pattern.permute.xlu0 0
      %3096 = vperm.xlu0 %3095, %v3022
      %v3097 = vpop.permute.xlu0 %3096
      %3100 = vset.pattern.permute.xlu0 0
      %3101 = vperm.xlu0 %3100, %v3023
      %v3102 = vpop.permute.xlu0 %3101
      %v3104 = vadd.f32 %v2992, %v3027
      %v3105 = vadd.f32 %v2993, %v3032
      %v3106 = vadd.f32 %v2994, %v3037
      %v3107 = vadd.f32 %v2995, %v3042
      %v3108 = vadd.f32 %v2996, %v3047
      %v3109 = vadd.f32 %v2997, %v3052
      %v3110 = vadd.f32 %v2998, %v3057
      %v3111 = vadd.f32 %v2999, %v3062
      %v3112 = vadd.f32 %v3000, %v3067
      %v3113 = vadd.f32 %v3001, %v3072
      %v3114 = vadd.f32 %v3002, %v3077
      %v3115 = vadd.f32 %v3003, %v3082
      %v3116 = vadd.f32 %v3004, %v3087
      %v3117 = vadd.f32 %v3005, %v3092
      %v3118 = vadd.f32 %v3006, %v3097
      %v3119 = vadd.f32 %v3007, %v3102
      %3120 = vst [vmem:[#allocation2] sm:$0xff] %v3104
      %3121 = vst [vmem:[#allocation2 + $0x8] sm:$0xff] %v3105
      %3122 = vst [vmem:[#allocation2 + $0x10] sm:$0xff] %v3106
      %3123 = vst [vmem:[#allocation2 + $0x18] sm:$0xff] %v3107
      %3124 = vst [vmem:[#allocation2 + $0x20] sm:$0xff] %v3108
      %3125 = vst [vmem:[#allocation2 + $0x28] sm:$0xff] %v3109
      %3126 = vst [vmem:[#allocation2 + $0x30] sm:$0xff] %v3110
      %3127 = vst [vmem:[#allocation2 + $0x38] sm:$0xff] %v3111
      %3128 = vst [vmem:[#allocation2 + $0x40] sm:$0xff] %v3112
      %3129 = vst [vmem:[#allocation2 + $0x48] sm:$0xff] %v3113
      %3130 = vst [vmem:[#allocation2 + $0x50] sm:$0xff] %v3114
      %3131 = vst [vmem:[#allocation2 + $0x58] sm:$0xff] %v3115
      %3132 = vst [vmem:[#allocation2 + $0x60] sm:$0xff] %v3116
      %3133 = vst [vmem:[#allocation2 + $0x68] sm:$0xff] %v3117
      %3134 = vst [vmem:[#allocation2 + $0x70] sm:$0xff] %v3118
      %3135 = vst [vmem:[#allocation2 + $0x78] sm:$0xff] %v3119
      %v3136 = vld [vmem:[#allocation2 + $0x20] sm:$0xff]
      %v3137 = vld [vmem:[#allocation2 + $0x28] sm:$0xff]
      %v3138 = vld [vmem:[#allocation2 + $0x30] sm:$0xff]
      %v3139 = vld [vmem:[#allocation2 + $0x38] sm:$0xff]
      %v3140 = vld [vmem:[#allocation2 + $0x40] sm:$0xff]
      %v3141 = vld [vmem:[#allocation2 + $0x48] sm:$0xff]
      %v3142 = vld [vmem:[#allocation2 + $0x50] sm:$0xff]
      %v3143 = vld [vmem:[#allocation2 + $0x58] sm:$0xff]
      %v3144 = vadd.f32 %v3136, %v1905
      %v3145 = vadd.f32 %v3137, %v1906
      %v3146 = vadd.f32 %v3138, %v1907
      %v3147 = vadd.f32 %v3139, %v1908
      %v3148 = vadd.f32 %v3140, %v1909
      %v3149 = vadd.f32 %v3141, %v1910
      %v3150 = vadd.f32 %v3142, %v1911
      %v3151 = vadd.f32 %v3143, %v1912
      %3152 = vst [vmem:[#allocation2 + $0x20] sm:$0xff] %v3144
      %3153 = vst [vmem:[#allocation2 + $0x28] sm:$0xff] %v3145
      %3154 = vst [vmem:[#allocation2 + $0x30] sm:$0xff] %v3146
      %3155 = vst [vmem:[#allocation2 + $0x38] sm:$0xff] %v3147
      %3156 = vst [vmem:[#allocation2 + $0x40] sm:$0xff] %v3148
      %3157 = vst [vmem:[#allocation2 + $0x48] sm:$0xff] %v3149
      %3158 = vst [vmem:[#allocation2 + $0x50] sm:$0xff] %v3150
      %3159 = vst [vmem:[#allocation2 + $0x58] sm:$0xff] %v3151
      %v3160 = vld [vmem:[#allocation2] sm:$0xff]
      %v3161 = vld [vmem:[#allocation2 + $0x8] sm:$0xff]
      %v3162 = vld [vmem:[#allocation2 + $0x10] sm:$0xff]
      %v3163 = vld [vmem:[#allocation2 + $0x18] sm:$0xff]
      %v3164 = vld [vmem:[#allocation2 + $0x20] sm:$0xff]
      %v3165 = vld [vmem:[#allocation2 + $0x28] sm:$0xff]
      %v3166 = vld [vmem:[#allocation2 + $0x30] sm:$0xff]
      %v3167 = vld [vmem:[#allocation2 + $0x38] sm:$0xff]
      %v3168 = vld [vmem:[#allocation2 + $0x40] sm:$0xff]
      %v3169 = vld [vmem:[#allocation2 + $0x48] sm:$0xff]
      %v3170 = vld [vmem:[#allocation2 + $0x50] sm:$0xff]
      %v3171 = vld [vmem:[#allocation2 + $0x58] sm:$0xff]
      %v3172 = vld [vmem:[#allocation2 + $0x60] sm:$0xff]
      %v3173 = vld [vmem:[#allocation2 + $0x68] sm:$0xff]
      %v3174 = vld [vmem:[#allocation2 + $0x70] sm:$0xff]
      %v3175 = vld [vmem:[#allocation2 + $0x78] sm:$0xff]
      %v3176 = vmax.f32 %v3160, 0.0
      %v3177 = vmax.f32 %v3161, 0.0
      %v3178 = vmax.f32 %v3162, 0.0
      %v3179 = vmax.f32 %v3163, 0.0
      %v3180 = vmax.f32 %v3164, 0.0
      %v3181 = vmax.f32 %v3165, 0.0
      %v3182 = vmax.f32 %v3166, 0.0
      %v3183 = vmax.f32 %v3167, 0.0
      %v3184 = vmax.f32 %v3168, 0.0
      %v3185 = vmax.f32 %v3169, 0.0
      %v3186 = vmax.f32 %v3170, 0.0
      %v3187 = vmax.f32 %v3171, 0.0
      %v3188 = vmax.f32 %v3172, 0.0
      %v3189 = vmax.f32 %v3173, 0.0
      %v3190 = vmax.f32 %v3174, 0.0
      %v3191 = vmax.f32 %v3175, 0.0
      %3192 = vrot.lane.b32.xlu0 %v3176, 1
      %v3193 = vpop.permute.xlu0 %3192
      %3194 = vrot.lane.b32.xlu0 %v3177, 1
      %v3195 = vpop.permute.xlu0 %3194
      %3196 = vrot.lane.b32.xlu0 %v3178, 1
      %v3197 = vpop.permute.xlu0 %3196
      %3198 = vrot.lane.b32.xlu0 %v3179, 1
      %v3199 = vpop.permute.xlu0 %3198
      %3200 = vrot.lane.b32.xlu0 %v3180, 1
      %v3201 = vpop.permute.xlu0 %3200
      %3202 = vrot.lane.b32.xlu0 %v3181, 1
      %v3203 = vpop.permute.xlu0 %3202
      %3204 = vrot.lane.b32.xlu0 %v3182, 1
      %v3205 = vpop.permute.xlu0 %3204
      %3206 = vrot.lane.b32.xlu0 %v3183, 1
      %v3207 = vpop.permute.xlu0 %3206
      %3208 = vrot.lane.b32.xlu0 %v3184, 1
      %v3209 = vpop.permute.xlu0 %3208
      %3210 = vrot.lane.b32.xlu0 %v3185, 1
      %v3211 = vpop.permute.xlu0 %3210
      %3212 = vrot.lane.b32.xlu0 %v3186, 1
      %v3213 = vpop.permute.xlu0 %3212
      %3214 = vrot.lane.b32.xlu0 %v3187, 1
      %v3215 = vpop.permute.xlu0 %3214
      %3216 = vrot.lane.b32.xlu0 %v3188, 1
      %v3217 = vpop.permute.xlu0 %3216
      %3218 = vrot.lane.b32.xlu0 %v3189, 1
      %v3219 = vpop.permute.xlu0 %3218
      %3220 = vrot.lane.b32.xlu0 %v3190, 1
      %v3221 = vpop.permute.xlu0 %3220
      %3222 = vrot.lane.b32.xlu0 %v3191, 1
      %v3223 = vpop.permute.xlu0 %3222
      %v3224 = vmul.f32 %v3193, %v801
      %v3225 = vmul.f32 %v3195, %v801
      %v3226 = vmul.f32 %v3197, %v801
      %v3227 = vmul.f32 %v3199, %v801
      %v3228 = vmul.f32 %v3201, %v801
      %v3229 = vmul.f32 %v3203, %v801
      %v3230 = vmul.f32 %v3205, %v801
      %v3231 = vmul.f32 %v3207, %v801
      %v3232 = vmul.f32 %v3209, %v801
      %v3233 = vmul.f32 %v3211, %v801
      %v3234 = vmul.f32 %v3213, %v801
      %v3235 = vmul.f32 %v3215, %v801
      %v3236 = vmul.f32 %v3217, %v801
      %v3237 = vmul.f32 %v3219, %v801
      %v3238 = vmul.f32 %v3221, %v801
      %v3239 = vmul.f32 %v3223, %v801
      %3240 = vrot.lane.b32.xlu0 %v3176, 127
      %v3241 = vpop.permute.xlu0 %3240
      %3242 = vrot.lane.b32.xlu0 %v3177, 127
      %v3243 = vpop.permute.xlu0 %3242
      %3244 = vrot.lane.b32.xlu0 %v3178, 127
      %v3245 = vpop.permute.xlu0 %3244
      %3246 = vrot.lane.b32.xlu0 %v3179, 127
      %v3247 = vpop.permute.xlu0 %3246
      %3248 = vrot.lane.b32.xlu0 %v3180, 127
      %v3249 = vpop.permute.xlu0 %3248
      %3250 = vrot.lane.b32.xlu0 %v3181, 127
      %v3251 = vpop.permute.xlu0 %3250
      %3252 = vrot.lane.b32.xlu0 %v3182, 127
      %v3253 = vpop.permute.xlu0 %3252
      %3254 = vrot.lane.b32.xlu0 %v3183, 127
      %v3255 = vpop.permute.xlu0 %3254
      %3256 = vrot.lane.b32.xlu0 %v3184, 127
      %v3257 = vpop.permute.xlu0 %3256
      %3258 = vrot.lane.b32.xlu0 %v3185, 127
      %v3259 = vpop.permute.xlu0 %3258
      %3260 = vrot.lane.b32.xlu0 %v3186, 127
      %v3261 = vpop.permute.xlu0 %3260
      %3262 = vrot.lane.b32.xlu0 %v3187, 127
      %v3263 = vpop.permute.xlu0 %3262
      %3264 = vrot.lane.b32.xlu0 %v3188, 127
      %v3265 = vpop.permute.xlu0 %3264
      %3266 = vrot.lane.b32.xlu0 %v3189, 127
      %v3267 = vpop.permute.xlu0 %3266
      %3268 = vrot.lane.b32.xlu0 %v3190, 127
      %v3269 = vpop.permute.xlu0 %3268
      %3270 = vrot.lane.b32.xlu0 %v3191, 127
      %v3271 = vpop.permute.xlu0 %3270
      %v3272 = vmul.f32 %v3241, %v804
      %v3273 = vmul.f32 %v3243, %v804
      %v3274 = vmul.f32 %v3245, %v804
      %v3275 = vmul.f32 %v3247, %v804
      %v3276 = vmul.f32 %v3249, %v804
      %v3277 = vmul.f32 %v3251, %v804
      %v3278 = vmul.f32 %v3253, %v804
      %v3279 = vmul.f32 %v3255, %v804
      %v3280 = vmul.f32 %v3257, %v804
      %v3281 = vmul.f32 %v3259, %v804
      %v3282 = vmul.f32 %v3261, %v804
      %v3283 = vmul.f32 %v3263, %v804
      %v3284 = vmul.f32 %v3265, %v804
      %v3285 = vmul.f32 %v3267, %v804
      %v3286 = vmul.f32 %v3269, %v804
      %v3287 = vmul.f32 %v3271, %v804
      %v3288 = vpack.c.bf16 %v3225, %v3224
      %v3289 = vpack.c.bf16 %v3227, %v3226
      %v3290 = vpack.c.bf16 %v3229, %v3228
      %v3291 = vpack.c.bf16 %v3231, %v3230
      %v3292 = vpack.c.bf16 %v3233, %v3232
      %v3293 = vpack.c.bf16 %v3235, %v3234
      %v3294 = vpack.c.bf16 %v3237, %v3236
      %v3295 = vpack.c.bf16 %v3239, %v3238
      %v3296 = vpack.c.bf16 %v3177, %v3176
      %v3297 = vpack.c.bf16 %v3179, %v3178
      %v3298 = vpack.c.bf16 %v3181, %v3180
      %v3299 = vpack.c.bf16 %v3183, %v3182
      %v3300 = vpack.c.bf16 %v3185, %v3184
      %v3301 = vpack.c.bf16 %v3187, %v3186
      %v3302 = vpack.c.bf16 %v3189, %v3188
      %v3303 = vpack.c.bf16 %v3191, %v3190
      %v3304 = vpack.c.bf16 %v3273, %v3272
      %v3305 = vpack.c.bf16 %v3275, %v3274
      %v3306 = vpack.c.bf16 %v3277, %v3276
      %v3307 = vpack.c.bf16 %v3279, %v3278
      %v3308 = vpack.c.bf16 %v3281, %v3280
      %v3309 = vpack.c.bf16 %v3283, %v3282
      %v3310 = vpack.c.bf16 %v3285, %v3284
      %v3311 = vpack.c.bf16 %v3287, %v3286
      %v3312 = vld [vmem:[%s18] sm:$0xff]
      %v3313 = vld [vmem:[%s18 + $0x8] sm:$0xf]
      %v3314 = vld [vmem:[%s18 + $0xc] sm:$0xff]
      %v3315 = vld [vmem:[%s18 + $0x14] sm:$0xf]
      %v3316 = vld [vmem:[%s18 + $0x18] sm:$0xff]
      %v3317 = vld [vmem:[%s18 + $0x20] sm:$0xf]
      %v3318 = vld [vmem:[%s18 + $0x24] sm:$0xff]
      %v3319 = vld [vmem:[%s18 + $0x2c] sm:$0xf]
      %v3320 = vld [vmem:[%s18 + $0x30] sm:$0xff]
      %v3321 = vld [vmem:[%s18 + $0x38] sm:$0xf]
      %v3322 = vld [vmem:[%s18 + $0x3c] sm:$0xff]
      %v3323 = vld [vmem:[%s18 + $0x44] sm:$0xf]
      %v3324 = vld [vmem:[%s18 + $0x48] sm:$0xff]
      %v3325 = vld [vmem:[%s18 + $0x50] sm:$0xf]
      %v3326 = vld [vmem:[%s18 + $0x54] sm:$0xff]
      %v3327 = vld [vmem:[%s18 + $0x5c] sm:$0xf]
      %v3328 = vld [vmem:[%s18 + $0x60] sm:$0xff]
      %v3329 = vld [vmem:[%s18 + $0x68] sm:$0xf]
      %v3330 = vld [vmem:[%s18 + $0x6c] sm:$0xff]
      %v3331 = vld [vmem:[%s18 + $0x74] sm:$0xf]
      %v3332 = vld [vmem:[%s18 + $0x78] sm:$0xff]
      %v3333 = vld [vmem:[%s18 + $0x80] sm:$0xf]
      %v3334 = vld [vmem:[%s18 + $0x84] sm:$0xff]
      %v3335 = vld [vmem:[%s18 + $0x8c] sm:$0xf]
      %v3336 = vld [vmem:[%s18 + $0x90] sm:$0xff]
      %v3337 = vld [vmem:[%s18 + $0x98] sm:$0xf]
      %v3338 = vld [vmem:[%s18 + $0x9c] sm:$0xff]
      %v3339 = vld [vmem:[%s18 + $0xa4] sm:$0xf]
      %v3340 = vld [vmem:[%s18 + $0xa8] sm:$0xff]
      %v3341 = vld [vmem:[%s18 + $0xb0] sm:$0xf]
      %v3342 = vld [vmem:[%s18 + $0xb4] sm:$0xff]
      %v3343 = vld [vmem:[%s18 + $0xbc] sm:$0xf]
      %v3344 = vld [vmem:[%s18 + $0xc0] sm:$0xff]
      %v3345 = vld [vmem:[%s18 + $0xc8] sm:$0xf]
      %v3346 = vld [vmem:[%s18 + $0xcc] sm:$0xff]
      %v3347 = vld [vmem:[%s18 + $0xd4] sm:$0xf]
      %v3348 = vld [vmem:[%s18 + $0xd8] sm:$0xff]
      %v3349 = vld [vmem:[%s18 + $0xe0] sm:$0xf]
      %v3350 = vld [vmem:[%s18 + $0xe4] sm:$0xff]
      %v3351 = vld [vmem:[%s18 + $0xec] sm:$0xf]
      %v3352 = vld [vmem:[%s18 + $0xf0] sm:$0xff]
      %v3353 = vld [vmem:[%s18 + $0xf8] sm:$0xf]
      %v3354 = vld [vmem:[%s18 + $0xfc] sm:$0xff]
      %v3355 = vld [vmem:[%s18 + $0x104] sm:$0xf]
      %v3356 = vld [vmem:[%s18 + $0x108] sm:$0xff]
      %v3357 = vld [vmem:[%s18 + $0x110] sm:$0xf]
      %v3358 = vld [vmem:[%s18 + $0x114] sm:$0xff]
      %v3359 = vld [vmem:[%s18 + $0x11c] sm:$0xf]
      %v3360 = vld [vmem:[%s18 + $0x120] sm:$0xff]
      %v3361 = vld [vmem:[%s18 + $0x128] sm:$0xf]
      %v3362 = vld [vmem:[%s18 + $0x12c] sm:$0xff]
      %v3363 = vld [vmem:[%s18 + $0x134] sm:$0xf]
      %v3364 = vld [vmem:[%s18 + $0x138] sm:$0xff]
      %v3365 = vld [vmem:[%s18 + $0x140] sm:$0xf]
      %v3366 = vld [vmem:[%s18 + $0x144] sm:$0xff]
      %v3367 = vld [vmem:[%s18 + $0x14c] sm:$0xf]
      %v3368 = vld [vmem:[%s18 + $0x150] sm:$0xff]
      %v3369 = vld [vmem:[%s18 + $0x158] sm:$0xf]
      %v3370 = vld [vmem:[%s18 + $0x15c] sm:$0xff]
      %v3371 = vld [vmem:[%s18 + $0x164] sm:$0xf]
      %v3372 = vld [vmem:[%s18 + $0x168] sm:$0xff]
      %v3373 = vld [vmem:[%s18 + $0x170] sm:$0xf]
      %v3374 = vld [vmem:[%s18 + $0x174] sm:$0xff]
      %v3375 = vld [vmem:[%s18 + $0x17c] sm:$0xf]
      %v3440 = vunpack.c.l.b16 %v3312
      %v3441 = vunpack.c.h.b16 %v3312
      %v3442 = vunpack.c.l.b16 %v3313
      %v3443 = vunpack.c.l.b16 %v3314
      %v3444 = vunpack.c.h.b16 %v3314
      %v3445 = vunpack.c.l.b16 %v3315
      %v3446 = vunpack.c.l.b16 %v3316
      %v3447 = vunpack.c.h.b16 %v3316
      %v3448 = vunpack.c.l.b16 %v3317
      %v3449 = vunpack.c.l.b16 %v3318
      %v3450 = vunpack.c.h.b16 %v3318
      %v3451 = vunpack.c.l.b16 %v3319
      %v3452 = vunpack.c.l.b16 %v3320
      %v3453 = vunpack.c.h.b16 %v3320
      %v3454 = vunpack.c.l.b16 %v3321
      %v3455 = vunpack.c.l.b16 %v3322
      %v3456 = vunpack.c.h.b16 %v3322
      %v3457 = vunpack.c.l.b16 %v3323
      %v3458 = vunpack.c.l.b16 %v3324
      %v3459 = vunpack.c.h.b16 %v3324
      %v3460 = vunpack.c.l.b16 %v3325
      %v3461 = vunpack.c.l.b16 %v3326
      %v3462 = vunpack.c.h.b16 %v3326
      %v3463 = vunpack.c.l.b16 %v3327
      %v3464 = vunpack.c.l.b16 %v3328
      %v3465 = vunpack.c.h.b16 %v3328
      %v3466 = vunpack.c.l.b16 %v3329
      %v3467 = vunpack.c.l.b16 %v3330
      %v3468 = vunpack.c.h.b16 %v3330
      %v3469 = vunpack.c.l.b16 %v3331
      %v3470 = vunpack.c.l.b16 %v3332
      %v3471 = vunpack.c.h.b16 %v3332
      %v3472 = vunpack.c.l.b16 %v3333
      %v3473 = vunpack.c.l.b16 %v3334
      %v3474 = vunpack.c.h.b16 %v3334
      %v3475 = vunpack.c.l.b16 %v3335
      %v3476 = vunpack.c.l.b16 %v3336
      %v3477 = vunpack.c.h.b16 %v3336
      %v3478 = vunpack.c.l.b16 %v3337
      %v3479 = vunpack.c.l.b16 %v3338
      %v3480 = vunpack.c.h.b16 %v3338
      %v3481 = vunpack.c.l.b16 %v3339
      %v3482 = vunpack.c.l.b16 %v3340
      %v3483 = vunpack.c.h.b16 %v3340
      %v3484 = vunpack.c.l.b16 %v3341
      %v3485 = vunpack.c.l.b16 %v3342
      %v3486 = vunpack.c.h.b16 %v3342
      %v3487 = vunpack.c.l.b16 %v3343
      %v3488 = vunpack.c.l.b16 %v3344
      %v3489 = vunpack.c.h.b16 %v3344
      %v3490 = vunpack.c.l.b16 %v3345
      %v3491 = vunpack.c.l.b16 %v3346
      %v3492 = vunpack.c.h.b16 %v3346
      %v3493 = vunpack.c.l.b16 %v3347
      %v3494 = vunpack.c.l.b16 %v3348
      %v3495 = vunpack.c.h.b16 %v3348
      %v3496 = vunpack.c.l.b16 %v3349
      %v3497 = vunpack.c.l.b16 %v3350
      %v3498 = vunpack.c.h.b16 %v3350
      %v3499 = vunpack.c.l.b16 %v3351
      %v3500 = vunpack.c.l.b16 %v3352
      %v3501 = vunpack.c.h.b16 %v3352
      %v3502 = vunpack.c.l.b16 %v3353
      %v3503 = vunpack.c.l.b16 %v3354
      %v3504 = vunpack.c.h.b16 %v3354
      %v3505 = vunpack.c.l.b16 %v3355
      %v3506 = vunpack.c.l.b16 %v3356
      %v3507 = vunpack.c.h.b16 %v3356
      %v3508 = vunpack.c.l.b16 %v3357
      %v3509 = vunpack.c.l.b16 %v3358
      %v3510 = vunpack.c.h.b16 %v3358
      %v3511 = vunpack.c.l.b16 %v3359
      %v3512 = vunpack.c.l.b16 %v3360
      %v3513 = vunpack.c.h.b16 %v3360
      %v3514 = vunpack.c.l.b16 %v3361
      %v3515 = vunpack.c.l.b16 %v3362
      %v3516 = vunpack.c.h.b16 %v3362
      %v3517 = vunpack.c.l.b16 %v3363
      %v3518 = vunpack.c.l.b16 %v3364
      %v3519 = vunpack.c.h.b16 %v3364
      %v3520 = vunpack.c.l.b16 %v3365
      %v3521 = vunpack.c.l.b16 %v3366
      %v3522 = vunpack.c.h.b16 %v3366
      %v3523 = vunpack.c.l.b16 %v3367
      %v3524 = vunpack.c.l.b16 %v3368
      %v3525 = vunpack.c.h.b16 %v3368
      %v3526 = vunpack.c.l.b16 %v3369
      %v3527 = vunpack.c.l.b16 %v3370
      %v3528 = vunpack.c.h.b16 %v3370
      %v3529 = vunpack.c.l.b16 %v3371
      %v3530 = vunpack.c.l.b16 %v3372
      %v3531 = vunpack.c.h.b16 %v3372
      %v3532 = vunpack.c.l.b16 %v3373
      %v3533 = vunpack.c.l.b16 %v3374
      %v3534 = vunpack.c.h.b16 %v3374
      %v3535 = vunpack.c.l.b16 %v3375
      %v3536 = vpack.c.b16 %v3443, %v3440
      %v3537 = vpack.c.b16 %v3444, %v3441
      %v3538 = vpack.c.b16 %v3445, %v3442
      %v3539 = vpack.c.b16 %v3449, %v3446
      %v3540 = vpack.c.b16 %v3450, %v3447
      %v3541 = vpack.c.b16 %v3451, %v3448
      %v3542 = vpack.c.b16 %v3455, %v3452
      %v3543 = vpack.c.b16 %v3456, %v3453
      %v3544 = vpack.c.b16 %v3457, %v3454
      %v3545 = vpack.c.b16 %v3461, %v3458
      %v3546 = vpack.c.b16 %v3462, %v3459
      %v3547 = vpack.c.b16 %v3463, %v3460
      %v3548 = vpack.c.b16 %v3467, %v3464
      %v3549 = vpack.c.b16 %v3468, %v3465
      %v3550 = vpack.c.b16 %v3469, %v3466
      %v3551 = vpack.c.b16 %v3473, %v3470
      %v3552 = vpack.c.b16 %v3474, %v3471
      %v3553 = vpack.c.b16 %v3475, %v3472
      %v3554 = vpack.c.b16 %v3479, %v3476
      %v3555 = vpack.c.b16 %v3480, %v3477
      %v3556 = vpack.c.b16 %v3481, %v3478
      %v3557 = vpack.c.b16 %v3485, %v3482
      %v3558 = vpack.c.b16 %v3486, %v3483
      %v3559 = vpack.c.b16 %v3487, %v3484
      %v3560 = vpack.c.b16 %v3491, %v3488
      %v3561 = vpack.c.b16 %v3492, %v3489
      %v3562 = vpack.c.b16 %v3493, %v3490
      %v3563 = vpack.c.b16 %v3497, %v3494
      %v3564 = vpack.c.b16 %v3498, %v3495
      %v3565 = vpack.c.b16 %v3499, %v3496
      %v3566 = vpack.c.b16 %v3503, %v3500
      %v3567 = vpack.c.b16 %v3504, %v3501
      %v3568 = vpack.c.b16 %v3505, %v3502
      %v3569 = vpack.c.b16 %v3509, %v3506
      %v3570 = vpack.c.b16 %v3510, %v3507
      %v3571 = vpack.c.b16 %v3511, %v3508
      %v3572 = vpack.c.b16 %v3515, %v3512
      %v3573 = vpack.c.b16 %v3516, %v3513
      %v3574 = vpack.c.b16 %v3517, %v3514
      %v3575 = vpack.c.b16 %v3521, %v3518
      %v3576 = vpack.c.b16 %v3522, %v3519
      %v3577 = vpack.c.b16 %v3523, %v3520
      %v3578 = vpack.c.b16 %v3527, %v3524
      %v3579 = vpack.c.b16 %v3528, %v3525
      %v3580 = vpack.c.b16 %v3529, %v3526
      %v3581 = vpack.c.b16 %v3533, %v3530
      %v3582 = vpack.c.b16 %v3534, %v3531
      %v3583 = vpack.c.b16 %v3535, %v3532
      %3632 = vmatprep.subr.bf16.mxu0 0
      %3633 = vmatpush1.bf16.msra.mxu0 %v3288
      %3634 = vmatprep.subr.bf16.mxu0 0
      %3635 = vmatpush1.bf16.msra.mxu0 %v3289
      %3636 = vmatprep.subr.bf16.mxu0 0
      %3637 = vmatpush1.bf16.msra.mxu0 %v3290
      %3638 = vmatprep.subr.bf16.mxu0 0
      %3639 = vmatpush1.bf16.msra.mxu0 %v3291
      %3640 = vmatprep.subr.bf16.mxu0 0
      %3641 = vmatpush1.bf16.msra.mxu0 %v3292
      %3642 = vmatprep.subr.bf16.mxu0 0
      %3643 = vmatpush1.bf16.msra.mxu0 %v3293
      %3644 = vmatprep.subr.bf16.mxu0 0
      %3645 = vmatpush1.bf16.msra.mxu0 %v3294
      %3646 = vmatprep.subr.bf16.mxu0 0
      %3647 = vmatpush1.bf16.msra.mxu0 %v3295
      %3648 = vmatprep.subr.bf16.mxu0 0
      %3649 = vmatpush1.bf16.msra.mxu0 %v3296
      %3650 = vmatprep.subr.bf16.mxu0 0
      %3651 = vmatpush1.bf16.msra.mxu0 %v3297
      %3652 = vmatprep.subr.bf16.mxu0 0
      %3653 = vmatpush1.bf16.msra.mxu0 %v3298
      %3654 = vmatprep.subr.bf16.mxu0 0
      %3655 = vmatpush1.bf16.msra.mxu0 %v3299
      %3656 = vmatprep.subr.bf16.mxu0 0
      %3657 = vmatpush1.bf16.msra.mxu0 %v3300
      %3658 = vmatprep.subr.bf16.mxu0 0
      %3659 = vmatpush1.bf16.msra.mxu0 %v3301
      %3660 = vmatprep.subr.bf16.mxu0 0
      %3661 = vmatpush1.bf16.msra.mxu0 %v3302
      %3662 = vmatprep.subr.bf16.mxu0 0
      %3663 = vmatpush1.bf16.msra.mxu0 %v3303
      %3664 = vmatprep.mubr.bf16.mxu0 %v3537
      %3665 = vmatmul.mubr.bf16.gmra.mrb[0].mxu0 %v3536
      %v3666 = vpop.f32.mrb[0].mxu0
      %v3667 = vadd.f32 0.0, %v3666
      %v3668 = vpop.f32.mrb[0].mxu0
      %v3669 = vpop.f32.mrb[0].mxu0
      %v3670 = vadd.f32 0.0, %v3669
      %v3671 = vpop.f32.mrb[0].mxu0
      %3672 = vmatprep.mubr.bf16.mxu0 %v3540
      %3673 = vmatmul.mubr.bf16.gmra.mrb[0].mxu0 %v3539
      %v3674 = vpop.f32.mrb[0].mxu0
      %v3675 = vadd.f32 0.0, %v3674
      %v3676 = vpop.f32.mrb[0].mxu0
      %v3677 = vpop.f32.mrb[0].mxu0
      %v3678 = vadd.f32 0.0, %v3677
      %v3679 = vpop.f32.mrb[0].mxu0
      %3680 = vmatprep.mubr.bf16.mxu0 %v3543
      %3681 = vmatmul.mubr.bf16.gmra.mrb[0].mxu0 %v3542
      %v3682 = vpop.f32.mrb[0].mxu0
      %v3683 = vadd.f32 0.0, %v3682
      %v3684 = vpop.f32.mrb[0].mxu0
      %v3685 = vpop.f32.mrb[0].mxu0
      %v3686 = vadd.f32 0.0, %v3685
      %v3687 = vpop.f32.mrb[0].mxu0
      %3688 = vmatprep.mubr.bf16.mxu0 %v3546
      %3689 = vmatmul.mubr.bf16.gmra.mrb[0].mxu0 %v3545
      %v3690 = vpop.f32.mrb[0].mxu0
      %v3691 = vadd.f32 0.0, %v3690
      %v3692 = vpop.f32.mrb[0].mxu0
      %v3693 = vpop.f32.mrb[0].mxu0
      %v3694 = vadd.f32 0.0, %v3693
      %v3695 = vpop.f32.mrb[0].mxu0
      %3696 = vmatprep.mubr.bf16.mxu0 %v3549
      %3697 = vmatmul.mubr.bf16.gmra.mrb[0].mxu0 %v3548
      %v3698 = vpop.f32.mrb[0].mxu0
      %v3699 = vadd.f32 0.0, %v3698
      %v3700 = vpop.f32.mrb[0].mxu0
      %v3701 = vpop.f32.mrb[0].mxu0
      %v3702 = vadd.f32 0.0, %v3701
      %v3703 = vpop.f32.mrb[0].mxu0
      %3704 = vmatprep.mubr.bf16.mxu0 %v3552
      %3705 = vmatmul.mubr.bf16.gmra.mrb[0].mxu0 %v3551
      %v3706 = vpop.f32.mrb[0].mxu0
      %v3707 = vadd.f32 0.0, %v3706
      %v3708 = vpop.f32.mrb[0].mxu0
      %v3709 = vpop.f32.mrb[0].mxu0
      %v3710 = vadd.f32 0.0, %v3709
      %v3711 = vpop.f32.mrb[0].mxu0
      %3712 = vmatprep.mubr.bf16.mxu0 %v3555
      %3713 = vmatmul.mubr.bf16.gmra.mrb[0].mxu0 %v3554
      %v3714 = vpop.f32.mrb[0].mxu0
      %v3715 = vadd.f32 0.0, %v3714
      %v3716 = vpop.f32.mrb[0].mxu0
      %v3717 = vpop.f32.mrb[0].mxu0
      %v3718 = vadd.f32 0.0, %v3717
      %v3719 = vpop.f32.mrb[0].mxu0
      %3720 = vmatprep.mubr.bf16.mxu0 %v3558
      %3721 = vmatmul.mubr.bf16.gmra.mrb[0].mxu0 %v3557
      %v3722 = vpop.f32.mrb[0].mxu0
      %v3723 = vadd.f32 0.0, %v3722
      %v3724 = vpop.f32.mrb[0].mxu0
      %v3725 = vpop.f32.mrb[0].mxu0
      %v3726 = vadd.f32 0.0, %v3725
      %v3727 = vpop.f32.mrb[0].mxu0
      %3728 = vmatprep.mubr.bf16.mxu0 %v3561
      %3729 = vmatmul.mubr.bf16.gmra.mrb[0].mxu0 %v3560
      %v3730 = vpop.f32.mrb[0].mxu0
      %v3731 = vadd.f32 0.0, %v3730
      %v3732 = vpop.f32.mrb[0].mxu0
      %v3733 = vpop.f32.mrb[0].mxu0
      %v3734 = vadd.f32 0.0, %v3733
      %v3735 = vpop.f32.mrb[0].mxu0
      %3736 = vmatprep.mubr.bf16.mxu0 %v3564
      %3737 = vmatmul.mubr.bf16.gmra.mrb[0].mxu0 %v3563
      %v3738 = vpop.f32.mrb[0].mxu0
      %v3739 = vadd.f32 0.0, %v3738
      %v3740 = vpop.f32.mrb[0].mxu0
      %v3741 = vpop.f32.mrb[0].mxu0
      %v3742 = vadd.f32 0.0, %v3741
      %v3743 = vpop.f32.mrb[0].mxu0
      %3744 = vmatprep.mubr.bf16.mxu0 %v3567
      %3745 = vmatmul.mubr.bf16.gmra.mrb[0].mxu0 %v3566
      %v3746 = vpop.f32.mrb[0].mxu0
      %v3747 = vadd.f32 0.0, %v3746
      %v3748 = vpop.f32.mrb[0].mxu0
      %v3749 = vpop.f32.mrb[0].mxu0
      %v3750 = vadd.f32 0.0, %v3749
      %v3751 = vpop.f32.mrb[0].mxu0
      %3752 = vmatprep.mubr.bf16.mxu0 %v3570
      %3753 = vmatmul.mubr.bf16.gmra.mrb[0].mxu0 %v3569
      %v3754 = vpop.f32.mrb[0].mxu0
      %v3755 = vadd.f32 0.0, %v3754
      %v3756 = vpop.f32.mrb[0].mxu0
      %v3757 = vpop.f32.mrb[0].mxu0
      %v3758 = vadd.f32 0.0, %v3757
      %v3759 = vpop.f32.mrb[0].mxu0
      %3760 = vmatprep.mubr.bf16.mxu0 %v3573
      %3761 = vmatmul.mubr.bf16.gmra.mrb[0].mxu0 %v3572
      %v3762 = vpop.f32.mrb[0].mxu0
      %v3763 = vadd.f32 0.0, %v3762
      %v3764 = vpop.f32.mrb[0].mxu0
      %v3765 = vpop.f32.mrb[0].mxu0
      %v3766 = vadd.f32 0.0, %v3765
      %v3767 = vpop.f32.mrb[0].mxu0
      %3768 = vmatprep.mubr.bf16.mxu0 %v3576
      %3769 = vmatmul.mubr.bf16.gmra.mrb[0].mxu0 %v3575
      %v3770 = vpop.f32.mrb[0].mxu0
      %v3771 = vadd.f32 0.0, %v3770
      %v3772 = vpop.f32.mrb[0].mxu0
      %v3773 = vpop.f32.mrb[0].mxu0
      %v3774 = vadd.f32 0.0, %v3773
      %v3775 = vpop.f32.mrb[0].mxu0
      %3776 = vmatprep.mubr.bf16.mxu0 %v3579
      %3777 = vmatmul.mubr.bf16.gmra.mrb[0].mxu0 %v3578
      %v3778 = vpop.f32.mrb[0].mxu0
      %v3779 = vadd.f32 0.0, %v3778
      %v3780 = vpop.f32.mrb[0].mxu0
      %v3781 = vpop.f32.mrb[0].mxu0
      %v3782 = vadd.f32 0.0, %v3781
      %v3783 = vpop.f32.mrb[0].mxu0
      %3784 = vmatprep.mubr.bf16.mxu0 %v3582
      %3785 = vmatmul.mubr.bf16.gmra.mrb[0].mxu0 %v3581
      %v3786 = vpop.f32.mrb[0].mxu0
      %v3787 = vadd.f32 0.0, %v3786
      %v3788 = vpop.f32.mrb[0].mxu0
      %v3789 = vpop.f32.mrb[0].mxu0
      %v3790 = vadd.f32 0.0, %v3789
      %v3791 = vpop.f32.mrb[0].mxu0
      %3792 = vdwg.mxu0
      %3793 = vmatprep.subr.bf16.mxu0 0
      %3794 = vmatpush1.bf16.msra.mxu0 %v3304
      %3795 = vmatprep.subr.bf16.mxu0 0
      %3796 = vmatpush1.bf16.msra.mxu0 %v3305
      %3797 = vmatprep.subr.bf16.mxu0 0
      %3798 = vmatpush1.bf16.msra.mxu0 %v3306
      %3799 = vmatprep.subr.bf16.mxu0 0
      %3800 = vmatpush1.bf16.msra.mxu0 %v3307
      %3801 = vmatprep.subr.bf16.mxu0 0
      %3802 = vmatpush1.bf16.msra.mxu0 %v3308
      %3803 = vmatprep.subr.bf16.mxu0 0
      %3804 = vmatpush1.bf16.msra.mxu0 %v3309
      %3805 = vmatprep.subr.bf16.mxu0 0
      %3806 = vmatpush1.bf16.msra.mxu0 %v3310
      %3807 = vmatprep.subr.bf16.mxu0 0
      %3808 = vmatpush1.bf16.msra.mxu0 %v3311
      %3809 = vmatprep.subr.bf16.mxu0 0
      %3810 = vmatpush1.bf16.msra.mxu0 0
      %3811 = vmatprep.subr.bf16.mxu0 0
      %3812 = vmatpush1.bf16.msra.mxu0 0
      %3813 = vmatprep.subr.bf16.mxu0 0
      %3814 = vmatpush1.bf16.msra.mxu0 0
      %3815 = vmatprep.subr.bf16.mxu0 0
      %3816 = vmatpush1.bf16.msra.mxu0 0
      %3817 = vmatprep.subr.bf16.mxu0 0
      %3818 = vmatpush1.bf16.msra.mxu0 0
      %3819 = vmatprep.subr.bf16.mxu0 0
      %3820 = vmatpush1.bf16.msra.mxu0 0
      %3821 = vmatprep.subr.bf16.mxu0 0
      %3822 = vmatpush1.bf16.msra.mxu0 0
      %3823 = vmatprep.subr.bf16.mxu0 0
      %3824 = vmatpush1.bf16.msra.mxu0 0
      %3825 = vmatprep.mubr.bf16.mxu0 0
      %3826 = vmatmul.mubr.bf16.gmra.mrb[0].mxu0 %v3538
      %v3827 = vpop.f32.mrb[0].mxu0
      %v3828 = vadd.f32 %v3667, %v3827
      %v3829 = vpop.f32.mrb[0].mxu0
      %v3830 = vpop.f32.mrb[0].mxu0
      %v3831 = vadd.f32 %v3670, %v3830
      %v3832 = vpop.f32.mrb[0].mxu0
      %3833 = vmatprep.mubr.bf16.mxu0 0
      %3834 = vmatmul.mubr.bf16.gmra.mrb[0].mxu0 %v3541
      %v3835 = vpop.f32.mrb[0].mxu0
      %v3836 = vadd.f32 %v3675, %v3835
      %v3837 = vpop.f32.mrb[0].mxu0
      %v3838 = vpop.f32.mrb[0].mxu0
      %v3839 = vadd.f32 %v3678, %v3838
      %v3840 = vpop.f32.mrb[0].mxu0
      %3841 = vmatprep.mubr.bf16.mxu0 0
      %3842 = vmatmul.mubr.bf16.gmra.mrb[0].mxu0 %v3544
      %v3843 = vpop.f32.mrb[0].mxu0
      %v3844 = vadd.f32 %v3683, %v3843
      %v3845 = vpop.f32.mrb[0].mxu0
      %v3846 = vpop.f32.mrb[0].mxu0
      %v3847 = vadd.f32 %v3686, %v3846
      %v3848 = vpop.f32.mrb[0].mxu0
      %3849 = vmatprep.mubr.bf16.mxu0 0
      %3850 = vmatmul.mubr.bf16.gmra.mrb[0].mxu0 %v3547
      %v3851 = vpop.f32.mrb[0].mxu0
      %v3852 = vadd.f32 %v3691, %v3851
      %v3853 = vpop.f32.mrb[0].mxu0
      %v3854 = vpop.f32.mrb[0].mxu0
      %v3855 = vadd.f32 %v3694, %v3854
      %v3856 = vpop.f32.mrb[0].mxu0
      %3857 = vmatprep.mubr.bf16.mxu0 0
      %3858 = vmatmul.mubr.bf16.gmra.mrb[0].mxu0 %v3550
      %v3859 = vpop.f32.mrb[0].mxu0
      %v3860 = vadd.f32 %v3699, %v3859
      %v3861 = vpop.f32.mrb[0].mxu0
      %v3862 = vpop.f32.mrb[0].mxu0
      %v3863 = vadd.f32 %v3702, %v3862
      %v3864 = vpop.f32.mrb[0].mxu0
      %3865 = vmatprep.mubr.bf16.mxu0 0
      %3866 = vmatmul.mubr.bf16.gmra.mrb[0].mxu0 %v3553
      %v3867 = vpop.f32.mrb[0].mxu0
      %v3868 = vadd.f32 %v3707, %v3867
      %v3869 = vpop.f32.mrb[0].mxu0
      %v3870 = vpop.f32.mrb[0].mxu0
      %v3871 = vadd.f32 %v3710, %v3870
      %v3872 = vpop.f32.mrb[0].mxu0
      %3873 = vmatprep.mubr.bf16.mxu0 0
      %3874 = vmatmul.mubr.bf16.gmra.mrb[0].mxu0 %v3556
      %v3875 = vpop.f32.mrb[0].mxu0
      %v3876 = vadd.f32 %v3715, %v3875
      %v3877 = vpop.f32.mrb[0].mxu0
      %v3878 = vpop.f32.mrb[0].mxu0
      %v3879 = vadd.f32 %v3718, %v3878
      %v3880 = vpop.f32.mrb[0].mxu0
      %3881 = vmatprep.mubr.bf16.mxu0 0
      %3882 = vmatmul.mubr.bf16.gmra.mrb[0].mxu0 %v3559
      %v3883 = vpop.f32.mrb[0].mxu0
      %v3884 = vadd.f32 %v3723, %v3883
      %v3885 = vpop.f32.mrb[0].mxu0
      %v3886 = vpop.f32.mrb[0].mxu0
      %v3887 = vadd.f32 %v3726, %v3886
      %v3888 = vpop.f32.mrb[0].mxu0
      %3889 = vmatprep.mubr.bf16.mxu0 0
      %3890 = vmatmul.mubr.bf16.gmra.mrb[0].mxu0 %v3562
      %v3891 = vpop.f32.mrb[0].mxu0
      %v3892 = vadd.f32 %v3731, %v3891
      %v3893 = vpop.f32.mrb[0].mxu0
      %v3894 = vpop.f32.mrb[0].mxu0
      %v3895 = vadd.f32 %v3734, %v3894
      %v3896 = vpop.f32.mrb[0].mxu0
      %3897 = vmatprep.mubr.bf16.mxu0 0
      %3898 = vmatmul.mubr.bf16.gmra.mrb[0].mxu0 %v3565
      %v3899 = vpop.f32.mrb[0].mxu0
      %v3900 = vadd.f32 %v3739, %v3899
      %v3901 = vpop.f32.mrb[0].mxu0
      %v3902 = vpop.f32.mrb[0].mxu0
      %v3903 = vadd.f32 %v3742, %v3902
      %v3904 = vpop.f32.mrb[0].mxu0
      %3905 = vmatprep.mubr.bf16.mxu0 0
      %3906 = vmatmul.mubr.bf16.gmra.mrb[0].mxu0 %v3568
      %v3907 = vpop.f32.mrb[0].mxu0
      %v3908 = vadd.f32 %v3747, %v3907
      %v3909 = vpop.f32.mrb[0].mxu0
      %v3910 = vpop.f32.mrb[0].mxu0
      %v3911 = vadd.f32 %v3750, %v3910
      %v3912 = vpop.f32.mrb[0].mxu0
      %3913 = vmatprep.mubr.bf16.mxu0 0
      %3914 = vmatmul.mubr.bf16.gmra.mrb[0].mxu0 %v3571
      %v3915 = vpop.f32.mrb[0].mxu0
      %v3916 = vadd.f32 %v3755, %v3915
      %v3917 = vpop.f32.mrb[0].mxu0
      %v3918 = vpop.f32.mrb[0].mxu0
      %v3919 = vadd.f32 %v3758, %v3918
      %v3920 = vpop.f32.mrb[0].mxu0
      %3921 = vmatprep.mubr.bf16.mxu0 0
      %3922 = vmatmul.mubr.bf16.gmra.mrb[0].mxu0 %v3574
      %v3923 = vpop.f32.mrb[0].mxu0
      %v3924 = vadd.f32 %v3763, %v3923
      %v3925 = vpop.f32.mrb[0].mxu0
      %v3926 = vpop.f32.mrb[0].mxu0
      %v3927 = vadd.f32 %v3766, %v3926
      %v3928 = vpop.f32.mrb[0].mxu0
      %3929 = vmatprep.mubr.bf16.mxu0 0
      %3930 = vmatmul.mubr.bf16.gmra.mrb[0].mxu0 %v3577
      %v3931 = vpop.f32.mrb[0].mxu0
      %v3932 = vadd.f32 %v3771, %v3931
      %v3933 = vpop.f32.mrb[0].mxu0
      %v3934 = vpop.f32.mrb[0].mxu0
      %v3935 = vadd.f32 %v3774, %v3934
      %v3936 = vpop.f32.mrb[0].mxu0
      %3937 = vmatprep.mubr.bf16.mxu0 0
      %3938 = vmatmul.mubr.bf16.gmra.mrb[0].mxu0 %v3580
      %v3939 = vpop.f32.mrb[0].mxu0
      %v3940 = vadd.f32 %v3779, %v3939
      %v3941 = vpop.f32.mrb[0].mxu0
      %v3942 = vpop.f32.mrb[0].mxu0
      %v3943 = vadd.f32 %v3782, %v3942
      %v3944 = vpop.f32.mrb[0].mxu0
      %3945 = vmatprep.mubr.bf16.mxu0 0
      %3946 = vmatmul.mubr.bf16.gmra.mrb[0].mxu0 %v3583
      %v3947 = vpop.f32.mrb[0].mxu0
      %v3948 = vadd.f32 %v3787, %v3947
      %v3949 = vpop.f32.mrb[0].mxu0
      %v3950 = vpop.f32.mrb[0].mxu0
      %v3951 = vadd.f32 %v3790, %v3950
      %v3952 = vpop.f32.mrb[0].mxu0
      %3953 = vdwg.mxu0
      %v3954 = vld [vmem:[%s19] sm:$0xff]
      %v3955 = vld [vmem:[%s19 + $0x8] sm:$0xff]
      %v3956 = vld [vmem:[%s19 + $0x10] sm:$0xff]
      %v3957 = vld [vmem:[%s19 + $0x18] sm:$0xff]
      %v3958 = vld [vmem:[%s19 + $0x20] sm:$0xff]
      %v3959 = vld [vmem:[%s19 + $0x28] sm:$0xff]
      %v3960 = vld [vmem:[%s19 + $0x30] sm:$0xff]
      %v3961 = vld [vmem:[%s19 + $0x38] sm:$0xff]
      %v3962 = vld [vmem:[%s19 + $0x40] sm:$0xff]
      %v3963 = vld [vmem:[%s19 + $0x48] sm:$0xff]
      %v3964 = vld [vmem:[%s19 + $0x50] sm:$0xff]
      %v3965 = vld [vmem:[%s19 + $0x58] sm:$0xff]
      %v3966 = vld [vmem:[%s19 + $0x60] sm:$0xff]
      %v3967 = vld [vmem:[%s19 + $0x68] sm:$0xff]
      %v3968 = vld [vmem:[%s19 + $0x70] sm:$0xff]
      %v3969 = vld [vmem:[%s19 + $0x78] sm:$0xff]
      %v3970 = vld [vmem:[%s19 + $0x80] sm:$0xff]
      %v3971 = vld [vmem:[%s19 + $0x88] sm:$0xff]
      %v3972 = vld [vmem:[%s19 + $0x90] sm:$0xff]
      %v3973 = vld [vmem:[%s19 + $0x98] sm:$0xff]
      %v3974 = vld [vmem:[%s19 + $0xa0] sm:$0xff]
      %v3975 = vld [vmem:[%s19 + $0xa8] sm:$0xff]
      %v3976 = vld [vmem:[%s19 + $0xb0] sm:$0xff]
      %v3977 = vld [vmem:[%s19 + $0xb8] sm:$0xff]
      %v3978 = vld [vmem:[%s19 + $0xc0] sm:$0xff]
      %v3979 = vld [vmem:[%s19 + $0xc8] sm:$0xff]
      %v3980 = vld [vmem:[%s19 + $0xd0] sm:$0xff]
      %v3981 = vld [vmem:[%s19 + $0xd8] sm:$0xff]
      %v3982 = vld [vmem:[%s19 + $0xe0] sm:$0xff]
      %v3983 = vld [vmem:[%s19 + $0xe8] sm:$0xff]
      %v3984 = vld [vmem:[%s19 + $0xf0] sm:$0xff]
      %v3985 = vld [vmem:[%s19 + $0xf8] sm:$0xff]
      %3987 = vset.pattern.permute.xlu0 0
      %3988 = vperm.xlu0 %3987, %v3954
      %v3989 = vpop.permute.xlu0 %3988
      %3992 = vset.pattern.permute.xlu0 0
      %3993 = vperm.xlu0 %3992, %v3955
      %v3994 = vpop.permute.xlu0 %3993
      %3997 = vset.pattern.permute.xlu0 0
      %3998 = vperm.xlu0 %3997, %v3956
      %v3999 = vpop.permute.xlu0 %3998
      %4002 = vset.pattern.permute.xlu0 0
      %4003 = vperm.xlu0 %4002, %v3957
      %v4004 = vpop.permute.xlu0 %4003
      %4007 = vset.pattern.permute.xlu0 0
      %4008 = vperm.xlu0 %4007, %v3958
      %v4009 = vpop.permute.xlu0 %4008
      %4012 = vset.pattern.permute.xlu0 0
      %4013 = vperm.xlu0 %4012, %v3959
      %v4014 = vpop.permute.xlu0 %4013
      %4017 = vset.pattern.permute.xlu0 0
      %4018 = vperm.xlu0 %4017, %v3960
      %v4019 = vpop.permute.xlu0 %4018
      %4022 = vset.pattern.permute.xlu0 0
      %4023 = vperm.xlu0 %4022, %v3961
      %v4024 = vpop.permute.xlu0 %4023
      %4027 = vset.pattern.permute.xlu0 0
      %4028 = vperm.xlu0 %4027, %v3962
      %v4029 = vpop.permute.xlu0 %4028
      %4032 = vset.pattern.permute.xlu0 0
      %4033 = vperm.xlu0 %4032, %v3963
      %v4034 = vpop.permute.xlu0 %4033
      %4037 = vset.pattern.permute.xlu0 0
      %4038 = vperm.xlu0 %4037, %v3964
      %v4039 = vpop.permute.xlu0 %4038
      %4042 = vset.pattern.permute.xlu0 0
      %4043 = vperm.xlu0 %4042, %v3965
      %v4044 = vpop.permute.xlu0 %4043
      %4047 = vset.pattern.permute.xlu0 0
      %4048 = vperm.xlu0 %4047, %v3966
      %v4049 = vpop.permute.xlu0 %4048
      %4052 = vset.pattern.permute.xlu0 0
      %4053 = vperm.xlu0 %4052, %v3967
      %v4054 = vpop.permute.xlu0 %4053
      %4057 = vset.pattern.permute.xlu0 0
      %4058 = vperm.xlu0 %4057, %v3968
      %v4059 = vpop.permute.xlu0 %4058
      %4062 = vset.pattern.permute.xlu0 0
      %4063 = vperm.xlu0 %4062, %v3969
      %v4064 = vpop.permute.xlu0 %4063
      %4067 = vset.pattern.permute.xlu0 0
      %4068 = vperm.xlu0 %4067, %v3970
      %v4069 = vpop.permute.xlu0 %4068
      %4072 = vset.pattern.permute.xlu0 0
      %4073 = vperm.xlu0 %4072, %v3971
      %v4074 = vpop.permute.xlu0 %4073
      %4077 = vset.pattern.permute.xlu0 0
      %4078 = vperm.xlu0 %4077, %v3972
      %v4079 = vpop.permute.xlu0 %4078
      %4082 = vset.pattern.permute.xlu0 0
      %4083 = vperm.xlu0 %4082, %v3973
      %v4084 = vpop.permute.xlu0 %4083
      %4087 = vset.pattern.permute.xlu0 0
      %4088 = vperm.xlu0 %4087, %v3974
      %v4089 = vpop.permute.xlu0 %4088
      %4092 = vset.pattern.permute.xlu0 0
      %4093 = vperm.xlu0 %4092, %v3975
      %v4094 = vpop.permute.xlu0 %4093
      %4097 = vset.pattern.permute.xlu0 0
      %4098 = vperm.xlu0 %4097, %v3976
      %v4099 = vpop.permute.xlu0 %4098
      %4102 = vset.pattern.permute.xlu0 0
      %4103 = vperm.xlu0 %4102, %v3977
      %v4104 = vpop.permute.xlu0 %4103
      %4107 = vset.pattern.permute.xlu0 0
      %4108 = vperm.xlu0 %4107, %v3978
      %v4109 = vpop.permute.xlu0 %4108
      %4112 = vset.pattern.permute.xlu0 0
      %4113 = vperm.xlu0 %4112, %v3979
      %v4114 = vpop.permute.xlu0 %4113
      %4117 = vset.pattern.permute.xlu0 0
      %4118 = vperm.xlu0 %4117, %v3980
      %v4119 = vpop.permute.xlu0 %4118
      %4122 = vset.pattern.permute.xlu0 0
      %4123 = vperm.xlu0 %4122, %v3981
      %v4124 = vpop.permute.xlu0 %4123
      %4127 = vset.pattern.permute.xlu0 0
      %4128 = vperm.xlu0 %4127, %v3982
      %v4129 = vpop.permute.xlu0 %4128
      %4132 = vset.pattern.permute.xlu0 0
      %4133 = vperm.xlu0 %4132, %v3983
      %v4134 = vpop.permute.xlu0 %4133
      %4137 = vset.pattern.permute.xlu0 0
      %4138 = vperm.xlu0 %4137, %v3984
      %v4139 = vpop.permute.xlu0 %4138
      %4142 = vset.pattern.permute.xlu0 0
      %4143 = vperm.xlu0 %4142, %v3985
      %v4144 = vpop.permute.xlu0 %4143
      %v4146 = vmul.f32 %v3989, %v3828
      %v4147 = vmul.f32 %v3994, %v3831
      %v4148 = vmul.f32 %v3999, %v3836
      %v4149 = vmul.f32 %v4004, %v3839
      %v4150 = vmul.f32 %v4009, %v3844
      %v4151 = vmul.f32 %v4014, %v3847
      %v4152 = vmul.f32 %v4019, %v3852
      %v4153 = vmul.f32 %v4024, %v3855
      %v4154 = vmul.f32 %v4029, %v3860
      %v4155 = vmul.f32 %v4034, %v3863
      %v4156 = vmul.f32 %v4039, %v3868
      %v4157 = vmul.f32 %v4044, %v3871
      %v4158 = vmul.f32 %v4049, %v3876
      %v4159 = vmul.f32 %v4054, %v3879
      %v4160 = vmul.f32 %v4059, %v3884
      %v4161 = vmul.f32 %v4064, %v3887
      %v4162 = vmul.f32 %v4069, %v3892
      %v4163 = vmul.f32 %v4074, %v3895
      %v4164 = vmul.f32 %v4079, %v3900
      %v4165 = vmul.f32 %v4084, %v3903
      %v4166 = vmul.f32 %v4089, %v3908
      %v4167 = vmul.f32 %v4094, %v3911
      %v4168 = vmul.f32 %v4099, %v3916
      %v4169 = vmul.f32 %v4104, %v3919
      %v4170 = vmul.f32 %v4109, %v3924
      %v4171 = vmul.f32 %v4114, %v3927
      %v4172 = vmul.f32 %v4119, %v3932
      %v4173 = vmul.f32 %v4124, %v3935
      %v4174 = vmul.f32 %v4129, %v3940
      %v4175 = vmul.f32 %v4134, %v3943
      %v4176 = vmul.f32 %v4139, %v3948
      %v4177 = vmul.f32 %v4144, %v3951
      %v4178 = vld [vmem:[%s20] sm:$0xff]
      %v4179 = vld [vmem:[%s20 + $0x8] sm:$0xff]
      %v4180 = vld [vmem:[%s20 + $0x10] sm:$0xff]
      %v4181 = vld [vmem:[%s20 + $0x18] sm:$0xff]
      %v4182 = vld [vmem:[%s20 + $0x20] sm:$0xff]
      %v4183 = vld [vmem:[%s20 + $0x28] sm:$0xff]
      %v4184 = vld [vmem:[%s20 + $0x30] sm:$0xff]
      %v4185 = vld [vmem:[%s20 + $0x38] sm:$0xff]
      %v4186 = vld [vmem:[%s20 + $0x40] sm:$0xff]
      %v4187 = vld [vmem:[%s20 + $0x48] sm:$0xff]
      %v4188 = vld [vmem:[%s20 + $0x50] sm:$0xff]
      %v4189 = vld [vmem:[%s20 + $0x58] sm:$0xff]
      %v4190 = vld [vmem:[%s20 + $0x60] sm:$0xff]
      %v4191 = vld [vmem:[%s20 + $0x68] sm:$0xff]
      %v4192 = vld [vmem:[%s20 + $0x70] sm:$0xff]
      %v4193 = vld [vmem:[%s20 + $0x78] sm:$0xff]
      %v4194 = vld [vmem:[%s20 + $0x80] sm:$0xff]
      %v4195 = vld [vmem:[%s20 + $0x88] sm:$0xff]
      %v4196 = vld [vmem:[%s20 + $0x90] sm:$0xff]
      %v4197 = vld [vmem:[%s20 + $0x98] sm:$0xff]
      %v4198 = vld [vmem:[%s20 + $0xa0] sm:$0xff]
      %v4199 = vld [vmem:[%s20 + $0xa8] sm:$0xff]
      %v4200 = vld [vmem:[%s20 + $0xb0] sm:$0xff]
      %v4201 = vld [vmem:[%s20 + $0xb8] sm:$0xff]
      %v4202 = vld [vmem:[%s20 + $0xc0] sm:$0xff]
      %v4203 = vld [vmem:[%s20 + $0xc8] sm:$0xff]
      %v4204 = vld [vmem:[%s20 + $0xd0] sm:$0xff]
      %v4205 = vld [vmem:[%s20 + $0xd8] sm:$0xff]
      %v4206 = vld [vmem:[%s20 + $0xe0] sm:$0xff]
      %v4207 = vld [vmem:[%s20 + $0xe8] sm:$0xff]
      %v4208 = vld [vmem:[%s20 + $0xf0] sm:$0xff]
      %v4209 = vld [vmem:[%s20 + $0xf8] sm:$0xff]
      %4211 = vset.pattern.permute.xlu0 0
      %4212 = vperm.xlu0 %4211, %v4178
      %v4213 = vpop.permute.xlu0 %4212
      %4216 = vset.pattern.permute.xlu0 0
      %4217 = vperm.xlu0 %4216, %v4179
      %v4218 = vpop.permute.xlu0 %4217
      %4221 = vset.pattern.permute.xlu0 0
      %4222 = vperm.xlu0 %4221, %v4180
      %v4223 = vpop.permute.xlu0 %4222
      %4226 = vset.pattern.permute.xlu0 0
      %4227 = vperm.xlu0 %4226, %v4181
      %v4228 = vpop.permute.xlu0 %4227
      %4231 = vset.pattern.permute.xlu0 0
      %4232 = vperm.xlu0 %4231, %v4182
      %v4233 = vpop.permute.xlu0 %4232
      %4236 = vset.pattern.permute.xlu0 0
      %4237 = vperm.xlu0 %4236, %v4183
      %v4238 = vpop.permute.xlu0 %4237
      %4241 = vset.pattern.permute.xlu0 0
      %4242 = vperm.xlu0 %4241, %v4184
      %v4243 = vpop.permute.xlu0 %4242
      %4246 = vset.pattern.permute.xlu0 0
      %4247 = vperm.xlu0 %4246, %v4185
      %v4248 = vpop.permute.xlu0 %4247
      %4251 = vset.pattern.permute.xlu0 0
      %4252 = vperm.xlu0 %4251, %v4186
      %v4253 = vpop.permute.xlu0 %4252
      %4256 = vset.pattern.permute.xlu0 0
      %4257 = vperm.xlu0 %4256, %v4187
      %v4258 = vpop.permute.xlu0 %4257
      %4261 = vset.pattern.permute.xlu0 0
      %4262 = vperm.xlu0 %4261, %v4188
      %v4263 = vpop.permute.xlu0 %4262
      %4266 = vset.pattern.permute.xlu0 0
      %4267 = vperm.xlu0 %4266, %v4189
      %v4268 = vpop.permute.xlu0 %4267
      %4271 = vset.pattern.permute.xlu0 0
      %4272 = vperm.xlu0 %4271, %v4190
      %v4273 = vpop.permute.xlu0 %4272
      %4276 = vset.pattern.permute.xlu0 0
      %4277 = vperm.xlu0 %4276, %v4191
      %v4278 = vpop.permute.xlu0 %4277
      %4281 = vset.pattern.permute.xlu0 0
      %4282 = vperm.xlu0 %4281, %v4192
      %v4283 = vpop.permute.xlu0 %4282
      %4286 = vset.pattern.permute.xlu0 0
      %4287 = vperm.xlu0 %4286, %v4193
      %v4288 = vpop.permute.xlu0 %4287
      %4291 = vset.pattern.permute.xlu0 0
      %4292 = vperm.xlu0 %4291, %v4194
      %v4293 = vpop.permute.xlu0 %4292
      %4296 = vset.pattern.permute.xlu0 0
      %4297 = vperm.xlu0 %4296, %v4195
      %v4298 = vpop.permute.xlu0 %4297
      %4301 = vset.pattern.permute.xlu0 0
      %4302 = vperm.xlu0 %4301, %v4196
      %v4303 = vpop.permute.xlu0 %4302
      %4306 = vset.pattern.permute.xlu0 0
      %4307 = vperm.xlu0 %4306, %v4197
      %v4308 = vpop.permute.xlu0 %4307
      %4311 = vset.pattern.permute.xlu0 0
      %4312 = vperm.xlu0 %4311, %v4198
      %v4313 = vpop.permute.xlu0 %4312
      %4316 = vset.pattern.permute.xlu0 0
      %4317 = vperm.xlu0 %4316, %v4199
      %v4318 = vpop.permute.xlu0 %4317
      %4321 = vset.pattern.permute.xlu0 0
      %4322 = vperm.xlu0 %4321, %v4200
      %v4323 = vpop.permute.xlu0 %4322
      %4326 = vset.pattern.permute.xlu0 0
      %4327 = vperm.xlu0 %4326, %v4201
      %v4328 = vpop.permute.xlu0 %4327
      %4331 = vset.pattern.permute.xlu0 0
      %4332 = vperm.xlu0 %4331, %v4202
      %v4333 = vpop.permute.xlu0 %4332
      %4336 = vset.pattern.permute.xlu0 0
      %4337 = vperm.xlu0 %4336, %v4203
      %v4338 = vpop.permute.xlu0 %4337
      %4341 = vset.pattern.permute.xlu0 0
      %4342 = vperm.xlu0 %4341, %v4204
      %v4343 = vpop.permute.xlu0 %4342
      %4346 = vset.pattern.permute.xlu0 0
      %4347 = vperm.xlu0 %4346, %v4205
      %v4348 = vpop.permute.xlu0 %4347
      %4351 = vset.pattern.permute.xlu0 0
      %4352 = vperm.xlu0 %4351, %v4206
      %v4353 = vpop.permute.xlu0 %4352
      %4356 = vset.pattern.permute.xlu0 0
      %4357 = vperm.xlu0 %4356, %v4207
      %v4358 = vpop.permute.xlu0 %4357
      %4361 = vset.pattern.permute.xlu0 0
      %4362 = vperm.xlu0 %4361, %v4208
      %v4363 = vpop.permute.xlu0 %4362
      %4366 = vset.pattern.permute.xlu0 0
      %4367 = vperm.xlu0 %4366, %v4209
      %v4368 = vpop.permute.xlu0 %4367
      %v4370 = vadd.f32 %v4146, %v4213
      %v4371 = vadd.f32 %v4147, %v4218
      %v4372 = vadd.f32 %v4148, %v4223
      %v4373 = vadd.f32 %v4149, %v4228
      %v4374 = vadd.f32 %v4150, %v4233
      %v4375 = vadd.f32 %v4151, %v4238
      %v4376 = vadd.f32 %v4152, %v4243
      %v4377 = vadd.f32 %v4153, %v4248
      %v4378 = vadd.f32 %v4154, %v4253
      %v4379 = vadd.f32 %v4155, %v4258
      %v4380 = vadd.f32 %v4156, %v4263
      %v4381 = vadd.f32 %v4157, %v4268
      %v4382 = vadd.f32 %v4158, %v4273
      %v4383 = vadd.f32 %v4159, %v4278
      %v4384 = vadd.f32 %v4160, %v4283
      %v4385 = vadd.f32 %v4161, %v4288
      %v4386 = vadd.f32 %v4162, %v4293
      %v4387 = vadd.f32 %v4163, %v4298
      %v4388 = vadd.f32 %v4164, %v4303
      %v4389 = vadd.f32 %v4165, %v4308
      %v4390 = vadd.f32 %v4166, %v4313
      %v4391 = vadd.f32 %v4167, %v4318
      %v4392 = vadd.f32 %v4168, %v4323
      %v4393 = vadd.f32 %v4169, %v4328
      %v4394 = vadd.f32 %v4170, %v4333
      %v4395 = vadd.f32 %v4171, %v4338
      %v4396 = vadd.f32 %v4172, %v4343
      %v4397 = vadd.f32 %v4173, %v4348
      %v4398 = vadd.f32 %v4174, %v4353
      %v4399 = vadd.f32 %v4175, %v4358
      %v4400 = vadd.f32 %v4176, %v4363
      %v4401 = vadd.f32 %v4177, %v4368
      %v4402 = vmax.f32 %v4370, 0.0
      %v4403 = vmax.f32 %v4371, 0.0
      %v4404 = vmax.f32 %v4372, 0.0
      %v4405 = vmax.f32 %v4373, 0.0
      %v4406 = vmax.f32 %v4374, 0.0
      %v4407 = vmax.f32 %v4375, 0.0
      %v4408 = vmax.f32 %v4376, 0.0
      %v4409 = vmax.f32 %v4377, 0.0
      %v4410 = vmax.f32 %v4378, 0.0
      %v4411 = vmax.f32 %v4379, 0.0
      %v4412 = vmax.f32 %v4380, 0.0
      %v4413 = vmax.f32 %v4381, 0.0
      %v4414 = vmax.f32 %v4382, 0.0
      %v4415 = vmax.f32 %v4383, 0.0
      %v4416 = vmax.f32 %v4384, 0.0
      %v4417 = vmax.f32 %v4385, 0.0
      %v4418 = vmax.f32 %v4386, 0.0
      %v4419 = vmax.f32 %v4387, 0.0
      %v4420 = vmax.f32 %v4388, 0.0
      %v4421 = vmax.f32 %v4389, 0.0
      %v4422 = vmax.f32 %v4390, 0.0
      %v4423 = vmax.f32 %v4391, 0.0
      %v4424 = vmax.f32 %v4392, 0.0
      %v4425 = vmax.f32 %v4393, 0.0
      %v4426 = vmax.f32 %v4394, 0.0
      %v4427 = vmax.f32 %v4395, 0.0
      %v4428 = vmax.f32 %v4396, 0.0
      %v4429 = vmax.f32 %v4397, 0.0
      %v4430 = vmax.f32 %v4398, 0.0
      %v4431 = vmax.f32 %v4399, 0.0
      %v4432 = vmax.f32 %v4400, 0.0
      %v4433 = vmax.f32 %v4401, 0.0
      %v4434 = vld [vmem:[%s22] sm:$0xff]
      %v4435 = vld [vmem:[%s22 + $0x8] sm:$0xff]
      %v4436 = vld [vmem:[%s22 + $0x10] sm:$0xff]
      %v4437 = vld [vmem:[%s22 + $0x18] sm:$0xff]
      %v4438 = vld [vmem:[%s22 + $0x20] sm:$0xff]
      %v4439 = vld [vmem:[%s22 + $0x28] sm:$0xff]
      %v4440 = vld [vmem:[%s22 + $0x30] sm:$0xff]
      %v4441 = vld [vmem:[%s22 + $0x38] sm:$0xff]
      %v4442 = vld [vmem:[%s22 + $0x40] sm:$0xff]
      %v4443 = vld [vmem:[%s22 + $0x48] sm:$0xff]
      %v4444 = vld [vmem:[%s22 + $0x50] sm:$0xff]
      %v4445 = vld [vmem:[%s22 + $0x58] sm:$0xff]
      %v4446 = vld [vmem:[%s22 + $0x60] sm:$0xff]
      %v4447 = vld [vmem:[%s22 + $0x68] sm:$0xff]
      %v4448 = vld [vmem:[%s22 + $0x70] sm:$0xff]
      %v4449 = vld [vmem:[%s22 + $0x78] sm:$0xff]
      %v4450 = vld [vmem:[%s22 + $0x80] sm:$0xff]
      %v4451 = vld [vmem:[%s22 + $0x88] sm:$0xff]
      %v4452 = vld [vmem:[%s22 + $0x90] sm:$0xff]
      %v4453 = vld [vmem:[%s22 + $0x98] sm:$0xff]
      %v4454 = vld [vmem:[%s22 + $0xa0] sm:$0xff]
      %v4455 = vld [vmem:[%s22 + $0xa8] sm:$0xff]
      %v4456 = vld [vmem:[%s22 + $0xb0] sm:$0xff]
      %v4457 = vld [vmem:[%s22 + $0xb8] sm:$0xff]
      %v4458 = vld [vmem:[%s22 + $0xc0] sm:$0xff]
      %v4459 = vld [vmem:[%s22 + $0xc8] sm:$0xff]
      %v4460 = vld [vmem:[%s22 + $0xd0] sm:$0xff]
      %v4461 = vld [vmem:[%s22 + $0xd8] sm:$0xff]
      %v4462 = vld [vmem:[%s22 + $0xe0] sm:$0xff]
      %v4463 = vld [vmem:[%s22 + $0xe8] sm:$0xff]
      %v4464 = vld [vmem:[%s22 + $0xf0] sm:$0xff]
      %v4465 = vld [vmem:[%s22 + $0xf8] sm:$0xff]
      %4466 = vrot.lane.b32.xlu0 %v4402, 1
      %v4467 = vpop.permute.xlu0 %4466
      %4468 = vrot.lane.b32.xlu0 %v4403, 1
      %v4469 = vpop.permute.xlu0 %4468
      %4470 = vrot.lane.b32.xlu0 %v4404, 1
      %v4471 = vpop.permute.xlu0 %4470
      %4472 = vrot.lane.b32.xlu0 %v4405, 1
      %v4473 = vpop.permute.xlu0 %4472
      %4474 = vrot.lane.b32.xlu0 %v4406, 1
      %v4475 = vpop.permute.xlu0 %4474
      %4476 = vrot.lane.b32.xlu0 %v4407, 1
      %v4477 = vpop.permute.xlu0 %4476
      %4478 = vrot.lane.b32.xlu0 %v4408, 1
      %v4479 = vpop.permute.xlu0 %4478
      %4480 = vrot.lane.b32.xlu0 %v4409, 1
      %v4481 = vpop.permute.xlu0 %4480
      %4482 = vrot.lane.b32.xlu0 %v4410, 1
      %v4483 = vpop.permute.xlu0 %4482
      %4484 = vrot.lane.b32.xlu0 %v4411, 1
      %v4485 = vpop.permute.xlu0 %4484
      %4486 = vrot.lane.b32.xlu0 %v4412, 1
      %v4487 = vpop.permute.xlu0 %4486
      %4488 = vrot.lane.b32.xlu0 %v4413, 1
      %v4489 = vpop.permute.xlu0 %4488
      %4490 = vrot.lane.b32.xlu0 %v4414, 1
      %v4491 = vpop.permute.xlu0 %4490
      %4492 = vrot.lane.b32.xlu0 %v4415, 1
      %v4493 = vpop.permute.xlu0 %4492
      %4494 = vrot.lane.b32.xlu0 %v4416, 1
      %v4495 = vpop.permute.xlu0 %4494
      %4496 = vrot.lane.b32.xlu0 %v4417, 1
      %v4497 = vpop.permute.xlu0 %4496
      %4498 = vrot.lane.b32.xlu0 %v4418, 1
      %v4499 = vpop.permute.xlu0 %4498
      %4500 = vrot.lane.b32.xlu0 %v4419, 1
      %v4501 = vpop.permute.xlu0 %4500
      %4502 = vrot.lane.b32.xlu0 %v4420, 1
      %v4503 = vpop.permute.xlu0 %4502
      %4504 = vrot.lane.b32.xlu0 %v4421, 1
      %v4505 = vpop.permute.xlu0 %4504
      %4506 = vrot.lane.b32.xlu0 %v4422, 1
      %v4507 = vpop.permute.xlu0 %4506
      %4508 = vrot.lane.b32.xlu0 %v4423, 1
      %v4509 = vpop.permute.xlu0 %4508
      %4510 = vrot.lane.b32.xlu0 %v4424, 1
      %v4511 = vpop.permute.xlu0 %4510
      %4512 = vrot.lane.b32.xlu0 %v4425, 1
      %v4513 = vpop.permute.xlu0 %4512
      %4514 = vrot.lane.b32.xlu0 %v4426, 1
      %v4515 = vpop.permute.xlu0 %4514
      %4516 = vrot.lane.b32.xlu0 %v4427, 1
      %v4517 = vpop.permute.xlu0 %4516
      %4518 = vrot.lane.b32.xlu0 %v4428, 1
      %v4519 = vpop.permute.xlu0 %4518
      %4520 = vrot.lane.b32.xlu0 %v4429, 1
      %v4521 = vpop.permute.xlu0 %4520
      %4522 = vrot.lane.b32.xlu0 %v4430, 1
      %v4523 = vpop.permute.xlu0 %4522
      %4524 = vrot.lane.b32.xlu0 %v4431, 1
      %v4525 = vpop.permute.xlu0 %4524
      %4526 = vrot.lane.b32.xlu0 %v4432, 1
      %v4527 = vpop.permute.xlu0 %4526
      %4528 = vrot.lane.b32.xlu0 %v4433, 1
      %v4529 = vpop.permute.xlu0 %4528
      %v4530 = vmul.f32 %v4467, %v801
      %v4531 = vmul.f32 %v4469, %v801
      %v4532 = vmul.f32 %v4471, %v801
      %v4533 = vmul.f32 %v4473, %v801
      %v4534 = vmul.f32 %v4475, %v801
      %v4535 = vmul.f32 %v4477, %v801
      %v4536 = vmul.f32 %v4479, %v801
      %v4537 = vmul.f32 %v4481, %v801
      %v4538 = vmul.f32 %v4483, %v801
      %v4539 = vmul.f32 %v4485, %v801
      %v4540 = vmul.f32 %v4487, %v801
      %v4541 = vmul.f32 %v4489, %v801
      %v4542 = vmul.f32 %v4491, %v801
      %v4543 = vmul.f32 %v4493, %v801
      %v4544 = vmul.f32 %v4495, %v801
      %v4545 = vmul.f32 %v4497, %v801
      %v4546 = vmul.f32 %v4499, %v801
      %v4547 = vmul.f32 %v4501, %v801
      %v4548 = vmul.f32 %v4503, %v801
      %v4549 = vmul.f32 %v4505, %v801
      %v4550 = vmul.f32 %v4507, %v801
      %v4551 = vmul.f32 %v4509, %v801
      %v4552 = vmul.f32 %v4511, %v801
      %v4553 = vmul.f32 %v4513, %v801
      %v4554 = vmul.f32 %v4515, %v801
      %v4555 = vmul.f32 %v4517, %v801
      %v4556 = vmul.f32 %v4519, %v801
      %v4557 = vmul.f32 %v4521, %v801
      %v4558 = vmul.f32 %v4523, %v801
      %v4559 = vmul.f32 %v4525, %v801
      %v4560 = vmul.f32 %v4527, %v801
      %v4561 = vmul.f32 %v4529, %v801
      %4562 = vrot.lane.b32.xlu0 %v4402, 127
      %v4563 = vpop.permute.xlu0 %4562
      %4564 = vrot.lane.b32.xlu0 %v4403, 127
      %v4565 = vpop.permute.xlu0 %4564
      %4566 = vrot.lane.b32.xlu0 %v4404, 127
      %v4567 = vpop.permute.xlu0 %4566
      %4568 = vrot.lane.b32.xlu0 %v4405, 127
      %v4569 = vpop.permute.xlu0 %4568
      %4570 = vrot.lane.b32.xlu0 %v4406, 127
      %v4571 = vpop.permute.xlu0 %4570
      %4572 = vrot.lane.b32.xlu0 %v4407, 127
      %v4573 = vpop.permute.xlu0 %4572
      %4574 = vrot.lane.b32.xlu0 %v4408, 127
      %v4575 = vpop.permute.xlu0 %4574
      %4576 = vrot.lane.b32.xlu0 %v4409, 127
      %v4577 = vpop.permute.xlu0 %4576
      %4578 = vrot.lane.b32.xlu0 %v4410, 127
      %v4579 = vpop.permute.xlu0 %4578
      %4580 = vrot.lane.b32.xlu0 %v4411, 127
      %v4581 = vpop.permute.xlu0 %4580
      %4582 = vrot.lane.b32.xlu0 %v4412, 127
      %v4583 = vpop.permute.xlu0 %4582
      %4584 = vrot.lane.b32.xlu0 %v4413, 127
      %v4585 = vpop.permute.xlu0 %4584
      %4586 = vrot.lane.b32.xlu0 %v4414, 127
      %v4587 = vpop.permute.xlu0 %4586
      %4588 = vrot.lane.b32.xlu0 %v4415, 127
      %v4589 = vpop.permute.xlu0 %4588
      %4590 = vrot.lane.b32.xlu0 %v4416, 127
      %v4591 = vpop.permute.xlu0 %4590
      %4592 = vrot.lane.b32.xlu0 %v4417, 127
      %v4593 = vpop.permute.xlu0 %4592
      %4594 = vrot.lane.b32.xlu0 %v4418, 127
      %v4595 = vpop.permute.xlu0 %4594
      %4596 = vrot.lane.b32.xlu0 %v4419, 127
      %v4597 = vpop.permute.xlu0 %4596
      %4598 = vrot.lane.b32.xlu0 %v4420, 127
      %v4599 = vpop.permute.xlu0 %4598
      %4600 = vrot.lane.b32.xlu0 %v4421, 127
      %v4601 = vpop.permute.xlu0 %4600
      %4602 = vrot.lane.b32.xlu0 %v4422, 127
      %v4603 = vpop.permute.xlu0 %4602
      %4604 = vrot.lane.b32.xlu0 %v4423, 127
      %v4605 = vpop.permute.xlu0 %4604
      %4606 = vrot.lane.b32.xlu0 %v4424, 127
      %v4607 = vpop.permute.xlu0 %4606
      %4608 = vrot.lane.b32.xlu0 %v4425, 127
      %v4609 = vpop.permute.xlu0 %4608
      %4610 = vrot.lane.b32.xlu0 %v4426, 127
      %v4611 = vpop.permute.xlu0 %4610
      %4612 = vrot.lane.b32.xlu0 %v4427, 127
      %v4613 = vpop.permute.xlu0 %4612
      %4614 = vrot.lane.b32.xlu0 %v4428, 127
      %v4615 = vpop.permute.xlu0 %4614
      %4616 = vrot.lane.b32.xlu0 %v4429, 127
      %v4617 = vpop.permute.xlu0 %4616
      %4618 = vrot.lane.b32.xlu0 %v4430, 127
      %v4619 = vpop.permute.xlu0 %4618
      %4620 = vrot.lane.b32.xlu0 %v4431, 127
      %v4621 = vpop.permute.xlu0 %4620
      %4622 = vrot.lane.b32.xlu0 %v4432, 127
      %v4623 = vpop.permute.xlu0 %4622
      %4624 = vrot.lane.b32.xlu0 %v4433, 127
      %v4625 = vpop.permute.xlu0 %4624
      %v4626 = vmul.f32 %v4563, %v804
      %v4627 = vmul.f32 %v4565, %v804
      %v4628 = vmul.f32 %v4567, %v804
      %v4629 = vmul.f32 %v4569, %v804
      %v4630 = vmul.f32 %v4571, %v804
      %v4631 = vmul.f32 %v4573, %v804
      %v4632 = vmul.f32 %v4575, %v804
      %v4633 = vmul.f32 %v4577, %v804
      %v4634 = vmul.f32 %v4579, %v804
      %v4635 = vmul.f32 %v4581, %v804
      %v4636 = vmul.f32 %v4583, %v804
      %v4637 = vmul.f32 %v4585, %v804
      %v4638 = vmul.f32 %v4587, %v804
      %v4639 = vmul.f32 %v4589, %v804
      %v4640 = vmul.f32 %v4591, %v804
      %v4641 = vmul.f32 %v4593, %v804
      %v4642 = vmul.f32 %v4595, %v804
      %v4643 = vmul.f32 %v4597, %v804
      %v4644 = vmul.f32 %v4599, %v804
      %v4645 = vmul.f32 %v4601, %v804
      %v4646 = vmul.f32 %v4603, %v804
      %v4647 = vmul.f32 %v4605, %v804
      %v4648 = vmul.f32 %v4607, %v804
      %v4649 = vmul.f32 %v4609, %v804
      %v4650 = vmul.f32 %v4611, %v804
      %v4651 = vmul.f32 %v4613, %v804
      %v4652 = vmul.f32 %v4615, %v804
      %v4653 = vmul.f32 %v4617, %v804
      %v4654 = vmul.f32 %v4619, %v804
      %v4655 = vmul.f32 %v4621, %v804
      %v4656 = vmul.f32 %v4623, %v804
      %v4657 = vmul.f32 %v4625, %v804
      %v4658 = vpack.c.bf16 %v4531, %v4530
      %v4659 = vpack.c.bf16 %v4533, %v4532
      %v4660 = vpack.c.bf16 %v4535, %v4534
      %v4661 = vpack.c.bf16 %v4537, %v4536
      %v4662 = vpack.c.bf16 %v4539, %v4538
      %v4663 = vpack.c.bf16 %v4541, %v4540
      %v4664 = vpack.c.bf16 %v4543, %v4542
      %v4665 = vpack.c.bf16 %v4545, %v4544
      %v4666 = vpack.c.bf16 %v4547, %v4546
      %v4667 = vpack.c.bf16 %v4549, %v4548
      %v4668 = vpack.c.bf16 %v4551, %v4550
      %v4669 = vpack.c.bf16 %v4553, %v4552
      %v4670 = vpack.c.bf16 %v4555, %v4554
      %v4671 = vpack.c.bf16 %v4557, %v4556
      %v4672 = vpack.c.bf16 %v4559, %v4558
      %v4673 = vpack.c.bf16 %v4561, %v4560
      %v4674 = vpack.c.bf16 %v4403, %v4402
      %v4675 = vpack.c.bf16 %v4405, %v4404
      %v4676 = vpack.c.bf16 %v4407, %v4406
      %v4677 = vpack.c.bf16 %v4409, %v4408
      %v4678 = vpack.c.bf16 %v4411, %v4410
      %v4679 = vpack.c.bf16 %v4413, %v4412
      %v4680 = vpack.c.bf16 %v4415, %v4414
      %v4681 = vpack.c.bf16 %v4417, %v4416
      %v4682 = vpack.c.bf16 %v4419, %v4418
      %v4683 = vpack.c.bf16 %v4421, %v4420
      %v4684 = vpack.c.bf16 %v4423, %v4422
      %v4685 = vpack.c.bf16 %v4425, %v4424
      %v4686 = vpack.c.bf16 %v4427, %v4426
      %v4687 = vpack.c.bf16 %v4429, %v4428
      %v4688 = vpack.c.bf16 %v4431, %v4430
      %v4689 = vpack.c.bf16 %v4433, %v4432
      %v4690 = vpack.c.bf16 %v4627, %v4626
      %v4691 = vpack.c.bf16 %v4629, %v4628
      %v4692 = vpack.c.bf16 %v4631, %v4630
      %v4693 = vpack.c.bf16 %v4633, %v4632
      %v4694 = vpack.c.bf16 %v4635, %v4634
      %v4695 = vpack.c.bf16 %v4637, %v4636
      %v4696 = vpack.c.bf16 %v4639, %v4638
      %v4697 = vpack.c.bf16 %v4641, %v4640
      %v4698 = vpack.c.bf16 %v4643, %v4642
      %v4699 = vpack.c.bf16 %v4645, %v4644
      %v4700 = vpack.c.bf16 %v4647, %v4646
      %v4701 = vpack.c.bf16 %v4649, %v4648
      %v4702 = vpack.c.bf16 %v4651, %v4650
      %v4703 = vpack.c.bf16 %v4653, %v4652
      %v4704 = vpack.c.bf16 %v4655, %v4654
      %v4705 = vpack.c.bf16 %v4657, %v4656
      %v4706 = vld [vmem:[%s21] sm:$0xff]
      %v4707 = vld [vmem:[%s21 + $0x8] sm:$0xff]
      %v4708 = vld [vmem:[%s21 + $0x10] sm:$0xff]
      %v4709 = vld [vmem:[%s21 + $0x18] sm:$0xff]
      %v4710 = vld [vmem:[%s21 + $0x20] sm:$0xff]
      %v4711 = vld [vmem:[%s21 + $0x28] sm:$0xff]
      %v4712 = vld [vmem:[%s21 + $0x30] sm:$0xff]
      %v4713 = vld [vmem:[%s21 + $0x38] sm:$0xff]
      %v4714 = vld [vmem:[%s21 + $0x40] sm:$0xff]
      %v4715 = vld [vmem:[%s21 + $0x48] sm:$0xff]
      %v4716 = vld [vmem:[%s21 + $0x50] sm:$0xff]
      %v4717 = vld [vmem:[%s21 + $0x58] sm:$0xff]
      %v4718 = vld [vmem:[%s21 + $0x60] sm:$0xff]
      %v4719 = vld [vmem:[%s21 + $0x68] sm:$0xff]
      %v4720 = vld [vmem:[%s21 + $0x70] sm:$0xff]
      %v4721 = vld [vmem:[%s21 + $0x78] sm:$0xff]
      %v4722 = vld [vmem:[%s21 + $0x80] sm:$0xff]
      %v4723 = vld [vmem:[%s21 + $0x88] sm:$0xff]
      %v4724 = vld [vmem:[%s21 + $0x90] sm:$0xff]
      %v4725 = vld [vmem:[%s21 + $0x98] sm:$0xff]
      %v4726 = vld [vmem:[%s21 + $0xa0] sm:$0xff]
      %v4727 = vld [vmem:[%s21 + $0xa8] sm:$0xff]
      %v4728 = vld [vmem:[%s21 + $0xb0] sm:$0xff]
      %v4729 = vld [vmem:[%s21 + $0xb8] sm:$0xff]
      %v4730 = vld [vmem:[%s21 + $0xc0] sm:$0xff]
      %v4731 = vld [vmem:[%s21 + $0xc8] sm:$0xff]
      %v4732 = vld [vmem:[%s21 + $0xd0] sm:$0xff]
      %v4733 = vld [vmem:[%s21 + $0xd8] sm:$0xff]
      %v4734 = vld [vmem:[%s21 + $0xe0] sm:$0xff]
      %v4735 = vld [vmem:[%s21 + $0xe8] sm:$0xff]
      %v4736 = vld [vmem:[%s21 + $0xf0] sm:$0xff]
      %v4737 = vld [vmem:[%s21 + $0xf8] sm:$0xff]
      %v4738 = vld [vmem:[%s21 + $0x100] sm:$0xff]
      %v4739 = vld [vmem:[%s21 + $0x108] sm:$0xff]
      %v4740 = vld [vmem:[%s21 + $0x110] sm:$0xff]
      %v4741 = vld [vmem:[%s21 + $0x118] sm:$0xff]
      %v4742 = vld [vmem:[%s21 + $0x120] sm:$0xff]
      %v4743 = vld [vmem:[%s21 + $0x128] sm:$0xff]
      %v4744 = vld [vmem:[%s21 + $0x130] sm:$0xff]
      %v4745 = vld [vmem:[%s21 + $0x138] sm:$0xff]
      %v4746 = vld [vmem:[%s21 + $0x140] sm:$0xff]
      %v4747 = vld [vmem:[%s21 + $0x148] sm:$0xff]
      %v4748 = vld [vmem:[%s21 + $0x150] sm:$0xff]
      %v4749 = vld [vmem:[%s21 + $0x158] sm:$0xff]
      %v4750 = vld [vmem:[%s21 + $0x160] sm:$0xff]
      %v4751 = vld [vmem:[%s21 + $0x168] sm:$0xff]
      %v4752 = vld [vmem:[%s21 + $0x170] sm:$0xff]
      %v4753 = vld [vmem:[%s21 + $0x178] sm:$0xff]
      %v4754 = vld [vmem:[%s21 + $0x180] sm:$0xff]
      %v4755 = vld [vmem:[%s21 + $0x188] sm:$0xff]
      %v4756 = vld [vmem:[%s21 + $0x190] sm:$0xff]
      %v4757 = vld [vmem:[%s21 + $0x198] sm:$0xff]
      %v4758 = vld [vmem:[%s21 + $0x1a0] sm:$0xff]
      %v4759 = vld [vmem:[%s21 + $0x1a8] sm:$0xff]
      %v4760 = vld [vmem:[%s21 + $0x1b0] sm:$0xff]
      %v4761 = vld [vmem:[%s21 + $0x1b8] sm:$0xff]
      %v4762 = vld [vmem:[%s21 + $0x1c0] sm:$0xff]
      %v4763 = vld [vmem:[%s21 + $0x1c8] sm:$0xff]
      %v4764 = vld [vmem:[%s21 + $0x1d0] sm:$0xff]
      %v4765 = vld [vmem:[%s21 + $0x1d8] sm:$0xff]
      %v4766 = vld [vmem:[%s21 + $0x1e0] sm:$0xff]
      %v4767 = vld [vmem:[%s21 + $0x1e8] sm:$0xff]
      %v4768 = vld [vmem:[%s21 + $0x1f0] sm:$0xff]
      %v4769 = vld [vmem:[%s21 + $0x1f8] sm:$0xff]
      %v4770 = vld [vmem:[%s21 + $0x200] sm:$0xff]
      %v4771 = vld [vmem:[%s21 + $0x208] sm:$0xff]
      %v4772 = vld [vmem:[%s21 + $0x210] sm:$0xff]
      %v4773 = vld [vmem:[%s21 + $0x218] sm:$0xff]
      %v4774 = vld [vmem:[%s21 + $0x220] sm:$0xff]
      %v4775 = vld [vmem:[%s21 + $0x228] sm:$0xff]
      %v4776 = vld [vmem:[%s21 + $0x230] sm:$0xff]
      %v4777 = vld [vmem:[%s21 + $0x238] sm:$0xff]
      %v4778 = vld [vmem:[%s21 + $0x240] sm:$0xff]
      %v4779 = vld [vmem:[%s21 + $0x248] sm:$0xff]
      %v4780 = vld [vmem:[%s21 + $0x250] sm:$0xff]
      %v4781 = vld [vmem:[%s21 + $0x258] sm:$0xff]
      %v4782 = vld [vmem:[%s21 + $0x260] sm:$0xff]
      %v4783 = vld [vmem:[%s21 + $0x268] sm:$0xff]
      %v4784 = vld [vmem:[%s21 + $0x270] sm:$0xff]
      %v4785 = vld [vmem:[%s21 + $0x278] sm:$0xff]
      %v4786 = vld [vmem:[%s21 + $0x280] sm:$0xff]
      %v4787 = vld [vmem:[%s21 + $0x288] sm:$0xff]
      %v4788 = vld [vmem:[%s21 + $0x290] sm:$0xff]
      %v4789 = vld [vmem:[%s21 + $0x298] sm:$0xff]
      %v4790 = vld [vmem:[%s21 + $0x2a0] sm:$0xff]
      %v4791 = vld [vmem:[%s21 + $0x2a8] sm:$0xff]
      %v4792 = vld [vmem:[%s21 + $0x2b0] sm:$0xff]
      %v4793 = vld [vmem:[%s21 + $0x2b8] sm:$0xff]
      %v4794 = vld [vmem:[%s21 + $0x2c0] sm:$0xff]
      %v4795 = vld [vmem:[%s21 + $0x2c8] sm:$0xff]
      %v4796 = vld [vmem:[%s21 + $0x2d0] sm:$0xff]
      %v4797 = vld [vmem:[%s21 + $0x2d8] sm:$0xff]
      %v4798 = vld [vmem:[%s21 + $0x2e0] sm:$0xff]
      %v4799 = vld [vmem:[%s21 + $0x2e8] sm:$0xff]
      %v4800 = vld [vmem:[%s21 + $0x2f0] sm:$0xff]
      %v4801 = vld [vmem:[%s21 + $0x2f8] sm:$0xff]
      %v4898 = vunpack.c.l.b16 %v4706
      %v4899 = vunpack.c.h.b16 %v4706
      %v4900 = vunpack.c.l.b16 %v4707
      %v4901 = vunpack.c.h.b16 %v4707
      %v4902 = vunpack.c.l.b16 %v4708
      %v4903 = vunpack.c.h.b16 %v4708
      %v4904 = vunpack.c.l.b16 %v4709
      %v4905 = vunpack.c.h.b16 %v4709
      %v4906 = vunpack.c.l.b16 %v4710
      %v4907 = vunpack.c.h.b16 %v4710
      %v4908 = vunpack.c.l.b16 %v4711
      %v4909 = vunpack.c.h.b16 %v4711
      %v4910 = vunpack.c.l.b16 %v4712
      %v4911 = vunpack.c.h.b16 %v4712
      %v4912 = vunpack.c.l.b16 %v4713
      %v4913 = vunpack.c.h.b16 %v4713
      %v4914 = vunpack.c.l.b16 %v4714
      %v4915 = vunpack.c.h.b16 %v4714
      %v4916 = vunpack.c.l.b16 %v4715
      %v4917 = vunpack.c.h.b16 %v4715
      %v4918 = vunpack.c.l.b16 %v4716
      %v4919 = vunpack.c.h.b16 %v4716
      %v4920 = vunpack.c.l.b16 %v4717
      %v4921 = vunpack.c.h.b16 %v4717
      %v4922 = vunpack.c.l.b16 %v4718
      %v4923 = vunpack.c.h.b16 %v4718
      %v4924 = vunpack.c.l.b16 %v4719
      %v4925 = vunpack.c.h.b16 %v4719
      %v4926 = vunpack.c.l.b16 %v4720
      %v4927 = vunpack.c.h.b16 %v4720
      %v4928 = vunpack.c.l.b16 %v4721
      %v4929 = vunpack.c.h.b16 %v4721
      %v4930 = vunpack.c.l.b16 %v4722
      %v4931 = vunpack.c.h.b16 %v4722
      %v4932 = vunpack.c.l.b16 %v4723
      %v4933 = vunpack.c.h.b16 %v4723
      %v4934 = vunpack.c.l.b16 %v4724
      %v4935 = vunpack.c.h.b16 %v4724
      %v4936 = vunpack.c.l.b16 %v4725
      %v4937 = vunpack.c.h.b16 %v4725
      %v4938 = vunpack.c.l.b16 %v4726
      %v4939 = vunpack.c.h.b16 %v4726
      %v4940 = vunpack.c.l.b16 %v4727
      %v4941 = vunpack.c.h.b16 %v4727
      %v4942 = vunpack.c.l.b16 %v4728
      %v4943 = vunpack.c.h.b16 %v4728
      %v4944 = vunpack.c.l.b16 %v4729
      %v4945 = vunpack.c.h.b16 %v4729
      %v4946 = vunpack.c.l.b16 %v4730
      %v4947 = vunpack.c.h.b16 %v4730
      %v4948 = vunpack.c.l.b16 %v4731
      %v4949 = vunpack.c.h.b16 %v4731
      %v4950 = vunpack.c.l.b16 %v4732
      %v4951 = vunpack.c.h.b16 %v4732
      %v4952 = vunpack.c.l.b16 %v4733
      %v4953 = vunpack.c.h.b16 %v4733
      %v4954 = vunpack.c.l.b16 %v4734
      %v4955 = vunpack.c.h.b16 %v4734
      %v4956 = vunpack.c.l.b16 %v4735
      %v4957 = vunpack.c.h.b16 %v4735
      %v4958 = vunpack.c.l.b16 %v4736
      %v4959 = vunpack.c.h.b16 %v4736
      %v4960 = vunpack.c.l.b16 %v4737
      %v4961 = vunpack.c.h.b16 %v4737
      %v4962 = vunpack.c.l.b16 %v4738
      %v4963 = vunpack.c.h.b16 %v4738
      %v4964 = vunpack.c.l.b16 %v4739
      %v4965 = vunpack.c.h.b16 %v4739
      %v4966 = vunpack.c.l.b16 %v4740
      %v4967 = vunpack.c.h.b16 %v4740
      %v4968 = vunpack.c.l.b16 %v4741
      %v4969 = vunpack.c.h.b16 %v4741
      %v4970 = vunpack.c.l.b16 %v4742
      %v4971 = vunpack.c.h.b16 %v4742
      %v4972 = vunpack.c.l.b16 %v4743
      %v4973 = vunpack.c.h.b16 %v4743
      %v4974 = vunpack.c.l.b16 %v4744
      %v4975 = vunpack.c.h.b16 %v4744
      %v4976 = vunpack.c.l.b16 %v4745
      %v4977 = vunpack.c.h.b16 %v4745
      %v4978 = vunpack.c.l.b16 %v4746
      %v4979 = vunpack.c.h.b16 %v4746
      %v4980 = vunpack.c.l.b16 %v4747
      %v4981 = vunpack.c.h.b16 %v4747
      %v4982 = vunpack.c.l.b16 %v4748
      %v4983 = vunpack.c.h.b16 %v4748
      %v4984 = vunpack.c.l.b16 %v4749
      %v4985 = vunpack.c.h.b16 %v4749
      %v4986 = vunpack.c.l.b16 %v4750
      %v4987 = vunpack.c.h.b16 %v4750
      %v4988 = vunpack.c.l.b16 %v4751
      %v4989 = vunpack.c.h.b16 %v4751
      %v4990 = vunpack.c.l.b16 %v4752
      %v4991 = vunpack.c.h.b16 %v4752
      %v4992 = vunpack.c.l.b16 %v4753
      %v4993 = vunpack.c.h.b16 %v4753
      %v4994 = vunpack.c.l.b16 %v4754
      %v4995 = vunpack.c.h.b16 %v4754
      %v4996 = vunpack.c.l.b16 %v4755
      %v4997 = vunpack.c.h.b16 %v4755
      %v4998 = vunpack.c.l.b16 %v4756
      %v4999 = vunpack.c.h.b16 %v4756
      %v5000 = vunpack.c.l.b16 %v4757
      %v5001 = vunpack.c.h.b16 %v4757
      %v5002 = vunpack.c.l.b16 %v4758
      %v5003 = vunpack.c.h.b16 %v4758
      %v5004 = vunpack.c.l.b16 %v4759
      %v5005 = vunpack.c.h.b16 %v4759
      %v5006 = vunpack.c.l.b16 %v4760
      %v5007 = vunpack.c.h.b16 %v4760
      %v5008 = vunpack.c.l.b16 %v4761
      %v5009 = vunpack.c.h.b16 %v4761
      %v5010 = vunpack.c.l.b16 %v4762
      %v5011 = vunpack.c.h.b16 %v4762
      %v5012 = vunpack.c.l.b16 %v4763
      %v5013 = vunpack.c.h.b16 %v4763
      %v5014 = vunpack.c.l.b16 %v4764
      %v5015 = vunpack.c.h.b16 %v4764
      %v5016 = vunpack.c.l.b16 %v4765
      %v5017 = vunpack.c.h.b16 %v4765
      %v5018 = vunpack.c.l.b16 %v4766
      %v5019 = vunpack.c.h.b16 %v4766
      %v5020 = vunpack.c.l.b16 %v4767
      %v5021 = vunpack.c.h.b16 %v4767
      %v5022 = vunpack.c.l.b16 %v4768
      %v5023 = vunpack.c.h.b16 %v4768
      %v5024 = vunpack.c.l.b16 %v4769
      %v5025 = vunpack.c.h.b16 %v4769
      %v5026 = vunpack.c.l.b16 %v4770
      %v5027 = vunpack.c.h.b16 %v4770
      %v5028 = vunpack.c.l.b16 %v4771
      %v5029 = vunpack.c.h.b16 %v4771
      %v5030 = vunpack.c.l.b16 %v4772
      %v5031 = vunpack.c.h.b16 %v4772
      %v5032 = vunpack.c.l.b16 %v4773
      %v5033 = vunpack.c.h.b16 %v4773
      %v5034 = vunpack.c.l.b16 %v4774
      %v5035 = vunpack.c.h.b16 %v4774
      %v5036 = vunpack.c.l.b16 %v4775
      %v5037 = vunpack.c.h.b16 %v4775
      %v5038 = vunpack.c.l.b16 %v4776
      %v5039 = vunpack.c.h.b16 %v4776
      %v5040 = vunpack.c.l.b16 %v4777
      %v5041 = vunpack.c.h.b16 %v4777
      %v5042 = vunpack.c.l.b16 %v4778
      %v5043 = vunpack.c.h.b16 %v4778
      %v5044 = vunpack.c.l.b16 %v4779
      %v5045 = vunpack.c.h.b16 %v4779
      %v5046 = vunpack.c.l.b16 %v4780
      %v5047 = vunpack.c.h.b16 %v4780
      %v5048 = vunpack.c.l.b16 %v4781
      %v5049 = vunpack.c.h.b16 %v4781
      %v5050 = vunpack.c.l.b16 %v4782
      %v5051 = vunpack.c.h.b16 %v4782
      %v5052 = vunpack.c.l.b16 %v4783
      %v5053 = vunpack.c.h.b16 %v4783
      %v5054 = vunpack.c.l.b16 %v4784
      %v5055 = vunpack.c.h.b16 %v4784
      %v5056 = vunpack.c.l.b16 %v4785
      %v5057 = vunpack.c.h.b16 %v4785
      %v5058 = vunpack.c.l.b16 %v4786
      %v5059 = vunpack.c.h.b16 %v4786
      %v5060 = vunpack.c.l.b16 %v4787
      %v5061 = vunpack.c.h.b16 %v4787
      %v5062 = vunpack.c.l.b16 %v4788
      %v5063 = vunpack.c.h.b16 %v4788
      %v5064 = vunpack.c.l.b16 %v4789
      %v5065 = vunpack.c.h.b16 %v4789
      %v5066 = vunpack.c.l.b16 %v4790
      %v5067 = vunpack.c.h.b16 %v4790
      %v5068 = vunpack.c.l.b16 %v4791
      %v5069 = vunpack.c.h.b16 %v4791
      %v5070 = vunpack.c.l.b16 %v4792
      %v5071 = vunpack.c.h.b16 %v4792
      %v5072 = vunpack.c.l.b16 %v4793
      %v5073 = vunpack.c.h.b16 %v4793
      %v5074 = vunpack.c.l.b16 %v4794
      %v5075 = vunpack.c.h.b16 %v4794
      %v5076 = vunpack.c.l.b16 %v4795
      %v5077 = vunpack.c.h.b16 %v4795
      %v5078 = vunpack.c.l.b16 %v4796
      %v5079 = vunpack.c.h.b16 %v4796
      %v5080 = vunpack.c.l.b16 %v4797
      %v5081 = vunpack.c.h.b16 %v4797
      %v5082 = vunpack.c.l.b16 %v4798
      %v5083 = vunpack.c.h.b16 %v4798
      %v5084 = vunpack.c.l.b16 %v4799
      %v5085 = vunpack.c.h.b16 %v4799
      %v5086 = vunpack.c.l.b16 %v4800
      %v5087 = vunpack.c.h.b16 %v4800
      %v5088 = vunpack.c.l.b16 %v4801
      %v5089 = vunpack.c.h.b16 %v4801
      %v5090 = vpack.c.b16 %v4904, %v4898
      %v5091 = vpack.c.b16 %v4905, %v4899
      %v5092 = vpack.c.b16 %v4906, %v4900
      %v5093 = vpack.c.b16 %v4907, %v4901
      %v5094 = vpack.c.b16 %v4908, %v4902
      %v5095 = vpack.c.b16 %v4909, %v4903
      %v5096 = vpack.c.b16 %v4916, %v4910
      %v5097 = vpack.c.b16 %v4917, %v4911
      %v5098 = vpack.c.b16 %v4918, %v4912
      %v5099 = vpack.c.b16 %v4919, %v4913
      %v5100 = vpack.c.b16 %v4920, %v4914
      %v5101 = vpack.c.b16 %v4921, %v4915
      %v5102 = vpack.c.b16 %v4928, %v4922
      %v5103 = vpack.c.b16 %v4929, %v4923
      %v5104 = vpack.c.b16 %v4930, %v4924
      %v5105 = vpack.c.b16 %v4931, %v4925
      %v5106 = vpack.c.b16 %v4932, %v4926
      %v5107 = vpack.c.b16 %v4933, %v4927
      %v5108 = vpack.c.b16 %v4940, %v4934
      %v5109 = vpack.c.b16 %v4941, %v4935
      %v5110 = vpack.c.b16 %v4942, %v4936
      %v5111 = vpack.c.b16 %v4943, %v4937
      %v5112 = vpack.c.b16 %v4944, %v4938
      %v5113 = vpack.c.b16 %v4945, %v4939
      %v5114 = vpack.c.b16 %v4952, %v4946
      %v5115 = vpack.c.b16 %v4953, %v4947
      %v5116 = vpack.c.b16 %v4954, %v4948
      %v5117 = vpack.c.b16 %v4955, %v4949
      %v5118 = vpack.c.b16 %v4956, %v4950
      %v5119 = vpack.c.b16 %v4957, %v4951
      %v5120 = vpack.c.b16 %v4964, %v4958
      %v5121 = vpack.c.b16 %v4965, %v4959
      %v5122 = vpack.c.b16 %v4966, %v4960
      %v5123 = vpack.c.b16 %v4967, %v4961
      %v5124 = vpack.c.b16 %v4968, %v4962
      %v5125 = vpack.c.b16 %v4969, %v4963
      %v5126 = vpack.c.b16 %v4976, %v4970
      %v5127 = vpack.c.b16 %v4977, %v4971
      %v5128 = vpack.c.b16 %v4978, %v4972
      %v5129 = vpack.c.b16 %v4979, %v4973
      %v5130 = vpack.c.b16 %v4980, %v4974
      %v5131 = vpack.c.b16 %v4981, %v4975
      %v5132 = vpack.c.b16 %v4988, %v4982
      %v5133 = vpack.c.b16 %v4989, %v4983
      %v5134 = vpack.c.b16 %v4990, %v4984
      %v5135 = vpack.c.b16 %v4991, %v4985
      %v5136 = vpack.c.b16 %v4992, %v4986
      %v5137 = vpack.c.b16 %v4993, %v4987
      %v5138 = vpack.c.b16 %v5000, %v4994
      %v5139 = vpack.c.b16 %v5001, %v4995
      %v5140 = vpack.c.b16 %v5002, %v4996
      %v5141 = vpack.c.b16 %v5003, %v4997
      %v5142 = vpack.c.b16 %v5004, %v4998
      %v5143 = vpack.c.b16 %v5005, %v4999
      %v5144 = vpack.c.b16 %v5012, %v5006
      %v5145 = vpack.c.b16 %v5013, %v5007
      %v5146 = vpack.c.b16 %v5014, %v5008
      %v5147 = vpack.c.b16 %v5015, %v5009
      %v5148 = vpack.c.b16 %v5016, %v5010
      %v5149 = vpack.c.b16 %v5017, %v5011
      %v5150 = vpack.c.b16 %v5024, %v5018
      %v5151 = vpack.c.b16 %v5025, %v5019
      %v5152 = vpack.c.b16 %v5026, %v5020
      %v5153 = vpack.c.b16 %v5027, %v5021
      %v5154 = vpack.c.b16 %v5028, %v5022
      %v5155 = vpack.c.b16 %v5029, %v5023
      %v5156 = vpack.c.b16 %v5036, %v5030
      %v5157 = vpack.c.b16 %v5037, %v5031
      %v5158 = vpack.c.b16 %v5038, %v5032
      %v5159 = vpack.c.b16 %v5039, %v5033
      %v5160 = vpack.c.b16 %v5040, %v5034
      %v5161 = vpack.c.b16 %v5041, %v5035
      %v5162 = vpack.c.b16 %v5048, %v5042
      %v5163 = vpack.c.b16 %v5049, %v5043
      %v5164 = vpack.c.b16 %v5050, %v5044
      %v5165 = vpack.c.b16 %v5051, %v5045
      %v5166 = vpack.c.b16 %v5052, %v5046
      %v5167 = vpack.c.b16 %v5053, %v5047
      %v5168 = vpack.c.b16 %v5060, %v5054
      %v5169 = vpack.c.b16 %v5061, %v5055
      %v5170 = vpack.c.b16 %v5062, %v5056
      %v5171 = vpack.c.b16 %v5063, %v5057
      %v5172 = vpack.c.b16 %v5064, %v5058
      %v5173 = vpack.c.b16 %v5065, %v5059
      %v5174 = vpack.c.b16 %v5072, %v5066
      %v5175 = vpack.c.b16 %v5073, %v5067
      %v5176 = vpack.c.b16 %v5074, %v5068
      %v5177 = vpack.c.b16 %v5075, %v5069
      %v5178 = vpack.c.b16 %v5076, %v5070
      %v5179 = vpack.c.b16 %v5077, %v5071
      %v5180 = vpack.c.b16 %v5084, %v5078
      %v5181 = vpack.c.b16 %v5085, %v5079
      %v5182 = vpack.c.b16 %v5086, %v5080
      %v5183 = vpack.c.b16 %v5087, %v5081
      %v5184 = vpack.c.b16 %v5088, %v5082
      %v5185 = vpack.c.b16 %v5089, %v5083
      %5282 = vmatprep.subr.bf16.mxu0 0
      %5283 = vmatpush1.bf16.msra.mxu0 %v4658
      %5284 = vmatprep.subr.bf16.mxu0 0
      %5285 = vmatpush1.bf16.msra.mxu0 %v4659
      %5286 = vmatprep.subr.bf16.mxu0 0
      %5287 = vmatpush1.bf16.msra.mxu0 %v4660
      %5288 = vmatprep.subr.bf16.mxu0 0
      %5289 = vmatpush1.bf16.msra.mxu0 %v4661
      %5290 = vmatprep.subr.bf16.mxu0 0
      %5291 = vmatpush1.bf16.msra.mxu0 %v4662
      %5292 = vmatprep.subr.bf16.mxu0 0
      %5293 = vmatpush1.bf16.msra.mxu0 %v4663
      %5294 = vmatprep.subr.bf16.mxu0 0
      %5295 = vmatpush1.bf16.msra.mxu0 %v4664
      %5296 = vmatprep.subr.bf16.mxu0 0
      %5297 = vmatpush1.bf16.msra.mxu0 %v4665
      %5298 = vmatprep.subr.bf16.mxu0 0
      %5299 = vmatpush1.bf16.msra.mxu0 %v4666
      %5300 = vmatprep.subr.bf16.mxu0 0
      %5301 = vmatpush1.bf16.msra.mxu0 %v4667
      %5302 = vmatprep.subr.bf16.mxu0 0
      %5303 = vmatpush1.bf16.msra.mxu0 %v4668
      %5304 = vmatprep.subr.bf16.mxu0 0
      %5305 = vmatpush1.bf16.msra.mxu0 %v4669
      %5306 = vmatprep.subr.bf16.mxu0 0
      %5307 = vmatpush1.bf16.msra.mxu0 %v4670
      %5308 = vmatprep.subr.bf16.mxu0 0
      %5309 = vmatpush1.bf16.msra.mxu0 %v4671
      %5310 = vmatprep.subr.bf16.mxu0 0
      %5311 = vmatpush1.bf16.msra.mxu0 %v4672
      %5312 = vmatprep.subr.bf16.mxu0 0
      %5313 = vmatpush1.bf16.msra.mxu0 %v4673
      %5314 = vmatprep.mubr.bf16.mxu0 %v5091
      %5315 = vmatmul.mubr.bf16.gmra.mrb[0].mxu0 %v5090
      %v5316 = vpop.f32.mrb[0].mxu0
      %v5317 = vadd.f32 0.0, %v5316
      %v5318 = vpop.f32.mrb[0].mxu0
      %v5319 = vpop.f32.mrb[0].mxu0
      %v5320 = vadd.f32 0.0, %v5319
      %v5321 = vpop.f32.mrb[0].mxu0
      %5322 = vmatprep.mubr.bf16.mxu0 %v5097
      %5323 = vmatmul.mubr.bf16.gmra.mrb[0].mxu0 %v5096
      %v5324 = vpop.f32.mrb[0].mxu0
      %v5325 = vadd.f32 0.0, %v5324
      %v5326 = vpop.f32.mrb[0].mxu0
      %v5327 = vpop.f32.mrb[0].mxu0
      %v5328 = vadd.f32 0.0, %v5327
      %v5329 = vpop.f32.mrb[0].mxu0
      %5330 = vmatprep.mubr.bf16.mxu0 %v5103
      %5331 = vmatmul.mubr.bf16.gmra.mrb[0].mxu0 %v5102
      %v5332 = vpop.f32.mrb[0].mxu0
      %v5333 = vadd.f32 0.0, %v5332
      %v5334 = vpop.f32.mrb[0].mxu0
      %v5335 = vpop.f32.mrb[0].mxu0
      %v5336 = vadd.f32 0.0, %v5335
      %v5337 = vpop.f32.mrb[0].mxu0
      %5338 = vmatprep.mubr.bf16.mxu0 %v5109
      %5339 = vmatmul.mubr.bf16.gmra.mrb[0].mxu0 %v5108
      %v5340 = vpop.f32.mrb[0].mxu0
      %v5341 = vadd.f32 0.0, %v5340
      %v5342 = vpop.f32.mrb[0].mxu0
      %v5343 = vpop.f32.mrb[0].mxu0
      %v5344 = vadd.f32 0.0, %v5343
      %v5345 = vpop.f32.mrb[0].mxu0
      %5346 = vmatprep.mubr.bf16.mxu0 %v5115
      %5347 = vmatmul.mubr.bf16.gmra.mrb[0].mxu0 %v5114
      %v5348 = vpop.f32.mrb[0].mxu0
      %v5349 = vadd.f32 0.0, %v5348
      %v5350 = vpop.f32.mrb[0].mxu0
      %v5351 = vpop.f32.mrb[0].mxu0
      %v5352 = vadd.f32 0.0, %v5351
      %v5353 = vpop.f32.mrb[0].mxu0
      %5354 = vmatprep.mubr.bf16.mxu0 %v5121
      %5355 = vmatmul.mubr.bf16.gmra.mrb[0].mxu0 %v5120
      %v5356 = vpop.f32.mrb[0].mxu0
      %v5357 = vadd.f32 0.0, %v5356
      %v5358 = vpop.f32.mrb[0].mxu0
      %v5359 = vpop.f32.mrb[0].mxu0
      %v5360 = vadd.f32 0.0, %v5359
      %v5361 = vpop.f32.mrb[0].mxu0
      %5362 = vmatprep.mubr.bf16.mxu0 %v5127
      %5363 = vmatmul.mubr.bf16.gmra.mrb[0].mxu0 %v5126
      %v5364 = vpop.f32.mrb[0].mxu0
      %v5365 = vadd.f32 0.0, %v5364
      %v5366 = vpop.f32.mrb[0].mxu0
      %v5367 = vpop.f32.mrb[0].mxu0
      %v5368 = vadd.f32 0.0, %v5367
      %v5369 = vpop.f32.mrb[0].mxu0
      %5370 = vmatprep.mubr.bf16.mxu0 %v5133
      %5371 = vmatmul.mubr.bf16.gmra.mrb[0].mxu0 %v5132
      %v5372 = vpop.f32.mrb[0].mxu0
      %v5373 = vadd.f32 0.0, %v5372
      %v5374 = vpop.f32.mrb[0].mxu0
      %v5375 = vpop.f32.mrb[0].mxu0
      %v5376 = vadd.f32 0.0, %v5375
      %v5377 = vpop.f32.mrb[0].mxu0
      %5378 = vmatprep.mubr.bf16.mxu0 %v5139
      %5379 = vmatmul.mubr.bf16.gmra.mrb[0].mxu0 %v5138
      %v5380 = vpop.f32.mrb[0].mxu0
      %v5381 = vadd.f32 0.0, %v5380
      %v5382 = vpop.f32.mrb[0].mxu0
      %v5383 = vpop.f32.mrb[0].mxu0
      %v5384 = vadd.f32 0.0, %v5383
      %v5385 = vpop.f32.mrb[0].mxu0
      %5386 = vmatprep.mubr.bf16.mxu0 %v5145
      %5387 = vmatmul.mubr.bf16.gmra.mrb[0].mxu0 %v5144
      %v5388 = vpop.f32.mrb[0].mxu0
      %v5389 = vadd.f32 0.0, %v5388
      %v5390 = vpop.f32.mrb[0].mxu0
      %v5391 = vpop.f32.mrb[0].mxu0
      %v5392 = vadd.f32 0.0, %v5391
      %v5393 = vpop.f32.mrb[0].mxu0
      %5394 = vmatprep.mubr.bf16.mxu0 %v5151
      %5395 = vmatmul.mubr.bf16.gmra.mrb[0].mxu0 %v5150
      %v5396 = vpop.f32.mrb[0].mxu0
      %v5397 = vadd.f32 0.0, %v5396
      %v5398 = vpop.f32.mrb[0].mxu0
      %v5399 = vpop.f32.mrb[0].mxu0
      %v5400 = vadd.f32 0.0, %v5399
      %v5401 = vpop.f32.mrb[0].mxu0
      %5402 = vmatprep.mubr.bf16.mxu0 %v5157
      %5403 = vmatmul.mubr.bf16.gmra.mrb[0].mxu0 %v5156
      %v5404 = vpop.f32.mrb[0].mxu0
      %v5405 = vadd.f32 0.0, %v5404
      %v5406 = vpop.f32.mrb[0].mxu0
      %v5407 = vpop.f32.mrb[0].mxu0
      %v5408 = vadd.f32 0.0, %v5407
      %v5409 = vpop.f32.mrb[0].mxu0
      %5410 = vmatprep.mubr.bf16.mxu0 %v5163
      %5411 = vmatmul.mubr.bf16.gmra.mrb[0].mxu0 %v5162
      %v5412 = vpop.f32.mrb[0].mxu0
      %v5413 = vadd.f32 0.0, %v5412
      %v5414 = vpop.f32.mrb[0].mxu0
      %v5415 = vpop.f32.mrb[0].mxu0
      %v5416 = vadd.f32 0.0, %v5415
      %v5417 = vpop.f32.mrb[0].mxu0
      %5418 = vmatprep.mubr.bf16.mxu0 %v5169
      %5419 = vmatmul.mubr.bf16.gmra.mrb[0].mxu0 %v5168
      %v5420 = vpop.f32.mrb[0].mxu0
      %v5421 = vadd.f32 0.0, %v5420
      %v5422 = vpop.f32.mrb[0].mxu0
      %v5423 = vpop.f32.mrb[0].mxu0
      %v5424 = vadd.f32 0.0, %v5423
      %v5425 = vpop.f32.mrb[0].mxu0
      %5426 = vmatprep.mubr.bf16.mxu0 %v5175
      %5427 = vmatmul.mubr.bf16.gmra.mrb[0].mxu0 %v5174
      %v5428 = vpop.f32.mrb[0].mxu0
      %v5429 = vadd.f32 0.0, %v5428
      %v5430 = vpop.f32.mrb[0].mxu0
      %v5431 = vpop.f32.mrb[0].mxu0
      %v5432 = vadd.f32 0.0, %v5431
      %v5433 = vpop.f32.mrb[0].mxu0
      %5434 = vmatprep.mubr.bf16.mxu0 %v5181
      %5435 = vmatmul.mubr.bf16.gmra.mrb[0].mxu0 %v5180
      %v5436 = vpop.f32.mrb[0].mxu0
      %v5437 = vadd.f32 0.0, %v5436
      %v5438 = vpop.f32.mrb[0].mxu0
      %v5439 = vpop.f32.mrb[0].mxu0
      %v5440 = vadd.f32 0.0, %v5439
      %v5441 = vpop.f32.mrb[0].mxu0
      %5442 = vdwg.mxu0
      %5443 = vmatprep.subr.bf16.mxu0 0
      %5444 = vmatpush1.bf16.msra.mxu0 %v4674
      %5445 = vmatprep.subr.bf16.mxu0 0
      %5446 = vmatpush1.bf16.msra.mxu0 %v4675
      %5447 = vmatprep.subr.bf16.mxu0 0
      %5448 = vmatpush1.bf16.msra.mxu0 %v4676
      %5449 = vmatprep.subr.bf16.mxu0 0
      %5450 = vmatpush1.bf16.msra.mxu0 %v4677
      %5451 = vmatprep.subr.bf16.mxu0 0
      %5452 = vmatpush1.bf16.msra.mxu0 %v4678
      %5453 = vmatprep.subr.bf16.mxu0 0
      %5454 = vmatpush1.bf16.msra.mxu0 %v4679
      %5455 = vmatprep.subr.bf16.mxu0 0
      %5456 = vmatpush1.bf16.msra.mxu0 %v4680
      %5457 = vmatprep.subr.bf16.mxu0 0
      %5458 = vmatpush1.bf16.msra.mxu0 %v4681
      %5459 = vmatprep.subr.bf16.mxu0 0
      %5460 = vmatpush1.bf16.msra.mxu0 %v4682
      %5461 = vmatprep.subr.bf16.mxu0 0
      %5462 = vmatpush1.bf16.msra.mxu0 %v4683
      %5463 = vmatprep.subr.bf16.mxu0 0
      %5464 = vmatpush1.bf16.msra.mxu0 %v4684
      %5465 = vmatprep.subr.bf16.mxu0 0
      %5466 = vmatpush1.bf16.msra.mxu0 %v4685
      %5467 = vmatprep.subr.bf16.mxu0 0
      %5468 = vmatpush1.bf16.msra.mxu0 %v4686
      %5469 = vmatprep.subr.bf16.mxu0 0
      %5470 = vmatpush1.bf16.msra.mxu0 %v4687
      %5471 = vmatprep.subr.bf16.mxu0 0
      %5472 = vmatpush1.bf16.msra.mxu0 %v4688
      %5473 = vmatprep.subr.bf16.mxu0 0
      %5474 = vmatpush1.bf16.msra.mxu0 %v4689
      %5475 = vmatprep.mubr.bf16.mxu0 %v5093
      %5476 = vmatmul.mubr.bf16.gmra.mrb[0].mxu0 %v5092
      %v5477 = vpop.f32.mrb[0].mxu0
      %v5478 = vadd.f32 %v5317, %v5477
      %v5479 = vpop.f32.mrb[0].mxu0
      %v5480 = vpop.f32.mrb[0].mxu0
      %v5481 = vadd.f32 %v5320, %v5480
      %v5482 = vpop.f32.mrb[0].mxu0
      %5483 = vmatprep.mubr.bf16.mxu0 %v5099
      %5484 = vmatmul.mubr.bf16.gmra.mrb[0].mxu0 %v5098
      %v5485 = vpop.f32.mrb[0].mxu0
      %v5486 = vadd.f32 %v5325, %v5485
      %v5487 = vpop.f32.mrb[0].mxu0
      %v5488 = vpop.f32.mrb[0].mxu0
      %v5489 = vadd.f32 %v5328, %v5488
      %v5490 = vpop.f32.mrb[0].mxu0
      %5491 = vmatprep.mubr.bf16.mxu0 %v5105
      %5492 = vmatmul.mubr.bf16.gmra.mrb[0].mxu0 %v5104
      %v5493 = vpop.f32.mrb[0].mxu0
      %v5494 = vadd.f32 %v5333, %v5493
      %v5495 = vpop.f32.mrb[0].mxu0
      %v5496 = vpop.f32.mrb[0].mxu0
      %v5497 = vadd.f32 %v5336, %v5496
      %v5498 = vpop.f32.mrb[0].mxu0
      %5499 = vmatprep.mubr.bf16.mxu0 %v5111
      %5500 = vmatmul.mubr.bf16.gmra.mrb[0].mxu0 %v5110
      %v5501 = vpop.f32.mrb[0].mxu0
      %v5502 = vadd.f32 %v5341, %v5501
      %v5503 = vpop.f32.mrb[0].mxu0
      %v5504 = vpop.f32.mrb[0].mxu0
      %v5505 = vadd.f32 %v5344, %v5504
      %v5506 = vpop.f32.mrb[0].mxu0
      %5507 = vmatprep.mubr.bf16.mxu0 %v5117
      %5508 = vmatmul.mubr.bf16.gmra.mrb[0].mxu0 %v5116
      %v5509 = vpop.f32.mrb[0].mxu0
      %v5510 = vadd.f32 %v5349, %v5509
      %v5511 = vpop.f32.mrb[0].mxu0
      %v5512 = vpop.f32.mrb[0].mxu0
      %v5513 = vadd.f32 %v5352, %v5512
      %v5514 = vpop.f32.mrb[0].mxu0
      %5515 = vmatprep.mubr.bf16.mxu0 %v5123
      %5516 = vmatmul.mubr.bf16.gmra.mrb[0].mxu0 %v5122
      %v5517 = vpop.f32.mrb[0].mxu0
      %v5518 = vadd.f32 %v5357, %v5517
      %v5519 = vpop.f32.mrb[0].mxu0
      %v5520 = vpop.f32.mrb[0].mxu0
      %v5521 = vadd.f32 %v5360, %v5520
      %v5522 = vpop.f32.mrb[0].mxu0
      %5523 = vmatprep.mubr.bf16.mxu0 %v5129
      %5524 = vmatmul.mubr.bf16.gmra.mrb[0].mxu0 %v5128
      %v5525 = vpop.f32.mrb[0].mxu0
      %v5526 = vadd.f32 %v5365, %v5525
      %v5527 = vpop.f32.mrb[0].mxu0
      %v5528 = vpop.f32.mrb[0].mxu0
      %v5529 = vadd.f32 %v5368, %v5528
      %v5530 = vpop.f32.mrb[0].mxu0
      %5531 = vmatprep.mubr.bf16.mxu0 %v5135
      %5532 = vmatmul.mubr.bf16.gmra.mrb[0].mxu0 %v5134
      %v5533 = vpop.f32.mrb[0].mxu0
      %v5534 = vadd.f32 %v5373, %v5533
      %v5535 = vpop.f32.mrb[0].mxu0
      %v5536 = vpop.f32.mrb[0].mxu0
      %v5537 = vadd.f32 %v5376, %v5536
      %v5538 = vpop.f32.mrb[0].mxu0
      %5539 = vmatprep.mubr.bf16.mxu0 %v5141
      %5540 = vmatmul.mubr.bf16.gmra.mrb[0].mxu0 %v5140
      %v5541 = vpop.f32.mrb[0].mxu0
      %v5542 = vadd.f32 %v5381, %v5541
      %v5543 = vpop.f32.mrb[0].mxu0
      %v5544 = vpop.f32.mrb[0].mxu0
      %v5545 = vadd.f32 %v5384, %v5544
      %v5546 = vpop.f32.mrb[0].mxu0
      %5547 = vmatprep.mubr.bf16.mxu0 %v5147
      %5548 = vmatmul.mubr.bf16.gmra.mrb[0].mxu0 %v5146
      %v5549 = vpop.f32.mrb[0].mxu0
      %v5550 = vadd.f32 %v5389, %v5549
      %v5551 = vpop.f32.mrb[0].mxu0
      %v5552 = vpop.f32.mrb[0].mxu0
      %v5553 = vadd.f32 %v5392, %v5552
      %v5554 = vpop.f32.mrb[0].mxu0
      %5555 = vmatprep.mubr.bf16.mxu0 %v5153
      %5556 = vmatmul.mubr.bf16.gmra.mrb[0].mxu0 %v5152
      %v5557 = vpop.f32.mrb[0].mxu0
      %v5558 = vadd.f32 %v5397, %v5557
      %v5559 = vpop.f32.mrb[0].mxu0
      %v5560 = vpop.f32.mrb[0].mxu0
      %v5561 = vadd.f32 %v5400, %v5560
      %v5562 = vpop.f32.mrb[0].mxu0
      %5563 = vmatprep.mubr.bf16.mxu0 %v5159
      %5564 = vmatmul.mubr.bf16.gmra.mrb[0].mxu0 %v5158
      %v5565 = vpop.f32.mrb[0].mxu0
      %v5566 = vadd.f32 %v5405, %v5565
      %v5567 = vpop.f32.mrb[0].mxu0
      %v5568 = vpop.f32.mrb[0].mxu0
      %v5569 = vadd.f32 %v5408, %v5568
      %v5570 = vpop.f32.mrb[0].mxu0
      %5571 = vmatprep.mubr.bf16.mxu0 %v5165
      %5572 = vmatmul.mubr.bf16.gmra.mrb[0].mxu0 %v5164
      %v5573 = vpop.f32.mrb[0].mxu0
      %v5574 = vadd.f32 %v5413, %v5573
      %v5575 = vpop.f32.mrb[0].mxu0
      %v5576 = vpop.f32.mrb[0].mxu0
      %v5577 = vadd.f32 %v5416, %v5576
      %v5578 = vpop.f32.mrb[0].mxu0
      %5579 = vmatprep.mubr.bf16.mxu0 %v5171
      %5580 = vmatmul.mubr.bf16.gmra.mrb[0].mxu0 %v5170
      %v5581 = vpop.f32.mrb[0].mxu0
      %v5582 = vadd.f32 %v5421, %v5581
      %v5583 = vpop.f32.mrb[0].mxu0
      %v5584 = vpop.f32.mrb[0].mxu0
      %v5585 = vadd.f32 %v5424, %v5584
      %v5586 = vpop.f32.mrb[0].mxu0
      %5587 = vmatprep.mubr.bf16.mxu0 %v5177
      %5588 = vmatmul.mubr.bf16.gmra.mrb[0].mxu0 %v5176
      %v5589 = vpop.f32.mrb[0].mxu0
      %v5590 = vadd.f32 %v5429, %v5589
      %v5591 = vpop.f32.mrb[0].mxu0
      %v5592 = vpop.f32.mrb[0].mxu0
      %v5593 = vadd.f32 %v5432, %v5592
      %v5594 = vpop.f32.mrb[0].mxu0
      %5595 = vmatprep.mubr.bf16.mxu0 %v5183
      %5596 = vmatmul.mubr.bf16.gmra.mrb[0].mxu0 %v5182
      %v5597 = vpop.f32.mrb[0].mxu0
      %v5598 = vadd.f32 %v5437, %v5597
      %v5599 = vpop.f32.mrb[0].mxu0
      %v5600 = vpop.f32.mrb[0].mxu0
      %v5601 = vadd.f32 %v5440, %v5600
      %v5602 = vpop.f32.mrb[0].mxu0
      %5603 = vdwg.mxu0
      %5604 = vmatprep.subr.bf16.mxu0 0
      %5605 = vmatpush1.bf16.msra.mxu0 %v4690
      %5606 = vmatprep.subr.bf16.mxu0 0
      %5607 = vmatpush1.bf16.msra.mxu0 %v4691
      %5608 = vmatprep.subr.bf16.mxu0 0
      %5609 = vmatpush1.bf16.msra.mxu0 %v4692
      %5610 = vmatprep.subr.bf16.mxu0 0
      %5611 = vmatpush1.bf16.msra.mxu0 %v4693
      %5612 = vmatprep.subr.bf16.mxu0 0
      %5613 = vmatpush1.bf16.msra.mxu0 %v4694
      %5614 = vmatprep.subr.bf16.mxu0 0
      %5615 = vmatpush1.bf16.msra.mxu0 %v4695
      %5616 = vmatprep.subr.bf16.mxu0 0
      %5617 = vmatpush1.bf16.msra.mxu0 %v4696
      %5618 = vmatprep.subr.bf16.mxu0 0
      %5619 = vmatpush1.bf16.msra.mxu0 %v4697
      %5620 = vmatprep.subr.bf16.mxu0 0
      %5621 = vmatpush1.bf16.msra.mxu0 %v4698
      %5622 = vmatprep.subr.bf16.mxu0 0
      %5623 = vmatpush1.bf16.msra.mxu0 %v4699
      %5624 = vmatprep.subr.bf16.mxu0 0
      %5625 = vmatpush1.bf16.msra.mxu0 %v4700
      %5626 = vmatprep.subr.bf16.mxu0 0
      %5627 = vmatpush1.bf16.msra.mxu0 %v4701
      %5628 = vmatprep.subr.bf16.mxu0 0
      %5629 = vmatpush1.bf16.msra.mxu0 %v4702
      %5630 = vmatprep.subr.bf16.mxu0 0
      %5631 = vmatpush1.bf16.msra.mxu0 %v4703
      %5632 = vmatprep.subr.bf16.mxu0 0
      %5633 = vmatpush1.bf16.msra.mxu0 %v4704
      %5634 = vmatprep.subr.bf16.mxu0 0
      %5635 = vmatpush1.bf16.msra.mxu0 %v4705
      %5636 = vmatprep.mubr.bf16.mxu0 %v5095
      %5637 = vmatmul.mubr.bf16.gmra.mrb[0].mxu0 %v5094
      %v5638 = vpop.f32.mrb[0].mxu0
      %v5639 = vadd.f32 %v5478, %v5638
      %v5640 = vpop.f32.mrb[0].mxu0
      %v5641 = vpop.f32.mrb[0].mxu0
      %v5642 = vadd.f32 %v5481, %v5641
      %v5643 = vpop.f32.mrb[0].mxu0
      %5644 = vmatprep.mubr.bf16.mxu0 %v5101
      %5645 = vmatmul.mubr.bf16.gmra.mrb[0].mxu0 %v5100
      %v5646 = vpop.f32.mrb[0].mxu0
      %v5647 = vadd.f32 %v5486, %v5646
      %v5648 = vpop.f32.mrb[0].mxu0
      %v5649 = vpop.f32.mrb[0].mxu0
      %v5650 = vadd.f32 %v5489, %v5649
      %v5651 = vpop.f32.mrb[0].mxu0
      %5652 = vmatprep.mubr.bf16.mxu0 %v5107
      %5653 = vmatmul.mubr.bf16.gmra.mrb[0].mxu0 %v5106
      %v5654 = vpop.f32.mrb[0].mxu0
      %v5655 = vadd.f32 %v5494, %v5654
      %v5656 = vpop.f32.mrb[0].mxu0
      %v5657 = vpop.f32.mrb[0].mxu0
      %v5658 = vadd.f32 %v5497, %v5657
      %v5659 = vpop.f32.mrb[0].mxu0
      %5660 = vmatprep.mubr.bf16.mxu0 %v5113
      %5661 = vmatmul.mubr.bf16.gmra.mrb[0].mxu0 %v5112
      %v5662 = vpop.f32.mrb[0].mxu0
      %v5663 = vadd.f32 %v5502, %v5662
      %v5664 = vpop.f32.mrb[0].mxu0
      %v5665 = vpop.f32.mrb[0].mxu0
      %v5666 = vadd.f32 %v5505, %v5665
      %v5667 = vpop.f32.mrb[0].mxu0
      %5668 = vmatprep.mubr.bf16.mxu0 %v5119
      %5669 = vmatmul.mubr.bf16.gmra.mrb[0].mxu0 %v5118
      %v5670 = vpop.f32.mrb[0].mxu0
      %v5671 = vadd.f32 %v5510, %v5670
      %v5672 = vpop.f32.mrb[0].mxu0
      %v5673 = vpop.f32.mrb[0].mxu0
      %v5674 = vadd.f32 %v5513, %v5673
      %v5675 = vpop.f32.mrb[0].mxu0
      %5676 = vmatprep.mubr.bf16.mxu0 %v5125
      %5677 = vmatmul.mubr.bf16.gmra.mrb[0].mxu0 %v5124
      %v5678 = vpop.f32.mrb[0].mxu0
      %v5679 = vadd.f32 %v5518, %v5678
      %v5680 = vpop.f32.mrb[0].mxu0
      %v5681 = vpop.f32.mrb[0].mxu0
      %v5682 = vadd.f32 %v5521, %v5681
      %v5683 = vpop.f32.mrb[0].mxu0
      %5684 = vmatprep.mubr.bf16.mxu0 %v5131
      %5685 = vmatmul.mubr.bf16.gmra.mrb[0].mxu0 %v5130
      %v5686 = vpop.f32.mrb[0].mxu0
      %v5687 = vadd.f32 %v5526, %v5686
      %v5688 = vpop.f32.mrb[0].mxu0
      %v5689 = vpop.f32.mrb[0].mxu0
      %v5690 = vadd.f32 %v5529, %v5689
      %v5691 = vpop.f32.mrb[0].mxu0
      %5692 = vmatprep.mubr.bf16.mxu0 %v5137
      %5693 = vmatmul.mubr.bf16.gmra.mrb[0].mxu0 %v5136
      %v5694 = vpop.f32.mrb[0].mxu0
      %v5695 = vadd.f32 %v5534, %v5694
      %v5696 = vpop.f32.mrb[0].mxu0
      %v5697 = vpop.f32.mrb[0].mxu0
      %v5698 = vadd.f32 %v5537, %v5697
      %v5699 = vpop.f32.mrb[0].mxu0
      %5700 = vmatprep.mubr.bf16.mxu0 %v5143
      %5701 = vmatmul.mubr.bf16.gmra.mrb[0].mxu0 %v5142
      %v5702 = vpop.f32.mrb[0].mxu0
      %v5703 = vadd.f32 %v5542, %v5702
      %v5704 = vpop.f32.mrb[0].mxu0
      %v5705 = vpop.f32.mrb[0].mxu0
      %v5706 = vadd.f32 %v5545, %v5705
      %v5707 = vpop.f32.mrb[0].mxu0
      %5708 = vmatprep.mubr.bf16.mxu0 %v5149
      %5709 = vmatmul.mubr.bf16.gmra.mrb[0].mxu0 %v5148
      %v5710 = vpop.f32.mrb[0].mxu0
      %v5711 = vadd.f32 %v5550, %v5710
      %v5712 = vpop.f32.mrb[0].mxu0
      %v5713 = vpop.f32.mrb[0].mxu0
      %v5714 = vadd.f32 %v5553, %v5713
      %v5715 = vpop.f32.mrb[0].mxu0
      %5716 = vmatprep.mubr.bf16.mxu0 %v5155
      %5717 = vmatmul.mubr.bf16.gmra.mrb[0].mxu0 %v5154
      %v5718 = vpop.f32.mrb[0].mxu0
      %v5719 = vadd.f32 %v5558, %v5718
      %v5720 = vpop.f32.mrb[0].mxu0
      %v5721 = vpop.f32.mrb[0].mxu0
      %v5722 = vadd.f32 %v5561, %v5721
      %v5723 = vpop.f32.mrb[0].mxu0
      %5724 = vmatprep.mubr.bf16.mxu0 %v5161
      %5725 = vmatmul.mubr.bf16.gmra.mrb[0].mxu0 %v5160
      %v5726 = vpop.f32.mrb[0].mxu0
      %v5727 = vadd.f32 %v5566, %v5726
      %v5728 = vpop.f32.mrb[0].mxu0
      %v5729 = vpop.f32.mrb[0].mxu0
      %v5730 = vadd.f32 %v5569, %v5729
      %v5731 = vpop.f32.mrb[0].mxu0
      %5732 = vmatprep.mubr.bf16.mxu0 %v5167
      %5733 = vmatmul.mubr.bf16.gmra.mrb[0].mxu0 %v5166
      %v5734 = vpop.f32.mrb[0].mxu0
      %v5735 = vadd.f32 %v5574, %v5734
      %v5736 = vpop.f32.mrb[0].mxu0
      %v5737 = vpop.f32.mrb[0].mxu0
      %v5738 = vadd.f32 %v5577, %v5737
      %v5739 = vpop.f32.mrb[0].mxu0
      %5740 = vmatprep.mubr.bf16.mxu0 %v5173
      %5741 = vmatmul.mubr.bf16.gmra.mrb[0].mxu0 %v5172
      %v5742 = vpop.f32.mrb[0].mxu0
      %v5743 = vadd.f32 %v5582, %v5742
      %v5744 = vpop.f32.mrb[0].mxu0
      %v5745 = vpop.f32.mrb[0].mxu0
      %v5746 = vadd.f32 %v5585, %v5745
      %v5747 = vpop.f32.mrb[0].mxu0
      %5748 = vmatprep.mubr.bf16.mxu0 %v5179
      %5749 = vmatmul.mubr.bf16.gmra.mrb[0].mxu0 %v5178
      %v5750 = vpop.f32.mrb[0].mxu0
      %v5751 = vadd.f32 %v5590, %v5750
      %v5752 = vpop.f32.mrb[0].mxu0
      %v5753 = vpop.f32.mrb[0].mxu0
      %v5754 = vadd.f32 %v5593, %v5753
      %v5755 = vpop.f32.mrb[0].mxu0
      %5756 = vmatprep.mubr.bf16.mxu0 %v5185
      %5757 = vmatmul.mubr.bf16.gmra.mrb[0].mxu0 %v5184
      %v5758 = vpop.f32.mrb[0].mxu0
      %v5759 = vadd.f32 %v5598, %v5758
      %v5760 = vpop.f32.mrb[0].mxu0
      %v5761 = vpop.f32.mrb[0].mxu0
      %v5762 = vadd.f32 %v5601, %v5761
      %v5763 = vpop.f32.mrb[0].mxu0
      %5764 = vdwg.mxu0
      %5766 = vset.pattern.permute.xlu0 0
      %5767 = vperm.xlu0 %5766, %v4434
      %v5768 = vpop.permute.xlu0 %5767
      %5771 = vset.pattern.permute.xlu0 0
      %5772 = vperm.xlu0 %5771, %v4435
      %v5773 = vpop.permute.xlu0 %5772
      %5776 = vset.pattern.permute.xlu0 0
      %5777 = vperm.xlu0 %5776, %v4436
      %v5778 = vpop.permute.xlu0 %5777
      %5781 = vset.pattern.permute.xlu0 0
      %5782 = vperm.xlu0 %5781, %v4437
      %v5783 = vpop.permute.xlu0 %5782
      %5786 = vset.pattern.permute.xlu0 0
      %5787 = vperm.xlu0 %5786, %v4438
      %v5788 = vpop.permute.xlu0 %5787
      %5791 = vset.pattern.permute.xlu0 0
      %5792 = vperm.xlu0 %5791, %v4439
      %v5793 = vpop.permute.xlu0 %5792
      %5796 = vset.pattern.permute.xlu0 0
      %5797 = vperm.xlu0 %5796, %v4440
      %v5798 = vpop.permute.xlu0 %5797
      %5801 = vset.pattern.permute.xlu0 0
      %5802 = vperm.xlu0 %5801, %v4441
      %v5803 = vpop.permute.xlu0 %5802
      %5806 = vset.pattern.permute.xlu0 0
      %5807 = vperm.xlu0 %5806, %v4442
      %v5808 = vpop.permute.xlu0 %5807
      %5811 = vset.pattern.permute.xlu0 0
      %5812 = vperm.xlu0 %5811, %v4443
      %v5813 = vpop.permute.xlu0 %5812
      %5816 = vset.pattern.permute.xlu0 0
      %5817 = vperm.xlu0 %5816, %v4444
      %v5818 = vpop.permute.xlu0 %5817
      %5821 = vset.pattern.permute.xlu0 0
      %5822 = vperm.xlu0 %5821, %v4445
      %v5823 = vpop.permute.xlu0 %5822
      %5826 = vset.pattern.permute.xlu0 0
      %5827 = vperm.xlu0 %5826, %v4446
      %v5828 = vpop.permute.xlu0 %5827
      %5831 = vset.pattern.permute.xlu0 0
      %5832 = vperm.xlu0 %5831, %v4447
      %v5833 = vpop.permute.xlu0 %5832
      %5836 = vset.pattern.permute.xlu0 0
      %5837 = vperm.xlu0 %5836, %v4448
      %v5838 = vpop.permute.xlu0 %5837
      %5841 = vset.pattern.permute.xlu0 0
      %5842 = vperm.xlu0 %5841, %v4449
      %v5843 = vpop.permute.xlu0 %5842
      %5846 = vset.pattern.permute.xlu0 0
      %5847 = vperm.xlu0 %5846, %v4450
      %v5848 = vpop.permute.xlu0 %5847
      %5851 = vset.pattern.permute.xlu0 0
      %5852 = vperm.xlu0 %5851, %v4451
      %v5853 = vpop.permute.xlu0 %5852
      %5856 = vset.pattern.permute.xlu0 0
      %5857 = vperm.xlu0 %5856, %v4452
      %v5858 = vpop.permute.xlu0 %5857
      %5861 = vset.pattern.permute.xlu0 0
      %5862 = vperm.xlu0 %5861, %v4453
      %v5863 = vpop.permute.xlu0 %5862
      %5866 = vset.pattern.permute.xlu0 0
      %5867 = vperm.xlu0 %5866, %v4454
      %v5868 = vpop.permute.xlu0 %5867
      %5871 = vset.pattern.permute.xlu0 0
      %5872 = vperm.xlu0 %5871, %v4455
      %v5873 = vpop.permute.xlu0 %5872
      %5876 = vset.pattern.permute.xlu0 0
      %5877 = vperm.xlu0 %5876, %v4456
      %v5878 = vpop.permute.xlu0 %5877
      %5881 = vset.pattern.permute.xlu0 0
      %5882 = vperm.xlu0 %5881, %v4457
      %v5883 = vpop.permute.xlu0 %5882
      %5886 = vset.pattern.permute.xlu0 0
      %5887 = vperm.xlu0 %5886, %v4458
      %v5888 = vpop.permute.xlu0 %5887
      %5891 = vset.pattern.permute.xlu0 0
      %5892 = vperm.xlu0 %5891, %v4459
      %v5893 = vpop.permute.xlu0 %5892
      %5896 = vset.pattern.permute.xlu0 0
      %5897 = vperm.xlu0 %5896, %v4460
      %v5898 = vpop.permute.xlu0 %5897
      %5901 = vset.pattern.permute.xlu0 0
      %5902 = vperm.xlu0 %5901, %v4461
      %v5903 = vpop.permute.xlu0 %5902
      %5906 = vset.pattern.permute.xlu0 0
      %5907 = vperm.xlu0 %5906, %v4462
      %v5908 = vpop.permute.xlu0 %5907
      %5911 = vset.pattern.permute.xlu0 0
      %5912 = vperm.xlu0 %5911, %v4463
      %v5913 = vpop.permute.xlu0 %5912
      %5916 = vset.pattern.permute.xlu0 0
      %5917 = vperm.xlu0 %5916, %v4464
      %v5918 = vpop.permute.xlu0 %5917
      %5921 = vset.pattern.permute.xlu0 0
      %5922 = vperm.xlu0 %5921, %v4465
      %v5923 = vpop.permute.xlu0 %5922
      %v5925 = vmul.f32 %v5768, %v5639
      %v5926 = vmul.f32 %v5773, %v5642
      %v5927 = vmul.f32 %v5778, %v5647
      %v5928 = vmul.f32 %v5783, %v5650
      %v5929 = vmul.f32 %v5788, %v5655
      %v5930 = vmul.f32 %v5793, %v5658
      %v5931 = vmul.f32 %v5798, %v5663
      %v5932 = vmul.f32 %v5803, %v5666
      %v5933 = vmul.f32 %v5808, %v5671
      %v5934 = vmul.f32 %v5813, %v5674
      %v5935 = vmul.f32 %v5818, %v5679
      %v5936 = vmul.f32 %v5823, %v5682
      %v5937 = vmul.f32 %v5828, %v5687
      %v5938 = vmul.f32 %v5833, %v5690
      %v5939 = vmul.f32 %v5838, %v5695
      %v5940 = vmul.f32 %v5843, %v5698
      %v5941 = vmul.f32 %v5848, %v5703
      %v5942 = vmul.f32 %v5853, %v5706
      %v5943 = vmul.f32 %v5858, %v5711
      %v5944 = vmul.f32 %v5863, %v5714
      %v5945 = vmul.f32 %v5868, %v5719
      %v5946 = vmul.f32 %v5873, %v5722
      %v5947 = vmul.f32 %v5878, %v5727
      %v5948 = vmul.f32 %v5883, %v5730
      %v5949 = vmul.f32 %v5888, %v5735
      %v5950 = vmul.f32 %v5893, %v5738
      %v5951 = vmul.f32 %v5898, %v5743
      %v5952 = vmul.f32 %v5903, %v5746
      %v5953 = vmul.f32 %v5908, %v5751
      %v5954 = vmul.f32 %v5913, %v5754
      %v5955 = vmul.f32 %v5918, %v5759
      %v5956 = vmul.f32 %v5923, %v5762
      %v5957 = vld [vmem:[%s23] sm:$0xff]
      %v5958 = vld [vmem:[%s23 + $0x8] sm:$0xff]
      %v5959 = vld [vmem:[%s23 + $0x10] sm:$0xff]
      %v5960 = vld [vmem:[%s23 + $0x18] sm:$0xff]
      %v5961 = vld [vmem:[%s23 + $0x20] sm:$0xff]
      %v5962 = vld [vmem:[%s23 + $0x28] sm:$0xff]
      %v5963 = vld [vmem:[%s23 + $0x30] sm:$0xff]
      %v5964 = vld [vmem:[%s23 + $0x38] sm:$0xff]
      %v5965 = vld [vmem:[%s23 + $0x40] sm:$0xff]
      %v5966 = vld [vmem:[%s23 + $0x48] sm:$0xff]
      %v5967 = vld [vmem:[%s23 + $0x50] sm:$0xff]
      %v5968 = vld [vmem:[%s23 + $0x58] sm:$0xff]
      %v5969 = vld [vmem:[%s23 + $0x60] sm:$0xff]
      %v5970 = vld [vmem:[%s23 + $0x68] sm:$0xff]
      %v5971 = vld [vmem:[%s23 + $0x70] sm:$0xff]
      %v5972 = vld [vmem:[%s23 + $0x78] sm:$0xff]
      %v5973 = vld [vmem:[%s23 + $0x80] sm:$0xff]
      %v5974 = vld [vmem:[%s23 + $0x88] sm:$0xff]
      %v5975 = vld [vmem:[%s23 + $0x90] sm:$0xff]
      %v5976 = vld [vmem:[%s23 + $0x98] sm:$0xff]
      %v5977 = vld [vmem:[%s23 + $0xa0] sm:$0xff]
      %v5978 = vld [vmem:[%s23 + $0xa8] sm:$0xff]
      %v5979 = vld [vmem:[%s23 + $0xb0] sm:$0xff]
      %v5980 = vld [vmem:[%s23 + $0xb8] sm:$0xff]
      %v5981 = vld [vmem:[%s23 + $0xc0] sm:$0xff]
      %v5982 = vld [vmem:[%s23 + $0xc8] sm:$0xff]
      %v5983 = vld [vmem:[%s23 + $0xd0] sm:$0xff]
      %v5984 = vld [vmem:[%s23 + $0xd8] sm:$0xff]
      %v5985 = vld [vmem:[%s23 + $0xe0] sm:$0xff]
      %v5986 = vld [vmem:[%s23 + $0xe8] sm:$0xff]
      %v5987 = vld [vmem:[%s23 + $0xf0] sm:$0xff]
      %v5988 = vld [vmem:[%s23 + $0xf8] sm:$0xff]
      %5990 = vset.pattern.permute.xlu0 0
      %5991 = vperm.xlu0 %5990, %v5957
      %v5992 = vpop.permute.xlu0 %5991
      %5995 = vset.pattern.permute.xlu0 0
      %5996 = vperm.xlu0 %5995, %v5958
      %v5997 = vpop.permute.xlu0 %5996
      %6000 = vset.pattern.permute.xlu0 0
      %6001 = vperm.xlu0 %6000, %v5959
      %v6002 = vpop.permute.xlu0 %6001
      %6005 = vset.pattern.permute.xlu0 0
      %6006 = vperm.xlu0 %6005, %v5960
      %v6007 = vpop.permute.xlu0 %6006
      %6010 = vset.pattern.permute.xlu0 0
      %6011 = vperm.xlu0 %6010, %v5961
      %v6012 = vpop.permute.xlu0 %6011
      %6015 = vset.pattern.permute.xlu0 0
      %6016 = vperm.xlu0 %6015, %v5962
      %v6017 = vpop.permute.xlu0 %6016
      %6020 = vset.pattern.permute.xlu0 0
      %6021 = vperm.xlu0 %6020, %v5963
      %v6022 = vpop.permute.xlu0 %6021
      %6025 = vset.pattern.permute.xlu0 0
      %6026 = vperm.xlu0 %6025, %v5964
      %v6027 = vpop.permute.xlu0 %6026
      %6030 = vset.pattern.permute.xlu0 0
      %6031 = vperm.xlu0 %6030, %v5965
      %v6032 = vpop.permute.xlu0 %6031
      %6035 = vset.pattern.permute.xlu0 0
      %6036 = vperm.xlu0 %6035, %v5966
      %v6037 = vpop.permute.xlu0 %6036
      %6040 = vset.pattern.permute.xlu0 0
      %6041 = vperm.xlu0 %6040, %v5967
      %v6042 = vpop.permute.xlu0 %6041
      %6045 = vset.pattern.permute.xlu0 0
      %6046 = vperm.xlu0 %6045, %v5968
      %v6047 = vpop.permute.xlu0 %6046
      %6050 = vset.pattern.permute.xlu0 0
      %6051 = vperm.xlu0 %6050, %v5969
      %v6052 = vpop.permute.xlu0 %6051
      %6055 = vset.pattern.permute.xlu0 0
      %6056 = vperm.xlu0 %6055, %v5970
      %v6057 = vpop.permute.xlu0 %6056
      %6060 = vset.pattern.permute.xlu0 0
      %6061 = vperm.xlu0 %6060, %v5971
      %v6062 = vpop.permute.xlu0 %6061
      %6065 = vset.pattern.permute.xlu0 0
      %6066 = vperm.xlu0 %6065, %v5972
      %v6067 = vpop.permute.xlu0 %6066
      %6070 = vset.pattern.permute.xlu0 0
      %6071 = vperm.xlu0 %6070, %v5973
      %v6072 = vpop.permute.xlu0 %6071
      %6075 = vset.pattern.permute.xlu0 0
      %6076 = vperm.xlu0 %6075, %v5974
      %v6077 = vpop.permute.xlu0 %6076
      %6080 = vset.pattern.permute.xlu0 0
      %6081 = vperm.xlu0 %6080, %v5975
      %v6082 = vpop.permute.xlu0 %6081
      %6085 = vset.pattern.permute.xlu0 0
      %6086 = vperm.xlu0 %6085, %v5976
      %v6087 = vpop.permute.xlu0 %6086
      %6090 = vset.pattern.permute.xlu0 0
      %6091 = vperm.xlu0 %6090, %v5977
      %v6092 = vpop.permute.xlu0 %6091
      %6095 = vset.pattern.permute.xlu0 0
      %6096 = vperm.xlu0 %6095, %v5978
      %v6097 = vpop.permute.xlu0 %6096
      %6100 = vset.pattern.permute.xlu0 0
      %6101 = vperm.xlu0 %6100, %v5979
      %v6102 = vpop.permute.xlu0 %6101
      %6105 = vset.pattern.permute.xlu0 0
      %6106 = vperm.xlu0 %6105, %v5980
      %v6107 = vpop.permute.xlu0 %6106
      %6110 = vset.pattern.permute.xlu0 0
      %6111 = vperm.xlu0 %6110, %v5981
      %v6112 = vpop.permute.xlu0 %6111
      %6115 = vset.pattern.permute.xlu0 0
      %6116 = vperm.xlu0 %6115, %v5982
      %v6117 = vpop.permute.xlu0 %6116
      %6120 = vset.pattern.permute.xlu0 0
      %6121 = vperm.xlu0 %6120, %v5983
      %v6122 = vpop.permute.xlu0 %6121
      %6125 = vset.pattern.permute.xlu0 0
      %6126 = vperm.xlu0 %6125, %v5984
      %v6127 = vpop.permute.xlu0 %6126
      %6130 = vset.pattern.permute.xlu0 0
      %6131 = vperm.xlu0 %6130, %v5985
      %v6132 = vpop.permute.xlu0 %6131
      %6135 = vset.pattern.permute.xlu0 0
      %6136 = vperm.xlu0 %6135, %v5986
      %v6137 = vpop.permute.xlu0 %6136
      %6140 = vset.pattern.permute.xlu0 0
      %6141 = vperm.xlu0 %6140, %v5987
      %v6142 = vpop.permute.xlu0 %6141
      %6145 = vset.pattern.permute.xlu0 0
      %6146 = vperm.xlu0 %6145, %v5988
      %v6147 = vpop.permute.xlu0 %6146
      %v6149 = vadd.f32 %v5925, %v5992
      %v6150 = vadd.f32 %v5926, %v5997
      %v6151 = vadd.f32 %v5927, %v6002
      %v6152 = vadd.f32 %v5928, %v6007
      %v6153 = vadd.f32 %v5929, %v6012
      %v6154 = vadd.f32 %v5930, %v6017
      %v6155 = vadd.f32 %v5931, %v6022
      %v6156 = vadd.f32 %v5932, %v6027
      %v6157 = vadd.f32 %v5933, %v6032
      %v6158 = vadd.f32 %v5934, %v6037
      %v6159 = vadd.f32 %v5935, %v6042
      %v6160 = vadd.f32 %v5936, %v6047
      %v6161 = vadd.f32 %v5937, %v6052
      %v6162 = vadd.f32 %v5938, %v6057
      %v6163 = vadd.f32 %v5939, %v6062
      %v6164 = vadd.f32 %v5940, %v6067
      %v6165 = vadd.f32 %v5941, %v6072
      %v6166 = vadd.f32 %v5942, %v6077
      %v6167 = vadd.f32 %v5943, %v6082
      %v6168 = vadd.f32 %v5944, %v6087
      %v6169 = vadd.f32 %v5945, %v6092
      %v6170 = vadd.f32 %v5946, %v6097
      %v6171 = vadd.f32 %v5947, %v6102
      %v6172 = vadd.f32 %v5948, %v6107
      %v6173 = vadd.f32 %v5949, %v6112
      %v6174 = vadd.f32 %v5950, %v6117
      %v6175 = vadd.f32 %v5951, %v6122
      %v6176 = vadd.f32 %v5952, %v6127
      %v6177 = vadd.f32 %v5953, %v6132
      %v6178 = vadd.f32 %v5954, %v6137
      %v6179 = vadd.f32 %v5955, %v6142
      %v6180 = vadd.f32 %v5956, %v6147
      %6181 = vst [vmem:[#allocation2] sm:$0xff] %v6149
      %6182 = vst [vmem:[#allocation2 + $0x8] sm:$0xff] %v6150
      %6183 = vst [vmem:[#allocation2 + $0x10] sm:$0xff] %v6151
      %6184 = vst [vmem:[#allocation2 + $0x18] sm:$0xff] %v6152
      %6185 = vst [vmem:[#allocation2 + $0x20] sm:$0xff] %v6153
      %6186 = vst [vmem:[#allocation2 + $0x28] sm:$0xff] %v6154
      %6187 = vst [vmem:[#allocation2 + $0x30] sm:$0xff] %v6155
      %6188 = vst [vmem:[#allocation2 + $0x38] sm:$0xff] %v6156
      %6189 = vst [vmem:[#allocation2 + $0x40] sm:$0xff] %v6157
      %6190 = vst [vmem:[#allocation2 + $0x48] sm:$0xff] %v6158
      %6191 = vst [vmem:[#allocation2 + $0x50] sm:$0xff] %v6159
      %6192 = vst [vmem:[#allocation2 + $0x58] sm:$0xff] %v6160
      %6193 = vst [vmem:[#allocation2 + $0x60] sm:$0xff] %v6161
      %6194 = vst [vmem:[#allocation2 + $0x68] sm:$0xff] %v6162
      %6195 = vst [vmem:[#allocation2 + $0x70] sm:$0xff] %v6163
      %6196 = vst [vmem:[#allocation2 + $0x78] sm:$0xff] %v6164
      %6197 = vst [vmem:[#allocation2 + $0x80] sm:$0xff] %v6165
      %6198 = vst [vmem:[#allocation2 + $0x88] sm:$0xff] %v6166
      %6199 = vst [vmem:[#allocation2 + $0x90] sm:$0xff] %v6167
      %6200 = vst [vmem:[#allocation2 + $0x98] sm:$0xff] %v6168
      %6201 = vst [vmem:[#allocation2 + $0xa0] sm:$0xff] %v6169
      %6202 = vst [vmem:[#allocation2 + $0xa8] sm:$0xff] %v6170
      %6203 = vst [vmem:[#allocation2 + $0xb0] sm:$0xff] %v6171
      %6204 = vst [vmem:[#allocation2 + $0xb8] sm:$0xff] %v6172
      %6205 = vst [vmem:[#allocation2 + $0xc0] sm:$0xff] %v6173
      %6206 = vst [vmem:[#allocation2 + $0xc8] sm:$0xff] %v6174
      %6207 = vst [vmem:[#allocation2 + $0xd0] sm:$0xff] %v6175
      %6208 = vst [vmem:[#allocation2 + $0xd8] sm:$0xff] %v6176
      %6209 = vst [vmem:[#allocation2 + $0xe0] sm:$0xff] %v6177
      %6210 = vst [vmem:[#allocation2 + $0xe8] sm:$0xff] %v6178
      %6211 = vst [vmem:[#allocation2 + $0xf0] sm:$0xff] %v6179
      %6212 = vst [vmem:[#allocation2 + $0xf8] sm:$0xff] %v6180
      %v6213 = vld [vmem:[#allocation2 + $0x40] sm:$0xff]
      %v6214 = vld [vmem:[#allocation2 + $0x48] sm:$0xff]
      %v6215 = vld [vmem:[#allocation2 + $0x50] sm:$0xff]
      %v6216 = vld [vmem:[#allocation2 + $0x58] sm:$0xff]
      %v6217 = vld [vmem:[#allocation2 + $0x60] sm:$0xff]
      %v6218 = vld [vmem:[#allocation2 + $0x68] sm:$0xff]
      %v6219 = vld [vmem:[#allocation2 + $0x70] sm:$0xff]
      %v6220 = vld [vmem:[#allocation2 + $0x78] sm:$0xff]
      %v6221 = vld [vmem:[#allocation2 + $0x80] sm:$0xff]
      %v6222 = vld [vmem:[#allocation2 + $0x88] sm:$0xff]
      %v6223 = vld [vmem:[#allocation2 + $0x90] sm:$0xff]
      %v6224 = vld [vmem:[#allocation2 + $0x98] sm:$0xff]
      %v6225 = vld [vmem:[#allocation2 + $0xa0] sm:$0xff]
      %v6226 = vld [vmem:[#allocation2 + $0xa8] sm:$0xff]
      %v6227 = vld [vmem:[#allocation2 + $0xb0] sm:$0xff]
      %v6228 = vld [vmem:[#allocation2 + $0xb8] sm:$0xff]
      %v6229 = vadd.f32 %v6213, %v3176
      %v6230 = vadd.f32 %v6214, %v3177
      %v6231 = vadd.f32 %v6215, %v3178
      %v6232 = vadd.f32 %v6216, %v3179
      %v6233 = vadd.f32 %v6217, %v3180
      %v6234 = vadd.f32 %v6218, %v3181
      %v6235 = vadd.f32 %v6219, %v3182
      %v6236 = vadd.f32 %v6220, %v3183
      %v6237 = vadd.f32 %v6221, %v3184
      %v6238 = vadd.f32 %v6222, %v3185
      %v6239 = vadd.f32 %v6223, %v3186
      %v6240 = vadd.f32 %v6224, %v3187
      %v6241 = vadd.f32 %v6225, %v3188
      %v6242 = vadd.f32 %v6226, %v3189
      %v6243 = vadd.f32 %v6227, %v3190
      %v6244 = vadd.f32 %v6228, %v3191
      %6245 = vst [vmem:[#allocation2 + $0x40] sm:$0xff] %v6229
      %6246 = vst [vmem:[#allocation2 + $0x48] sm:$0xff] %v6230
      %6247 = vst [vmem:[#allocation2 + $0x50] sm:$0xff] %v6231
      %6248 = vst [vmem:[#allocation2 + $0x58] sm:$0xff] %v6232
      %6249 = vst [vmem:[#allocation2 + $0x60] sm:$0xff] %v6233
      %6250 = vst [vmem:[#allocation2 + $0x68] sm:$0xff] %v6234
      %6251 = vst [vmem:[#allocation2 + $0x70] sm:$0xff] %v6235
      %6252 = vst [vmem:[#allocation2 + $0x78] sm:$0xff] %v6236
      %6253 = vst [vmem:[#allocation2 + $0x80] sm:$0xff] %v6237
      %6254 = vst [vmem:[#allocation2 + $0x88] sm:$0xff] %v6238
      %6255 = vst [vmem:[#allocation2 + $0x90] sm:$0xff] %v6239
      %6256 = vst [vmem:[#allocation2 + $0x98] sm:$0xff] %v6240
      %6257 = vst [vmem:[#allocation2 + $0xa0] sm:$0xff] %v6241
      %6258 = vst [vmem:[#allocation2 + $0xa8] sm:$0xff] %v6242
      %6259 = vst [vmem:[#allocation2 + $0xb0] sm:$0xff] %v6243
      %6260 = vst [vmem:[#allocation2 + $0xb8] sm:$0xff] %v6244
      %v6261 = vld [vmem:[#allocation2] sm:$0xff]
      %v6262 = vld [vmem:[#allocation2 + $0x8] sm:$0xff]
      %v6263 = vld [vmem:[#allocation2 + $0x10] sm:$0xff]
      %v6264 = vld [vmem:[#allocation2 + $0x18] sm:$0xff]
      %v6265 = vld [vmem:[#allocation2 + $0x20] sm:$0xff]
      %v6266 = vld [vmem:[#allocation2 + $0x28] sm:$0xff]
      %v6267 = vld [vmem:[#allocation2 + $0x30] sm:$0xff]
      %v6268 = vld [vmem:[#allocation2 + $0x38] sm:$0xff]
      %v6269 = vld [vmem:[#allocation2 + $0x40] sm:$0xff]
      %v6270 = vld [vmem:[#allocation2 + $0x48] sm:$0xff]
      %v6271 = vld [vmem:[#allocation2 + $0x50] sm:$0xff]
      %v6272 = vld [vmem:[#allocation2 + $0x58] sm:$0xff]
      %v6273 = vld [vmem:[#allocation2 + $0x60] sm:$0xff]
      %v6274 = vld [vmem:[#allocation2 + $0x68] sm:$0xff]
      %v6275 = vld [vmem:[#allocation2 + $0x70] sm:$0xff]
      %v6276 = vld [vmem:[#allocation2 + $0x78] sm:$0xff]
      %v6277 = vld [vmem:[#allocation2 + $0x80] sm:$0xff]
      %v6278 = vld [vmem:[#allocation2 + $0x88] sm:$0xff]
      %v6279 = vld [vmem:[#allocation2 + $0x90] sm:$0xff]
      %v6280 = vld [vmem:[#allocation2 + $0x98] sm:$0xff]
      %v6281 = vld [vmem:[#allocation2 + $0xa0] sm:$0xff]
      %v6282 = vld [vmem:[#allocation2 + $0xa8] sm:$0xff]
      %v6283 = vld [vmem:[#allocation2 + $0xb0] sm:$0xff]
      %v6284 = vld [vmem:[#allocation2 + $0xb8] sm:$0xff]
      %v6285 = vld [vmem:[#allocation2 + $0xc0] sm:$0xff]
      %v6286 = vld [vmem:[#allocation2 + $0xc8] sm:$0xff]
      %v6287 = vld [vmem:[#allocation2 + $0xd0] sm:$0xff]
      %v6288 = vld [vmem:[#allocation2 + $0xd8] sm:$0xff]
      %v6289 = vld [vmem:[#allocation2 + $0xe0] sm:$0xff]
      %v6290 = vld [vmem:[#allocation2 + $0xe8] sm:$0xff]
      %v6291 = vld [vmem:[#allocation2 + $0xf0] sm:$0xff]
      %v6292 = vld [vmem:[#allocation2 + $0xf8] sm:$0xff]
      %v6293 = vmax.f32 %v6261, 0.0
      %v6294 = vmax.f32 %v6262, 0.0
      %v6295 = vmax.f32 %v6263, 0.0
      %v6296 = vmax.f32 %v6264, 0.0
      %v6297 = vmax.f32 %v6265, 0.0
      %v6298 = vmax.f32 %v6266, 0.0
      %v6299 = vmax.f32 %v6267, 0.0
      %v6300 = vmax.f32 %v6268, 0.0
      %v6301 = vmax.f32 %v6269, 0.0
      %v6302 = vmax.f32 %v6270, 0.0
      %v6303 = vmax.f32 %v6271, 0.0
      %v6304 = vmax.f32 %v6272, 0.0
      %v6305 = vmax.f32 %v6273, 0.0
      %v6306 = vmax.f32 %v6274, 0.0
      %v6307 = vmax.f32 %v6275, 0.0
      %v6308 = vmax.f32 %v6276, 0.0
      %v6309 = vmax.f32 %v6277, 0.0
      %v6310 = vmax.f32 %v6278, 0.0
      %v6311 = vmax.f32 %v6279, 0.0
      %v6312 = vmax.f32 %v6280, 0.0
      %v6313 = vmax.f32 %v6281, 0.0
      %v6314 = vmax.f32 %v6282, 0.0
      %v6315 = vmax.f32 %v6283, 0.0
      %v6316 = vmax.f32 %v6284, 0.0
      %v6317 = vmax.f32 %v6285, 0.0
      %v6318 = vmax.f32 %v6286, 0.0
      %v6319 = vmax.f32 %v6287, 0.0
      %v6320 = vmax.f32 %v6288, 0.0
      %v6321 = vmax.f32 %v6289, 0.0
      %v6322 = vmax.f32 %v6290, 0.0
      %v6323 = vmax.f32 %v6291, 0.0
      %v6324 = vmax.f32 %v6292, 0.0
      %v6325 = vld [vmem:[%s24] sm:$0xff]
      %v6326 = vld [vmem:[%s24 + $0x8] sm:$0xff]
      %v6327 = vpack.c.bf16 %v6294, %v6293
      %v6328 = vpack.c.bf16 %v6296, %v6295
      %v6329 = vpack.c.bf16 %v6298, %v6297
      %v6330 = vpack.c.bf16 %v6300, %v6299
      %v6331 = vpack.c.bf16 %v6302, %v6301
      %v6332 = vpack.c.bf16 %v6304, %v6303
      %v6333 = vpack.c.bf16 %v6306, %v6305
      %v6334 = vpack.c.bf16 %v6308, %v6307
      %v6335 = vpack.c.bf16 %v6310, %v6309
      %v6336 = vpack.c.bf16 %v6312, %v6311
      %v6337 = vpack.c.bf16 %v6314, %v6313
      %v6338 = vpack.c.bf16 %v6316, %v6315
      %v6339 = vpack.c.bf16 %v6318, %v6317
      %v6340 = vpack.c.bf16 %v6320, %v6319
      %v6341 = vpack.c.bf16 %v6322, %v6321
      %v6342 = vpack.c.bf16 %v6324, %v6323
      %v6345 = vunpack.c.l.b16 %v6325
      %v6346 = vunpack.c.h.b16 %v6325
      %v6347 = vunpack.c.l.b16 %v6326
      %v6348 = vunpack.c.h.b16 %v6326
      %v6349 = vpack.c.b16 %v6347, %v6345
      %v6350 = vpack.c.b16 %v6348, %v6346
      %6353 = vmatprep.subr.bf16.mxu0 0
      %6354 = vmatpush1.bf16.msra.mxu0 %v6327
      %6355 = vmatprep.subr.bf16.mxu0 0
      %6356 = vmatpush1.bf16.msra.mxu0 %v6328
      %6357 = vmatprep.subr.bf16.mxu0 0
      %6358 = vmatpush1.bf16.msra.mxu0 %v6329
      %6359 = vmatprep.subr.bf16.mxu0 0
      %6360 = vmatpush1.bf16.msra.mxu0 %v6330
      %6361 = vmatprep.subr.bf16.mxu0 0
      %6362 = vmatpush1.bf16.msra.mxu0 %v6331
      %6363 = vmatprep.subr.bf16.mxu0 0
      %6364 = vmatpush1.bf16.msra.mxu0 %v6332
      %6365 = vmatprep.subr.bf16.mxu0 0
      %6366 = vmatpush1.bf16.msra.mxu0 %v6333
      %6367 = vmatprep.subr.bf16.mxu0 0
      %6368 = vmatpush1.bf16.msra.mxu0 %v6334
      %6369 = vmatprep.subr.bf16.mxu0 0
      %6370 = vmatpush1.bf16.msra.mxu0 %v6335
      %6371 = vmatprep.subr.bf16.mxu0 0
      %6372 = vmatpush1.bf16.msra.mxu0 %v6336
      %6373 = vmatprep.subr.bf16.mxu0 0
      %6374 = vmatpush1.bf16.msra.mxu0 %v6337
      %6375 = vmatprep.subr.bf16.mxu0 0
      %6376 = vmatpush1.bf16.msra.mxu0 %v6338
      %6377 = vmatprep.subr.bf16.mxu0 0
      %6378 = vmatpush1.bf16.msra.mxu0 %v6339
      %6379 = vmatprep.subr.bf16.mxu0 0
      %6380 = vmatpush1.bf16.msra.mxu0 %v6340
      %6381 = vmatprep.subr.bf16.mxu0 0
      %6382 = vmatpush1.bf16.msra.mxu0 %v6341
      %6383 = vmatprep.subr.bf16.mxu0 0
      %6384 = vmatpush1.bf16.msra.mxu0 %v6342
      %6385 = vmatprep.mubr.bf16.mxu0 %v6350
      %6386 = vmatmul.mubr.bf16.gmra.mrb[0].mxu0 %v6349
      %v6387 = vpop.f32.mrb[0].mxu0
      %v6388 = vadd.f32 0.0, %v6387
      %v6389 = vpop.f32.mrb[0].mxu0
      %v6390 = vpop.f32.mrb[0].mxu0
      %v6391 = vadd.f32 0.0, %v6390
      %v6392 = vpop.f32.mrb[0].mxu0
      %6393 = vdwg.mxu0
      %6394 = vadd.xlane.f32.xlu0 %v6388
      %v6395 = vpop.xlane.xlu0 %6394
      %6396 = vadd.xlane.f32.xlu0 %v6391
      %v6397 = vpop.xlane.xlu0 %6396
      %v6398 = vrcp.pop 128.0
      %v6399 = vmul.f32 %v6395, %v6398
      %v6400 = vmul.f32 %v6397, %v6398
      %vm6401 = vcmask 7168
      %6402 = vst.msk [vmem:[%s795] sm:$0xff] %vm6401, %v6399
      %6403 = vst.msk [vmem:[%s795 + $0x8] sm:$0xff] %vm6401, %v6400
      %p6404 = scmp.lt.s32.totalorder %s36, 1
      %s6405 = scalar_select %p6404, %s36, 1
      %s6406 = smul.addr %s6405, 2
      %s6407 = smul.addr %s6406, 8
      %s6408 = scalar_lea.vmem %s25, %s6407
      // Predicated region
      $region121: #{freqnet_forward.1} parent=119 // pred_check
        %p6409 = pneg %p594
      $region122: #{freqnet_forward.1} parent=119 // pred_check_branch
        %6411 = sbr.rel (%p6409) target = $region124
      $region123: #{freqnet_forward.1} parent=119 // pred_region
        _
      $region124: #{freqnet_forward.1} parent=119 // pred_fallthru
        _
    $region120: #{freqnet_forward.1} parent=5 // pred_fallthru
      _
    %p6412 = scmp.le.s32.totalorder 2, %s31
    // Predicated region
    $region125: #{freqnet_forward.1} parent=5 // pred_check
      %p6413 = pneg %p6412
    $region126: #{freqnet_forward.1} parent=5 // pred_check_branch
      %6415 = sbr.rel (%p6413) target = $region128
    $region127: #{freqnet_forward.1} parent=5 // pred_region
      %s6416 = ssub.s32 %s31, 2
      // Predicated region
      $region129: #{freqnet_forward.1} parent=127 // pred_check
        %p6417 = pneg %p600
      $region130: #{freqnet_forward.1} parent=127 // pred_check_branch
        %6419 = sbr.rel (%p6417) target = $region132
      $region131: #{freqnet_forward.1} parent=127 // pred_region
        %p6420 = scmp.lt.s32.totalorder %s37, 1
        %s6421 = scalar_select %p6420, %s37, 1
        %s6422 = smul.addr %s6421, 2
        %s6423 = smul.addr %s6422, 8
        %s6424 = scalar_lea.vmem %s25, %s6423
      $region132: #{freqnet_forward.1} parent=127 // pred_fallthru
        _
    $region128: #{freqnet_forward.1} parent=5 // pred_fallthru
      _
  $region6: #{freqnet_forward.1} parent=0 // loop_footer
    %s35 = sadd.s32 1, %s31
  $region7: #{freqnet_forward.1} parent=0 // loop_footer_branch
    %30 = sbr.rel target = $region3
  $region8: #{freqnet_forward.1} parent=0 // loop_exit
    _

</llo_original>
